<compile_context>
chip_gen: v7x
topology: tpu7x:2x2x1
jax: 0.10.0
libtpu: 0.0.40
codegen_flags: <defaults>
</compile_context>

<pallas_src>
import jax
import jax.numpy as jnp
from jax import lax
from jax.experimental import pallas as pl
from jax.experimental.pallas import tpu as pltpu

# ---------------- config (small synthetic shapes) ----------------
H_SIZE = 8                      # h_size
H3 = 3 * H_SIZE                 # GRU / Tree hidden (mem_dim) = 24
H4 = 4 * H_SIZE                 # GCN width = 32
FEAT = 16                       # feature_representation_size
COVER = 12                      # code_cover_len
LAYER_NUM = 2                   # number of GCNConv layers
N_NODES = 8                     # graph nodes / batch of methods
T_STEPS = 6                     # GRU sequence length
L_TREE = 5                      # chain length used for each "tree"

VMEM_SPEC = pl.BlockSpec(memory_space=pltpu.MemorySpace.VMEM)


def _dot(a, b):
    return jnp.dot(a, b, preferred_element_type=jnp.float32)


# ---------------- the single fused Pallas kernel ----------------
def fix_locator_kernel(
    x1_ref,      # (T, N, F)        GRU input, time-major
    xt_ref,      # (L, 2N, 2F)      both trees, block-diag feature layout
    fv4_ref,     # (N, COVER)
    ahat_ref,    # (N, N)           normalized adjacency
    gwi_ref,     # (F, 3*H3)        GRU packed [r|z|n] input weights
    gwh_ref,     # (H3, 3*H3)       GRU packed [r|z|n] hidden weights
    gbi_ref,     # (1, 3*H3)
    gbh_ref,     # (1, 3*H3)
    twx_ref,     # (2F, 4*H3)       stacked [tree1; tree2] packed [i|o|u|f] x-weights
    twh_ref,     # (2*H3, 4*H3)     stacked packed h-weights
    tb_ref,      # (2, 4*H3)        combined (ioux+iouh, fx+fh) biases, row per tree
    hw_ref,      # (3*H3+COVER, 4h) block-diag(resize_1..4)
    hb_ref,      # (1, 4h)
    gcnw_ref,    # (LAYER_NUM, 4h, 4h)
    gcnb_ref,    # (LAYER_NUM, 1, 4h)
    w7_ref,      # (4h, 2)
    b7_ref,      # (1, 2)
    out_ref,     # (N, 2)           softmax probs (transposed outside)
):
    t_steps = x1_ref.shape[0]
    n = x1_ref.shape[1]
    l_steps = xt_ref.shape[0]
    n2 = xt_ref.shape[1]
    h3 = gwh_ref.shape[0]

    # ---------------- GRU: packed gates, 2 matmuls / step, hoisted weights ----
    gwi = gwi_ref[...]
    gwh = gwh_ref[...]
    gbi = gbi_ref[...]
    gbh = gbh_ref[...]
    h = jnp.zeros((n, h3), jnp.float32)
    for t in range(t_steps):                            # static unroll (T small)
        gi = _dot(x1_ref[t], gwi) + gbi                 # (N, 3*H3) input path
        gh = _dot(h, gwh) + gbh                         # (N, 3*H3) hidden path
        r = jax.nn.sigmoid(gi[:, 0:h3] + gh[:, 0:h3])
        z = jax.nn.sigmoid(gi[:, h3:2 * h3] + gh[:, h3:2 * h3])
        nn_ = jnp.tanh(gi[:, 2 * h3:3 * h3] + r * gh[:, 2 * h3:3 * h3])
        h = (1.0 - z) * nn_ + z * h
    fv1 = h                                             # last-timestep hidden

    # -------- both Tree-LSTM chains batched (block-diag), 2 matmuls / step ----
    twx = twx_ref[...]
    twh = twh_ref[...]
    m4 = twx_ref.shape[1]                               # 4*H3
    b_tree = jnp.concatenate(
        [jnp.broadcast_to(tb_ref[0:1, :], (n, m4)),
         jnp.broadcast_to(tb_ref[1:2, :], (n, m4))], axis=0)        # (2N, 4*H3)
    rows = lax.broadcasted_iota(jnp.int32, (n2, 1), 0)
    m_top = (rows < n).astype(jnp.float32)              # rows 0:N  -> tree_1
    m_bot = 1.0 - m_top                                 # rows N:2N -> tree_2
    c = jnp.zeros((n2, h3), jnp.float32)
    ht = jnp.zeros((n2, h3), jnp.float32)
    for l in range(l_steps):                            # static unroll (L small)
        h_blk = jnp.concatenate([ht * m_top, ht * m_bot], axis=1)   # (2N, 2*H3)
        g = _dot(xt_ref[l], twx) + _dot(h_blk, twh) + b_tree        # (2N, 4*H3)
        i = jax.nn.sigmoid(g[:, 0:h3])
        o = jax.nn.sigmoid(g[:, h3:2 * h3])
        u = jnp.tanh(g[:, 2 * h3:3 * h3])
        f = jax.nn.sigmoid(g[:, 3 * h3:4 * h3])
        c = i * u + f * c
        ht = o * jnp.tanh(c)
    fv2 = ht[0:n, :]                                    # tree_1 root h
    fv3 = ht[n:n2, :]                                   # tree_2 root h

    # -------- head: fused resize_1..4 -> GCN layers -> resize_7 -> softmax ----
    m_in = jnp.concatenate([fv1, fv2, fv3, fv4_ref[...]], axis=1)   # (N, 3*H3+COVER)
    m = _dot(m_in, hw_ref[...]) + hb_ref[...]                       # (N, 4h)
    a_hat = ahat_ref[...]
    for i in range(LAYER_NUM):                                      # static unroll
        m = _dot(a_hat, _dot(m, gcnw_ref[i])) + gcnb_ref[i]
        if i < LAYER_NUM - 1:
            m = jnp.maximum(m, 0.0)                                 # ReLU(inplace)
    logits = _dot(m, w7_ref[...]) + b7_ref[...]                     # (N, 2)
    logits = logits - jnp.max(logits, axis=1, keepdims=True)
    e = jnp.exp(logits)
    out_ref[...] = e / jnp.sum(e, axis=1, keepdims=True)            # Softmax(dim=1)


# ---------------- glue (all inside one jit) ----------------
def normalized_adjacency(edge_index, n):
    """A_hat = D^-1/2 (A + I) D^-1/2 built with a one-hot matmul (no scatter)."""
    src, dst = edge_index[0], edge_index[1]
    oh_dst = jax.nn.one_hot(dst, n, dtype=jnp.float32)   # (E, N)
    oh_src = jax.nn.one_hot(src, n, dtype=jnp.float32)   # (E, N)
    a = jnp.dot(oh_dst.T, oh_src) + jnp.eye(n, dtype=jnp.float32)
    dinv = lax.rsqrt(jnp.sum(a, axis=1))
    return dinv[:, None] * a * dinv[None, :]


def fix_locator_forward(params, feature_1, feature_2_x, feature_3_x, feature_4,
                        edge_index):
    n = feature_1.shape[0]

    # Tiny layout prep; fuses into the single jitted dispatch around the kernel.
    x1 = jnp.transpose(feature_1.astype(jnp.float32), (1, 0, 2))        # (T, N, F)
    x2 = jnp.transpose(feature_2_x.astype(jnp.float32), (1, 0, 2))      # (L, N, F)
    x3 = jnp.transpose(feature_3_x.astype(jnp.float32), (1, 0, 2))      # (L, N, F)
    z = jnp.zeros_like(x2)
    # block-diag feature layout so both trees run as one batched recurrence
    x_tree = jnp.concatenate([jnp.concatenate([x2, z], axis=2),
                              jnp.concatenate([z, x3], axis=2)], axis=1)  # (L, 2N, 2F)

    a_hat = normalized_adjacency(edge_index, n)

    p = params
    args = (x1, x_tree, feature_4.astype(jnp.float32), a_hat,
            p["gru_wi"], p["gru_wh"], p["gru_bi"], p["gru_bh"],
            p["tree_wx"], p["tree_wh"], p["tree_b"],
            p["head_w"], p["head_b"], p["gcn_w"], p["gcn_b"], p["w7"], p["b7"])

    probs = pl.pallas_call(
        fix_locator_kernel,
        out_shape=jax.ShapeDtypeStruct((n, 2), jnp.float32),
        in_specs=[VMEM_SPEC] * len(args),
        out_specs=VMEM_SPEC,
    )(*args)
    return probs.T                                      # (2, N) = m_f.transpose(0, 1)


# ---------------- deterministic parameter init (packed layout) ----------------
def _block_diag(*mats):
    rows = sum(m.shape[0] for m in mats)
    cols = sum(m.shape[1] for m in mats)
    out = jnp.zeros((rows, cols), jnp.float32)
    r = c = 0
    for m in mats:
        out = out.at[r:r + m.shape[0], c:c + m.shape[1]].set(m)
        r += m.shape[0]
        c += m.shape[1]
    return out


def init_params(key):
    ks = iter(jax.random.split(key, 64))

    def w(shape, scale=0.1):
        return (scale * jax.random.normal(next(ks), shape)).astype(jnp.float32)

    # GRU (torch gate order r, z, n) packed into one matmul per operand.
    gru_wi = jnp.concatenate([w((FEAT, H3)) for _ in range(3)], axis=1)   # (F, 3*H3)
    gru_wh = jnp.concatenate([w((H3, H3)) for _ in range(3)], axis=1)     # (H3, 3*H3)
    gru_bi = jnp.concatenate([w((1, H3)) for _ in range(3)], axis=1)      # (1, 3*H3)
    gru_bh = jnp.concatenate([w((1, H3)) for _ in range(3)], axis=1)      # (1, 3*H3)

    # TreeSummarize x2 (gate order i, o, u, f); ioux+iouh and fx+fh biases folded.
    def tree_packed():
        wx = jnp.concatenate([w((FEAT, H3)) for _ in range(4)], axis=1)   # (F, 4*H3)
        wh = jnp.concatenate([w((H3, H3)) for _ in range(4)], axis=1)     # (H3, 4*H3)
        b = jnp.concatenate([w((1, H3)) for _ in range(4)], axis=1)       # (1, 4*H3)
        return wx, wh, b

    wx1, wh1, b1 = tree_packed()
    wx2, wh2, b2 = tree_packed()
    tree_wx = jnp.concatenate([wx1, wx2], axis=0)        # (2F, 4*H3)  block-diag x path
    tree_wh = jnp.concatenate([wh1, wh2], axis=0)        # (2*H3, 4*H3) block-diag h path
    tree_b = jnp.concatenate([b1, b2], axis=0)           # (2, 4*H3)

    # Head: resize_1..4 fused as block-diag, GCN stack, resize_7.
    head_w = _block_diag(w((H3, H_SIZE)), w((H3, H_SIZE)),
                         w((H3, H_SIZE)), w((COVER, H_SIZE)))             # (84, 32)
    head_b = jnp.concatenate([w((1, H_SIZE)) for _ in range(4)], axis=1)  # (1, 32)
    gcn_w = w((LAYER_NUM, H4, H4))
    gcn_b = w((LAYER_NUM, 1, H4))
    w7 = w((H4, 2))
    b7 = w((1, 2))

    return dict(gru_wi=gru_wi, gru_wh=gru_wh, gru_bi=gru_bi, gru_bh=gru_bh,
                tree_wx=tree_wx, tree_wh=tree_wh, tree_b=tree_b,
                head_w=head_w, head_b=head_b, gcn_w=gcn_w, gcn_b=gcn_b,
                w7=w7, b7=b7)


# ---------------- main ----------------
if __name__ == "__main__":
    root = jax.random.PRNGKey(0)
    k_par, k1, k2, k3, k4 = jax.random.split(root, 5)

    params = init_params(k_par)

    feature_1 = jax.random.normal(k1, (N_NODES, T_STEPS, FEAT), jnp.float32)   # GRU input
    feature_2_x = jax.random.normal(k2, (N_NODES, L_TREE, FEAT), jnp.float32)  # tree_1 chains
    feature_3_x = jax.random.normal(k3, (N_NODES, L_TREE, FEAT), jnp.float32)  # tree_2 chains
    feature_4 = jax.random.normal(k4, (N_NODES, COVER), jnp.float32)           # coverage feats

    # undirected ring graph, (2, E) int32
    idx = jnp.arange(N_NODES, dtype=jnp.int32)
    nxt = (idx + 1) % N_NODES
    edge_index = jnp.stack([jnp.concatenate([idx, nxt]),
                            jnp.concatenate([nxt, idx])], axis=0)

    fwd = jax.jit(fix_locator_forward)
    out = jax.block_until_ready(
        fwd(params, feature_1, feature_2_x, feature_3_x, feature_4, edge_index))

    assert out.shape == (2, N_NODES)
    assert bool(jnp.all(jnp.isfinite(out)))
    # softmax(dim=1) on (N,2) then transpose -> columns of `out` sum to 1
    assert bool(jnp.allclose(jnp.sum(out, axis=0), 1.0, atol=1e-5))
    print("KERNEL_OK")
</pallas_src>

<mosaic_0001>
module attributes {stable_mosaic.version = 11 : i64} {
  func.func @fix_locator_kernel(%arg0: memref<6x8x16xf32, #tpu.memory_space<vmem>>, %arg1: memref<5x16x32xf32, #tpu.memory_space<vmem>>, %arg2: memref<8x12xf32, #tpu.memory_space<vmem>>, %arg3: memref<8x8xf32, #tpu.memory_space<vmem>>, %arg4: memref<16x72xf32, #tpu.memory_space<vmem>>, %arg5: memref<24x72xf32, #tpu.memory_space<vmem>>, %arg6: memref<1x72xf32, #tpu.memory_space<vmem>>, %arg7: memref<1x72xf32, #tpu.memory_space<vmem>>, %arg8: memref<32x96xf32, #tpu.memory_space<vmem>>, %arg9: memref<48x96xf32, #tpu.memory_space<vmem>>, %arg10: memref<2x96xf32, #tpu.memory_space<vmem>>, %arg11: memref<84x32xf32, #tpu.memory_space<vmem>>, %arg12: memref<1x32xf32, #tpu.memory_space<vmem>>, %arg13: memref<2x32x32xf32, #tpu.memory_space<vmem>>, %arg14: memref<2x1x32xf32, #tpu.memory_space<vmem>>, %arg15: memref<32x2xf32, #tpu.memory_space<vmem>>, %arg16: memref<1x2xf32, #tpu.memory_space<vmem>>, %arg17: memref<8x2xf32, #tpu.memory_space<vmem>>) attributes {dimension_semantics = [], scalar_prefetch = 0 : i64, scratch_operands = 0 : i64, tpu.core_type = #tpu.core_type<tc>} {
    %c0 = arith.constant 0 : index
    %c0_0 = arith.constant 0 : index
    %0 = vector.load %arg4[%c0, %c0_0] : memref<16x72xf32, #tpu.memory_space<vmem>>, vector<16x72xf32>
    %c0_1 = arith.constant 0 : index
    %c0_2 = arith.constant 0 : index
    %1 = vector.load %arg5[%c0_1, %c0_2] : memref<24x72xf32, #tpu.memory_space<vmem>>, vector<24x72xf32>
    %c0_3 = arith.constant 0 : index
    %c0_4 = arith.constant 0 : index
    %2 = vector.load %arg6[%c0_3, %c0_4] : memref<1x72xf32, #tpu.memory_space<vmem>>, vector<1x72xf32>
    %c0_5 = arith.constant 0 : index
    %c0_6 = arith.constant 0 : index
    %3 = vector.load %arg7[%c0_5, %c0_6] : memref<1x72xf32, #tpu.memory_space<vmem>>, vector<1x72xf32>
    %cst = arith.constant 0.000000e+00 : f32
    %4 = vector.broadcast %cst : f32 to vector<8x24xf32>
    %c0_7 = arith.constant 0 : index
    %c0_8 = arith.constant 0 : index
    %c0_9 = arith.constant 0 : index
    %5 = vector.load %arg0[%c0_7, %c0_8, %c0_9] : memref<6x8x16xf32, #tpu.memory_space<vmem>>, vector<1x8x16xf32>
    %6 = vector.shape_cast %5 : vector<1x8x16xf32> to vector<8x16xf32>
    %cst_10 = arith.constant dense<0.000000e+00> : vector<8x72xf32>
    %7 = tpu.matmul %6, %0, %cst_10 {dimension_numbers = #tpu.dot_dimension_numbers<[1], [0], [0], [1], [0, 0, 1, 1], [], []>} : vector<8x16xf32>, vector<16x72xf32>, vector<8x72xf32> -> vector<8x72xf32>
    %8 = vector.broadcast %2 : vector<1x72xf32> to vector<8x72xf32>
    %9 = arith.addf %7, %8 : vector<8x72xf32>
    %cst_11 = arith.constant dense<0.000000e+00> : vector<8x72xf32>
    %10 = tpu.matmul %4, %1, %cst_11 {dimension_numbers = #tpu.dot_dimension_numbers<[1], [0], [0], [1], [0, 0, 1, 1], [], []>} : vector<8x24xf32>, vector<24x72xf32>, vector<8x72xf32> -> vector<8x72xf32>
    %11 = vector.broadcast %3 : vector<1x72xf32> to vector<8x72xf32>
    %12 = arith.addf %10, %11 : vector<8x72xf32>
    %13 = vector.extract_strided_slice %9 {offsets = [0, 0], sizes = [8, 24], strides = [1, 1]} : vector<8x72xf32> to vector<8x24xf32>
    %14 = vector.extract_strided_slice %12 {offsets = [0, 0], sizes = [8, 24], strides = [1, 1]} : vector<8x72xf32> to vector<8x24xf32>
    %15 = arith.addf %13, %14 : vector<8x24xf32>
    %16 = arith.negf %15 : vector<8x24xf32>
    %17 = math.exp %16 : vector<8x24xf32>
    %cst_12 = arith.constant 1.000000e+00 : f32
    %18 = vector.broadcast %cst_12 : f32 to vector<8x24xf32>
    %19 = arith.addf %18, %17 : vector<8x24xf32>
    %20 = arith.divf %18, %19 : vector<8x24xf32>
    %21 = vector.extract_strided_slice %9 {offsets = [0, 24], sizes = [8, 24], strides = [1, 1]} : vector<8x72xf32> to vector<8x24xf32>
    %22 = vector.extract_strided_slice %12 {offsets = [0, 24], sizes = [8, 24], strides = [1, 1]} : vector<8x72xf32> to vector<8x24xf32>
    %23 = arith.addf %21, %22 : vector<8x24xf32>
    %24 = arith.negf %23 : vector<8x24xf32>
    %25 = math.exp %24 : vector<8x24xf32>
    %cst_13 = arith.constant 1.000000e+00 : f32
    %26 = vector.broadcast %cst_13 : f32 to vector<8x24xf32>
    %27 = arith.addf %26, %25 : vector<8x24xf32>
    %28 = arith.divf %26, %27 : vector<8x24xf32>
    %29 = vector.extract_strided_slice %9 {offsets = [0, 48], sizes = [8, 24], strides = [1, 1]} : vector<8x72xf32> to vector<8x24xf32>
    %30 = vector.extract_strided_slice %12 {offsets = [0, 48], sizes = [8, 24], strides = [1, 1]} : vector<8x72xf32> to vector<8x24xf32>
    %31 = arith.mulf %20, %30 : vector<8x24xf32>
    %32 = arith.addf %29, %31 : vector<8x24xf32>
    %33 = math.tanh %32 : vector<8x24xf32>
    %cst_14 = arith.constant 1.000000e+00 : f32
    %34 = vector.broadcast %cst_14 : f32 to vector<8x24xf32>
    %35 = arith.subf %34, %28 : vector<8x24xf32>
    %36 = arith.mulf %35, %33 : vector<8x24xf32>
    %37 = arith.mulf %28, %4 : vector<8x24xf32>
    %38 = arith.addf %36, %37 : vector<8x24xf32>
    %c1 = arith.constant 1 : index
    %c0_15 = arith.constant 0 : index
    %c0_16 = arith.constant 0 : index
    %39 = vector.load %arg0[%c1, %c0_15, %c0_16] : memref<6x8x16xf32, #tpu.memory_space<vmem>>, vector<1x8x16xf32>
    %40 = vector.shape_cast %39 : vector<1x8x16xf32> to vector<8x16xf32>
    %cst_17 = arith.constant dense<0.000000e+00> : vector<8x72xf32>
    %41 = tpu.matmul %40, %0, %cst_17 {dimension_numbers = #tpu.dot_dimension_numbers<[1], [0], [0], [1], [0, 0, 1, 1], [], []>} : vector<8x16xf32>, vector<16x72xf32>, vector<8x72xf32> -> vector<8x72xf32>
    %42 = vector.broadcast %2 : vector<1x72xf32> to vector<8x72xf32>
    %43 = arith.addf %41, %42 : vector<8x72xf32>
    %cst_18 = arith.constant dense<0.000000e+00> : vector<8x72xf32>
    %44 = tpu.matmul %38, %1, %cst_18 {dimension_numbers = #tpu.dot_dimension_numbers<[1], [0], [0], [1], [0, 0, 1, 1], [], []>} : vector<8x24xf32>, vector<24x72xf32>, vector<8x72xf32> -> vector<8x72xf32>
    %45 = vector.broadcast %3 : vector<1x72xf32> to vector<8x72xf32>
    %46 = arith.addf %44, %45 : vector<8x72xf32>
    %47 = vector.extract_strided_slice %43 {offsets = [0, 0], sizes = [8, 24], strides = [1, 1]} : vector<8x72xf32> to vector<8x24xf32>
    %48 = vector.extract_strided_slice %46 {offsets = [0, 0], sizes = [8, 24], strides = [1, 1]} : vector<8x72xf32> to vector<8x24xf32>
    %49 = arith.addf %47, %48 : vector<8x24xf32>
    %50 = arith.negf %49 : vector<8x24xf32>
    %51 = math.exp %50 : vector<8x24xf32>
    %cst_19 = arith.constant 1.000000e+00 : f32
    %52 = vector.broadcast %cst_19 : f32 to vector<8x24xf32>
    %53 = arith.addf %52, %51 : vector<8x24xf32>
    %54 = arith.divf %52, %53 : vector<8x24xf32>
    %55 = vector.extract_strided_slice %43 {offsets = [0, 24], sizes = [8, 24], strides = [1, 1]} : vector<8x72xf32> to vector<8x24xf32>
    %56 = vector.extract_strided_slice %46 {offsets = [0, 24], sizes = [8, 24], strides = [1, 1]} : vector<8x72xf32> to vector<8x24xf32>
    %57 = arith.addf %55, %56 : vector<8x24xf32>
    %58 = arith.negf %57 : vector<8x24xf32>
    %59 = math.exp %58 : vector<8x24xf32>
    %cst_20 = arith.constant 1.000000e+00 : f32
    %60 = vector.broadcast %cst_20 : f32 to vector<8x24xf32>
    %61 = arith.addf %60, %59 : vector<8x24xf32>
    %62 = arith.divf %60, %61 : vector<8x24xf32>
    %63 = vector.extract_strided_slice %43 {offsets = [0, 48], sizes = [8, 24], strides = [1, 1]} : vector<8x72xf32> to vector<8x24xf32>
    %64 = vector.extract_strided_slice %46 {offsets = [0, 48], sizes = [8, 24], strides = [1, 1]} : vector<8x72xf32> to vector<8x24xf32>
    %65 = arith.mulf %54, %64 : vector<8x24xf32>
    %66 = arith.addf %63, %65 : vector<8x24xf32>
    %67 = math.tanh %66 : vector<8x24xf32>
    %cst_21 = arith.constant 1.000000e+00 : f32
    %68 = vector.broadcast %cst_21 : f32 to vector<8x24xf32>
    %69 = arith.subf %68, %62 : vector<8x24xf32>
    %70 = arith.mulf %69, %67 : vector<8x24xf32>
    %71 = arith.mulf %62, %38 : vector<8x24xf32>
    %72 = arith.addf %70, %71 : vector<8x24xf32>
    %c2 = arith.constant 2 : index
    %c0_22 = arith.constant 0 : index
    %c0_23 = arith.constant 0 : index
    %73 = vector.load %arg0[%c2, %c0_22, %c0_23] : memref<6x8x16xf32, #tpu.memory_space<vmem>>, vector<1x8x16xf32>
    %74 = vector.shape_cast %73 : vector<1x8x16xf32> to vector<8x16xf32>
    %cst_24 = arith.constant dense<0.000000e+00> : vector<8x72xf32>
    %75 = tpu.matmul %74, %0, %cst_24 {dimension_numbers = #tpu.dot_dimension_numbers<[1], [0], [0], [1], [0, 0, 1, 1], [], []>} : vector<8x16xf32>, vector<16x72xf32>, vector<8x72xf32> -> vector<8x72xf32>
    %76 = vector.broadcast %2 : vector<1x72xf32> to vector<8x72xf32>
    %77 = arith.addf %75, %76 : vector<8x72xf32>
    %cst_25 = arith.constant dense<0.000000e+00> : vector<8x72xf32>
    %78 = tpu.matmul %72, %1, %cst_25 {dimension_numbers = #tpu.dot_dimension_numbers<[1], [0], [0], [1], [0, 0, 1, 1], [], []>} : vector<8x24xf32>, vector<24x72xf32>, vector<8x72xf32> -> vector<8x72xf32>
    %79 = vector.broadcast %3 : vector<1x72xf32> to vector<8x72xf32>
    %80 = arith.addf %78, %79 : vector<8x72xf32>
    %81 = vector.extract_strided_slice %77 {offsets = [0, 0], sizes = [8, 24], strides = [1, 1]} : vector<8x72xf32> to vector<8x24xf32>
    %82 = vector.extract_strided_slice %80 {offsets = [0, 0], sizes = [8, 24], strides = [1, 1]} : vector<8x72xf32> to vector<8x24xf32>
    %83 = arith.addf %81, %82 : vector<8x24xf32>
    %84 = arith.negf %83 : vector<8x24xf32>
    %85 = math.exp %84 : vector<8x24xf32>
    %cst_26 = arith.constant 1.000000e+00 : f32
    %86 = vector.broadcast %cst_26 : f32 to vector<8x24xf32>
    %87 = arith.addf %86, %85 : vector<8x24xf32>
    %88 = arith.divf %86, %87 : vector<8x24xf32>
    %89 = vector.extract_strided_slice %77 {offsets = [0, 24], sizes = [8, 24], strides = [1, 1]} : vector<8x72xf32> to vector<8x24xf32>
    %90 = vector.extract_strided_slice %80 {offsets = [0, 24], sizes = [8, 24], strides = [1, 1]} : vector<8x72xf32> to vector<8x24xf32>
    %91 = arith.addf %89, %90 : vector<8x24xf32>
    %92 = arith.negf %91 : vector<8x24xf32>
    %93 = math.exp %92 : vector<8x24xf32>
    %cst_27 = arith.constant 1.000000e+00 : f32
    %94 = vector.broadcast %cst_27 : f32 to vector<8x24xf32>
    %95 = arith.addf %94, %93 : vector<8x24xf32>
    %96 = arith.divf %94, %95 : vector<8x24xf32>
    %97 = vector.extract_strided_slice %77 {offsets = [0, 48], sizes = [8, 24], strides = [1, 1]} : vector<8x72xf32> to vector<8x24xf32>
    %98 = vector.extract_strided_slice %80 {offsets = [0, 48], sizes = [8, 24], strides = [1, 1]} : vector<8x72xf32> to vector<8x24xf32>
    %99 = arith.mulf %88, %98 : vector<8x24xf32>
    %100 = arith.addf %97, %99 : vector<8x24xf32>
    %101 = math.tanh %100 : vector<8x24xf32>
    %cst_28 = arith.constant 1.000000e+00 : f32
    %102 = vector.broadcast %cst_28 : f32 to vector<8x24xf32>
    %103 = arith.subf %102, %96 : vector<8x24xf32>
    %104 = arith.mulf %103, %101 : vector<8x24xf32>
    %105 = arith.mulf %96, %72 : vector<8x24xf32>
    %106 = arith.addf %104, %105 : vector<8x24xf32>
    %c3 = arith.constant 3 : index
    %c0_29 = arith.constant 0 : index
    %c0_30 = arith.constant 0 : index
    %107 = vector.load %arg0[%c3, %c0_29, %c0_30] : memref<6x8x16xf32, #tpu.memory_space<vmem>>, vector<1x8x16xf32>
    %108 = vector.shape_cast %107 : vector<1x8x16xf32> to vector<8x16xf32>
    %cst_31 = arith.constant dense<0.000000e+00> : vector<8x72xf32>
    %109 = tpu.matmul %108, %0, %cst_31 {dimension_numbers = #tpu.dot_dimension_numbers<[1], [0], [0], [1], [0, 0, 1, 1], [], []>} : vector<8x16xf32>, vector<16x72xf32>, vector<8x72xf32> -> vector<8x72xf32>
    %110 = vector.broadcast %2 : vector<1x72xf32> to vector<8x72xf32>
    %111 = arith.addf %109, %110 : vector<8x72xf32>
    %cst_32 = arith.constant dense<0.000000e+00> : vector<8x72xf32>
    %112 = tpu.matmul %106, %1, %cst_32 {dimension_numbers = #tpu.dot_dimension_numbers<[1], [0], [0], [1], [0, 0, 1, 1], [], []>} : vector<8x24xf32>, vector<24x72xf32>, vector<8x72xf32> -> vector<8x72xf32>
    %113 = vector.broadcast %3 : vector<1x72xf32> to vector<8x72xf32>
    %114 = arith.addf %112, %113 : vector<8x72xf32>
    %115 = vector.extract_strided_slice %111 {offsets = [0, 0], sizes = [8, 24], strides = [1, 1]} : vector<8x72xf32> to vector<8x24xf32>
    %116 = vector.extract_strided_slice %114 {offsets = [0, 0], sizes = [8, 24], strides = [1, 1]} : vector<8x72xf32> to vector<8x24xf32>
    %117 = arith.addf %115, %116 : vector<8x24xf32>
    %118 = arith.negf %117 : vector<8x24xf32>
    %119 = math.exp %118 : vector<8x24xf32>
    %cst_33 = arith.constant 1.000000e+00 : f32
    %120 = vector.broadcast %cst_33 : f32 to vector<8x24xf32>
    %121 = arith.addf %120, %119 : vector<8x24xf32>
    %122 = arith.divf %120, %121 : vector<8x24xf32>
    %123 = vector.extract_strided_slice %111 {offsets = [0, 24], sizes = [8, 24], strides = [1, 1]} : vector<8x72xf32> to vector<8x24xf32>
    %124 = vector.extract_strided_slice %114 {offsets = [0, 24], sizes = [8, 24], strides = [1, 1]} : vector<8x72xf32> to vector<8x24xf32>
    %125 = arith.addf %123, %124 : vector<8x24xf32>
    %126 = arith.negf %125 : vector<8x24xf32>
    %127 = math.exp %126 : vector<8x24xf32>
    %cst_34 = arith.constant 1.000000e+00 : f32
    %128 = vector.broadcast %cst_34 : f32 to vector<8x24xf32>
    %129 = arith.addf %128, %127 : vector<8x24xf32>
    %130 = arith.divf %128, %129 : vector<8x24xf32>
    %131 = vector.extract_strided_slice %111 {offsets = [0, 48], sizes = [8, 24], strides = [1, 1]} : vector<8x72xf32> to vector<8x24xf32>
    %132 = vector.extract_strided_slice %114 {offsets = [0, 48], sizes = [8, 24], strides = [1, 1]} : vector<8x72xf32> to vector<8x24xf32>
    %133 = arith.mulf %122, %132 : vector<8x24xf32>
    %134 = arith.addf %131, %133 : vector<8x24xf32>
    %135 = math.tanh %134 : vector<8x24xf32>
    %cst_35 = arith.constant 1.000000e+00 : f32
    %136 = vector.broadcast %cst_35 : f32 to vector<8x24xf32>
    %137 = arith.subf %136, %130 : vector<8x24xf32>
    %138 = arith.mulf %137, %135 : vector<8x24xf32>
    %139 = arith.mulf %130, %106 : vector<8x24xf32>
    %140 = arith.addf %138, %139 : vector<8x24xf32>
    %c4 = arith.constant 4 : index
    %c0_36 = arith.constant 0 : index
    %c0_37 = arith.constant 0 : index
    %141 = vector.load %arg0[%c4, %c0_36, %c0_37] : memref<6x8x16xf32, #tpu.memory_space<vmem>>, vector<1x8x16xf32>
    %142 = vector.shape_cast %141 : vector<1x8x16xf32> to vector<8x16xf32>
    %cst_38 = arith.constant dense<0.000000e+00> : vector<8x72xf32>
    %143 = tpu.matmul %142, %0, %cst_38 {dimension_numbers = #tpu.dot_dimension_numbers<[1], [0], [0], [1], [0, 0, 1, 1], [], []>} : vector<8x16xf32>, vector<16x72xf32>, vector<8x72xf32> -> vector<8x72xf32>
    %144 = vector.broadcast %2 : vector<1x72xf32> to vector<8x72xf32>
    %145 = arith.addf %143, %144 : vector<8x72xf32>
    %cst_39 = arith.constant dense<0.000000e+00> : vector<8x72xf32>
    %146 = tpu.matmul %140, %1, %cst_39 {dimension_numbers = #tpu.dot_dimension_numbers<[1], [0], [0], [1], [0, 0, 1, 1], [], []>} : vector<8x24xf32>, vector<24x72xf32>, vector<8x72xf32> -> vector<8x72xf32>
    %147 = vector.broadcast %3 : vector<1x72xf32> to vector<8x72xf32>
    %148 = arith.addf %146, %147 : vector<8x72xf32>
    %149 = vector.extract_strided_slice %145 {offsets = [0, 0], sizes = [8, 24], strides = [1, 1]} : vector<8x72xf32> to vector<8x24xf32>
    %150 = vector.extract_strided_slice %148 {offsets = [0, 0], sizes = [8, 24], strides = [1, 1]} : vector<8x72xf32> to vector<8x24xf32>
    %151 = arith.addf %149, %150 : vector<8x24xf32>
    %152 = arith.negf %151 : vector<8x24xf32>
    %153 = math.exp %152 : vector<8x24xf32>
    %cst_40 = arith.constant 1.000000e+00 : f32
    %154 = vector.broadcast %cst_40 : f32 to vector<8x24xf32>
    %155 = arith.addf %154, %153 : vector<8x24xf32>
    %156 = arith.divf %154, %155 : vector<8x24xf32>
    %157 = vector.extract_strided_slice %145 {offsets = [0, 24], sizes = [8, 24], strides = [1, 1]} : vector<8x72xf32> to vector<8x24xf32>
    %158 = vector.extract_strided_slice %148 {offsets = [0, 24], sizes = [8, 24], strides = [1, 1]} : vector<8x72xf32> to vector<8x24xf32>
    %159 = arith.addf %157, %158 : vector<8x24xf32>
    %160 = arith.negf %159 : vector<8x24xf32>
    %161 = math.exp %160 : vector<8x24xf32>
    %cst_41 = arith.constant 1.000000e+00 : f32
    %162 = vector.broadcast %cst_41 : f32 to vector<8x24xf32>
    %163 = arith.addf %162, %161 : vector<8x24xf32>
    %164 = arith.divf %162, %163 : vector<8x24xf32>
    %165 = vector.extract_strided_slice %145 {offsets = [0, 48], sizes = [8, 24], strides = [1, 1]} : vector<8x72xf32> to vector<8x24xf32>
    %166 = vector.extract_strided_slice %148 {offsets = [0, 48], sizes = [8, 24], strides = [1, 1]} : vector<8x72xf32> to vector<8x24xf32>
    %167 = arith.mulf %156, %166 : vector<8x24xf32>
    %168 = arith.addf %165, %167 : vector<8x24xf32>
    %169 = math.tanh %168 : vector<8x24xf32>
    %cst_42 = arith.constant 1.000000e+00 : f32
    %170 = vector.broadcast %cst_42 : f32 to vector<8x24xf32>
    %171 = arith.subf %170, %164 : vector<8x24xf32>
    %172 = arith.mulf %171, %169 : vector<8x24xf32>
    %173 = arith.mulf %164, %140 : vector<8x24xf32>
    %174 = arith.addf %172, %173 : vector<8x24xf32>
    %c5 = arith.constant 5 : index
    %c0_43 = arith.constant 0 : index
    %c0_44 = arith.constant 0 : index
    %175 = vector.load %arg0[%c5, %c0_43, %c0_44] : memref<6x8x16xf32, #tpu.memory_space<vmem>>, vector<1x8x16xf32>
    %176 = vector.shape_cast %175 : vector<1x8x16xf32> to vector<8x16xf32>
    %cst_45 = arith.constant dense<0.000000e+00> : vector<8x72xf32>
    %177 = tpu.matmul %176, %0, %cst_45 {dimension_numbers = #tpu.dot_dimension_numbers<[1], [0], [0], [1], [0, 0, 1, 1], [], []>} : vector<8x16xf32>, vector<16x72xf32>, vector<8x72xf32> -> vector<8x72xf32>
    %178 = vector.broadcast %2 : vector<1x72xf32> to vector<8x72xf32>
    %179 = arith.addf %177, %178 : vector<8x72xf32>
    %cst_46 = arith.constant dense<0.000000e+00> : vector<8x72xf32>
    %180 = tpu.matmul %174, %1, %cst_46 {dimension_numbers = #tpu.dot_dimension_numbers<[1], [0], [0], [1], [0, 0, 1, 1], [], []>} : vector<8x24xf32>, vector<24x72xf32>, vector<8x72xf32> -> vector<8x72xf32>
    %181 = vector.broadcast %3 : vector<1x72xf32> to vector<8x72xf32>
    %182 = arith.addf %180, %181 : vector<8x72xf32>
    %183 = vector.extract_strided_slice %179 {offsets = [0, 0], sizes = [8, 24], strides = [1, 1]} : vector<8x72xf32> to vector<8x24xf32>
    %184 = vector.extract_strided_slice %182 {offsets = [0, 0], sizes = [8, 24], strides = [1, 1]} : vector<8x72xf32> to vector<8x24xf32>
    %185 = arith.addf %183, %184 : vector<8x24xf32>
    %186 = arith.negf %185 : vector<8x24xf32>
    %187 = math.exp %186 : vector<8x24xf32>
    %cst_47 = arith.constant 1.000000e+00 : f32
    %188 = vector.broadcast %cst_47 : f32 to vector<8x24xf32>
    %189 = arith.addf %188, %187 : vector<8x24xf32>
    %190 = arith.divf %188, %189 : vector<8x24xf32>
    %191 = vector.extract_strided_slice %179 {offsets = [0, 24], sizes = [8, 24], strides = [1, 1]} : vector<8x72xf32> to vector<8x24xf32>
    %192 = vector.extract_strided_slice %182 {offsets = [0, 24], sizes = [8, 24], strides = [1, 1]} : vector<8x72xf32> to vector<8x24xf32>
    %193 = arith.addf %191, %192 : vector<8x24xf32>
    %194 = arith.negf %193 : vector<8x24xf32>
    %195 = math.exp %194 : vector<8x24xf32>
    %cst_48 = arith.constant 1.000000e+00 : f32
    %196 = vector.broadcast %cst_48 : f32 to vector<8x24xf32>
    %197 = arith.addf %196, %195 : vector<8x24xf32>
    %198 = arith.divf %196, %197 : vector<8x24xf32>
    %199 = vector.extract_strided_slice %179 {offsets = [0, 48], sizes = [8, 24], strides = [1, 1]} : vector<8x72xf32> to vector<8x24xf32>
    %200 = vector.extract_strided_slice %182 {offsets = [0, 48], sizes = [8, 24], strides = [1, 1]} : vector<8x72xf32> to vector<8x24xf32>
    %201 = arith.mulf %190, %200 : vector<8x24xf32>
    %202 = arith.addf %199, %201 : vector<8x24xf32>
    %203 = math.tanh %202 : vector<8x24xf32>
    %cst_49 = arith.constant 1.000000e+00 : f32
    %204 = vector.broadcast %cst_49 : f32 to vector<8x24xf32>
    %205 = arith.subf %204, %198 : vector<8x24xf32>
    %206 = arith.mulf %205, %203 : vector<8x24xf32>
    %207 = arith.mulf %198, %174 : vector<8x24xf32>
    %208 = arith.addf %206, %207 : vector<8x24xf32>
    %c0_50 = arith.constant 0 : index
    %c0_51 = arith.constant 0 : index
    %209 = vector.load %arg8[%c0_50, %c0_51] : memref<32x96xf32, #tpu.memory_space<vmem>>, vector<32x96xf32>
    %c0_52 = arith.constant 0 : index
    %c0_53 = arith.constant 0 : index
    %210 = vector.load %arg9[%c0_52, %c0_53] : memref<48x96xf32, #tpu.memory_space<vmem>>, vector<48x96xf32>
    %c0_54 = arith.constant 0 : index
    %c0_55 = arith.constant 0 : index
    %211 = vector.load %arg10[%c0_54, %c0_55] : memref<2x96xf32, #tpu.memory_space<vmem>>, vector<1x96xf32>
    %212 = vector.shape_cast %211 : vector<1x96xf32> to vector<1x96xf32>
    %213 = vector.broadcast %212 : vector<1x96xf32> to vector<8x96xf32>
    %c1_56 = arith.constant 1 : index
    %c0_57 = arith.constant 0 : index
    %214 = vector.load %arg10[%c1_56, %c0_57] : memref<2x96xf32, #tpu.memory_space<vmem>>, vector<1x96xf32>
    %215 = vector.shape_cast %214 : vector<1x96xf32> to vector<1x96xf32>
    %216 = vector.broadcast %215 : vector<1x96xf32> to vector<8x96xf32>
    %217 = tpu.concatenate %213, %216 in 0 : vector<8x96xf32>, vector<8x96xf32> -> vector<16x96xf32>
    %218 = tpu.iota {dimensions = array<i32: 0>} : vector<16x1xi32>
    %c8_i32 = arith.constant 8 : i32
    %219 = vector.broadcast %c8_i32 : i32 to vector<16x1xi32>
    %220 = arith.cmpi slt, %218, %219 : vector<16x1xi32>
    %221 = arith.extui %220 : vector<16x1xi1> to vector<16x1xi32>
    %222 = arith.sitofp %221 : vector<16x1xi32> to vector<16x1xf32>
    %cst_58 = arith.constant 1.000000e+00 : f32
    %223 = vector.broadcast %cst_58 : f32 to vector<16x1xf32>
    %224 = arith.subf %223, %222 : vector<16x1xf32>
    %cst_59 = arith.constant 0.000000e+00 : f32
    %225 = vector.broadcast %cst_59 : f32 to vector<16x24xf32>
    %cst_60 = arith.constant 0.000000e+00 : f32
    %226 = vector.broadcast %cst_60 : f32 to vector<16x24xf32>
    %227 = vector.broadcast %222 : vector<16x1xf32> to vector<16x24xf32>
    %228 = arith.mulf %226, %227 : vector<16x24xf32>
    %229 = vector.broadcast %224 : vector<16x1xf32> to vector<16x24xf32>
    %230 = arith.mulf %226, %229 : vector<16x24xf32>
    %231 = tpu.concatenate %228, %230 in 1 : vector<16x24xf32>, vector<16x24xf32> -> vector<16x48xf32>
    %c0_61 = arith.constant 0 : index
    %c0_62 = arith.constant 0 : index
    %c0_63 = arith.constant 0 : index
    %232 = vector.load %arg1[%c0_61, %c0_62, %c0_63] : memref<5x16x32xf32, #tpu.memory_space<vmem>>, vector<1x16x32xf32>
    %233 = vector.shape_cast %232 : vector<1x16x32xf32> to vector<16x32xf32>
    %cst_64 = arith.constant dense<0.000000e+00> : vector<16x96xf32>
    %234 = tpu.matmul %233, %209, %cst_64 {dimension_numbers = #tpu.dot_dimension_numbers<[1], [0], [0], [1], [0, 0, 1, 1], [], []>} : vector<16x32xf32>, vector<32x96xf32>, vector<16x96xf32> -> vector<16x96xf32>
    %cst_65 = arith.constant dense<0.000000e+00> : vector<16x96xf32>
    %235 = tpu.matmul %231, %210, %cst_65 {dimension_numbers = #tpu.dot_dimension_numbers<[1], [0], [0], [1], [0, 0, 1, 1], [], []>} : vector<16x48xf32>, vector<48x96xf32>, vector<16x96xf32> -> vector<16x96xf32>
    %236 = arith.addf %234, %235 : vector<16x96xf32>
    %237 = arith.addf %236, %217 : vector<16x96xf32>
    %238 = vector.extract_strided_slice %237 {offsets = [0, 0], sizes = [16, 24], strides = [1, 1]} : vector<16x96xf32> to vector<16x24xf32>
    %239 = arith.negf %238 : vector<16x24xf32>
    %240 = math.exp %239 : vector<16x24xf32>
    %cst_66 = arith.constant 1.000000e+00 : f32
    %241 = vector.broadcast %cst_66 : f32 to vector<16x24xf32>
    %242 = arith.addf %241, %240 : vector<16x24xf32>
    %243 = arith.divf %241, %242 : vector<16x24xf32>
    %244 = vector.extract_strided_slice %237 {offsets = [0, 24], sizes = [16, 24], strides = [1, 1]} : vector<16x96xf32> to vector<16x24xf32>
    %245 = arith.negf %244 : vector<16x24xf32>
    %246 = math.exp %245 : vector<16x24xf32>
    %cst_67 = arith.constant 1.000000e+00 : f32
    %247 = vector.broadcast %cst_67 : f32 to vector<16x24xf32>
    %248 = arith.addf %247, %246 : vector<16x24xf32>
    %249 = arith.divf %247, %248 : vector<16x24xf32>
    %250 = vector.extract_strided_slice %237 {offsets = [0, 48], sizes = [16, 24], strides = [1, 1]} : vector<16x96xf32> to vector<16x24xf32>
    %251 = math.tanh %250 : vector<16x24xf32>
    %252 = vector.extract_strided_slice %237 {offsets = [0, 72], sizes = [16, 24], strides = [1, 1]} : vector<16x96xf32> to vector<16x24xf32>
    %253 = arith.negf %252 : vector<16x24xf32>
    %254 = math.exp %253 : vector<16x24xf32>
    %cst_68 = arith.constant 1.000000e+00 : f32
    %255 = vector.broadcast %cst_68 : f32 to vector<16x24xf32>
    %256 = arith.addf %255, %254 : vector<16x24xf32>
    %257 = arith.divf %255, %256 : vector<16x24xf32>
    %258 = arith.mulf %243, %251 : vector<16x24xf32>
    %259 = arith.mulf %257, %225 : vector<16x24xf32>
    %260 = arith.addf %258, %259 : vector<16x24xf32>
    %261 = math.tanh %260 : vector<16x24xf32>
    %262 = arith.mulf %249, %261 : vector<16x24xf32>
    %263 = vector.broadcast %222 : vector<16x1xf32> to vector<16x24xf32>
    %264 = arith.mulf %262, %263 : vector<16x24xf32>
    %265 = vector.broadcast %224 : vector<16x1xf32> to vector<16x24xf32>
    %266 = arith.mulf %262, %265 : vector<16x24xf32>
    %267 = tpu.concatenate %264, %266 in 1 : vector<16x24xf32>, vector<16x24xf32> -> vector<16x48xf32>
    %c1_69 = arith.constant 1 : index
    %c0_70 = arith.constant 0 : index
    %c0_71 = arith.constant 0 : index
    %268 = vector.load %arg1[%c1_69, %c0_70, %c0_71] : memref<5x16x32xf32, #tpu.memory_space<vmem>>, vector<1x16x32xf32>
    %269 = vector.shape_cast %268 : vector<1x16x32xf32> to vector<16x32xf32>
    %cst_72 = arith.constant dense<0.000000e+00> : vector<16x96xf32>
    %270 = tpu.matmul %269, %209, %cst_72 {dimension_numbers = #tpu.dot_dimension_numbers<[1], [0], [0], [1], [0, 0, 1, 1], [], []>} : vector<16x32xf32>, vector<32x96xf32>, vector<16x96xf32> -> vector<16x96xf32>
    %cst_73 = arith.constant dense<0.000000e+00> : vector<16x96xf32>
    %271 = tpu.matmul %267, %210, %cst_73 {dimension_numbers = #tpu.dot_dimension_numbers<[1], [0], [0], [1], [0, 0, 1, 1], [], []>} : vector<16x48xf32>, vector<48x96xf32>, vector<16x96xf32> -> vector<16x96xf32>
    %272 = arith.addf %270, %271 : vector<16x96xf32>
    %273 = arith.addf %272, %217 : vector<16x96xf32>
    %274 = vector.extract_strided_slice %273 {offsets = [0, 0], sizes = [16, 24], strides = [1, 1]} : vector<16x96xf32> to vector<16x24xf32>
    %275 = arith.negf %274 : vector<16x24xf32>
    %276 = math.exp %275 : vector<16x24xf32>
    %cst_74 = arith.constant 1.000000e+00 : f32
    %277 = vector.broadcast %cst_74 : f32 to vector<16x24xf32>
    %278 = arith.addf %277, %276 : vector<16x24xf32>
    %279 = arith.divf %277, %278 : vector<16x24xf32>
    %280 = vector.extract_strided_slice %273 {offsets = [0, 24], sizes = [16, 24], strides = [1, 1]} : vector<16x96xf32> to vector<16x24xf32>
    %281 = arith.negf %280 : vector<16x24xf32>
    %282 = math.exp %281 : vector<16x24xf32>
    %cst_75 = arith.constant 1.000000e+00 : f32
    %283 = vector.broadcast %cst_75 : f32 to vector<16x24xf32>
    %284 = arith.addf %283, %282 : vector<16x24xf32>
    %285 = arith.divf %283, %284 : vector<16x24xf32>
    %286 = vector.extract_strided_slice %273 {offsets = [0, 48], sizes = [16, 24], strides = [1, 1]} : vector<16x96xf32> to vector<16x24xf32>
    %287 = math.tanh %286 : vector<16x24xf32>
    %288 = vector.extract_strided_slice %273 {offsets = [0, 72], sizes = [16, 24], strides = [1, 1]} : vector<16x96xf32> to vector<16x24xf32>
    %289 = arith.negf %288 : vector<16x24xf32>
    %290 = math.exp %289 : vector<16x24xf32>
    %cst_76 = arith.constant 1.000000e+00 : f32
    %291 = vector.broadcast %cst_76 : f32 to vector<16x24xf32>
    %292 = arith.addf %291, %290 : vector<16x24xf32>
    %293 = arith.divf %291, %292 : vector<16x24xf32>
    %294 = arith.mulf %279, %287 : vector<16x24xf32>
    %295 = arith.mulf %293, %260 : vector<16x24xf32>
    %296 = arith.addf %294, %295 : vector<16x24xf32>
    %297 = math.tanh %296 : vector<16x24xf32>
    %298 = arith.mulf %285, %297 : vector<16x24xf32>
    %299 = vector.broadcast %222 : vector<16x1xf32> to vector<16x24xf32>
    %300 = arith.mulf %298, %299 : vector<16x24xf32>
    %301 = vector.broadcast %224 : vector<16x1xf32> to vector<16x24xf32>
    %302 = arith.mulf %298, %301 : vector<16x24xf32>
    %303 = tpu.concatenate %300, %302 in 1 : vector<16x24xf32>, vector<16x24xf32> -> vector<16x48xf32>
    %c2_77 = arith.constant 2 : index
    %c0_78 = arith.constant 0 : index
    %c0_79 = arith.constant 0 : index
    %304 = vector.load %arg1[%c2_77, %c0_78, %c0_79] : memref<5x16x32xf32, #tpu.memory_space<vmem>>, vector<1x16x32xf32>
    %305 = vector.shape_cast %304 : vector<1x16x32xf32> to vector<16x32xf32>
    %cst_80 = arith.constant dense<0.000000e+00> : vector<16x96xf32>
    %306 = tpu.matmul %305, %209, %cst_80 {dimension_numbers = #tpu.dot_dimension_numbers<[1], [0], [0], [1], [0, 0, 1, 1], [], []>} : vector<16x32xf32>, vector<32x96xf32>, vector<16x96xf32> -> vector<16x96xf32>
    %cst_81 = arith.constant dense<0.000000e+00> : vector<16x96xf32>
    %307 = tpu.matmul %303, %210, %cst_81 {dimension_numbers = #tpu.dot_dimension_numbers<[1], [0], [0], [1], [0, 0, 1, 1], [], []>} : vector<16x48xf32>, vector<48x96xf32>, vector<16x96xf32> -> vector<16x96xf32>
    %308 = arith.addf %306, %307 : vector<16x96xf32>
    %309 = arith.addf %308, %217 : vector<16x96xf32>
    %310 = vector.extract_strided_slice %309 {offsets = [0, 0], sizes = [16, 24], strides = [1, 1]} : vector<16x96xf32> to vector<16x24xf32>
    %311 = arith.negf %310 : vector<16x24xf32>
    %312 = math.exp %311 : vector<16x24xf32>
    %cst_82 = arith.constant 1.000000e+00 : f32
    %313 = vector.broadcast %cst_82 : f32 to vector<16x24xf32>
    %314 = arith.addf %313, %312 : vector<16x24xf32>
    %315 = arith.divf %313, %314 : vector<16x24xf32>
    %316 = vector.extract_strided_slice %309 {offsets = [0, 24], sizes = [16, 24], strides = [1, 1]} : vector<16x96xf32> to vector<16x24xf32>
    %317 = arith.negf %316 : vector<16x24xf32>
    %318 = math.exp %317 : vector<16x24xf32>
    %cst_83 = arith.constant 1.000000e+00 : f32
    %319 = vector.broadcast %cst_83 : f32 to vector<16x24xf32>
    %320 = arith.addf %319, %318 : vector<16x24xf32>
    %321 = arith.divf %319, %320 : vector<16x24xf32>
    %322 = vector.extract_strided_slice %309 {offsets = [0, 48], sizes = [16, 24], strides = [1, 1]} : vector<16x96xf32> to vector<16x24xf32>
    %323 = math.tanh %322 : vector<16x24xf32>
    %324 = vector.extract_strided_slice %309 {offsets = [0, 72], sizes = [16, 24], strides = [1, 1]} : vector<16x96xf32> to vector<16x24xf32>
    %325 = arith.negf %324 : vector<16x24xf32>
    %326 = math.exp %325 : vector<16x24xf32>
    %cst_84 = arith.constant 1.000000e+00 : f32
    %327 = vector.broadcast %cst_84 : f32 to vector<16x24xf32>
    %328 = arith.addf %327, %326 : vector<16x24xf32>
    %329 = arith.divf %327, %328 : vector<16x24xf32>
    %330 = arith.mulf %315, %323 : vector<16x24xf32>
    %331 = arith.mulf %329, %296 : vector<16x24xf32>
    %332 = arith.addf %330, %331 : vector<16x24xf32>
    %333 = math.tanh %332 : vector<16x24xf32>
    %334 = arith.mulf %321, %333 : vector<16x24xf32>
    %335 = vector.broadcast %222 : vector<16x1xf32> to vector<16x24xf32>
    %336 = arith.mulf %334, %335 : vector<16x24xf32>
    %337 = vector.broadcast %224 : vector<16x1xf32> to vector<16x24xf32>
    %338 = arith.mulf %334, %337 : vector<16x24xf32>
    %339 = tpu.concatenate %336, %338 in 1 : vector<16x24xf32>, vector<16x24xf32> -> vector<16x48xf32>
    %c3_85 = arith.constant 3 : index
    %c0_86 = arith.constant 0 : index
    %c0_87 = arith.constant 0 : index
    %340 = vector.load %arg1[%c3_85, %c0_86, %c0_87] : memref<5x16x32xf32, #tpu.memory_space<vmem>>, vector<1x16x32xf32>
    %341 = vector.shape_cast %340 : vector<1x16x32xf32> to vector<16x32xf32>
    %cst_88 = arith.constant dense<0.000000e+00> : vector<16x96xf32>
    %342 = tpu.matmul %341, %209, %cst_88 {dimension_numbers = #tpu.dot_dimension_numbers<[1], [0], [0], [1], [0, 0, 1, 1], [], []>} : vector<16x32xf32>, vector<32x96xf32>, vector<16x96xf32> -> vector<16x96xf32>
    %cst_89 = arith.constant dense<0.000000e+00> : vector<16x96xf32>
    %343 = tpu.matmul %339, %210, %cst_89 {dimension_numbers = #tpu.dot_dimension_numbers<[1], [0], [0], [1], [0, 0, 1, 1], [], []>} : vector<16x48xf32>, vector<48x96xf32>, vector<16x96xf32> -> vector<16x96xf32>
    %344 = arith.addf %342, %343 : vector<16x96xf32>
    %345 = arith.addf %344, %217 : vector<16x96xf32>
    %346 = vector.extract_strided_slice %345 {offsets = [0, 0], sizes = [16, 24], strides = [1, 1]} : vector<16x96xf32> to vector<16x24xf32>
    %347 = arith.negf %346 : vector<16x24xf32>
    %348 = math.exp %347 : vector<16x24xf32>
    %cst_90 = arith.constant 1.000000e+00 : f32
    %349 = vector.broadcast %cst_90 : f32 to vector<16x24xf32>
    %350 = arith.addf %349, %348 : vector<16x24xf32>
    %351 = arith.divf %349, %350 : vector<16x24xf32>
    %352 = vector.extract_strided_slice %345 {offsets = [0, 24], sizes = [16, 24], strides = [1, 1]} : vector<16x96xf32> to vector<16x24xf32>
    %353 = arith.negf %352 : vector<16x24xf32>
    %354 = math.exp %353 : vector<16x24xf32>
    %cst_91 = arith.constant 1.000000e+00 : f32
    %355 = vector.broadcast %cst_91 : f32 to vector<16x24xf32>
    %356 = arith.addf %355, %354 : vector<16x24xf32>
    %357 = arith.divf %355, %356 : vector<16x24xf32>
    %358 = vector.extract_strided_slice %345 {offsets = [0, 48], sizes = [16, 24], strides = [1, 1]} : vector<16x96xf32> to vector<16x24xf32>
    %359 = math.tanh %358 : vector<16x24xf32>
    %360 = vector.extract_strided_slice %345 {offsets = [0, 72], sizes = [16, 24], strides = [1, 1]} : vector<16x96xf32> to vector<16x24xf32>
    %361 = arith.negf %360 : vector<16x24xf32>
    %362 = math.exp %361 : vector<16x24xf32>
    %cst_92 = arith.constant 1.000000e+00 : f32
    %363 = vector.broadcast %cst_92 : f32 to vector<16x24xf32>
    %364 = arith.addf %363, %362 : vector<16x24xf32>
    %365 = arith.divf %363, %364 : vector<16x24xf32>
    %366 = arith.mulf %351, %359 : vector<16x24xf32>
    %367 = arith.mulf %365, %332 : vector<16x24xf32>
    %368 = arith.addf %366, %367 : vector<16x24xf32>
    %369 = math.tanh %368 : vector<16x24xf32>
    %370 = arith.mulf %357, %369 : vector<16x24xf32>
    %371 = vector.broadcast %222 : vector<16x1xf32> to vector<16x24xf32>
    %372 = arith.mulf %370, %371 : vector<16x24xf32>
    %373 = vector.broadcast %224 : vector<16x1xf32> to vector<16x24xf32>
    %374 = arith.mulf %370, %373 : vector<16x24xf32>
    %375 = tpu.concatenate %372, %374 in 1 : vector<16x24xf32>, vector<16x24xf32> -> vector<16x48xf32>
    %c4_93 = arith.constant 4 : index
    %c0_94 = arith.constant 0 : index
    %c0_95 = arith.constant 0 : index
    %376 = vector.load %arg1[%c4_93, %c0_94, %c0_95] : memref<5x16x32xf32, #tpu.memory_space<vmem>>, vector<1x16x32xf32>
    %377 = vector.shape_cast %376 : vector<1x16x32xf32> to vector<16x32xf32>
    %cst_96 = arith.constant dense<0.000000e+00> : vector<16x96xf32>
    %378 = tpu.matmul %377, %209, %cst_96 {dimension_numbers = #tpu.dot_dimension_numbers<[1], [0], [0], [1], [0, 0, 1, 1], [], []>} : vector<16x32xf32>, vector<32x96xf32>, vector<16x96xf32> -> vector<16x96xf32>
    %cst_97 = arith.constant dense<0.000000e+00> : vector<16x96xf32>
    %379 = tpu.matmul %375, %210, %cst_97 {dimension_numbers = #tpu.dot_dimension_numbers<[1], [0], [0], [1], [0, 0, 1, 1], [], []>} : vector<16x48xf32>, vector<48x96xf32>, vector<16x96xf32> -> vector<16x96xf32>
    %380 = arith.addf %378, %379 : vector<16x96xf32>
    %381 = arith.addf %380, %217 : vector<16x96xf32>
    %382 = vector.extract_strided_slice %381 {offsets = [0, 0], sizes = [16, 24], strides = [1, 1]} : vector<16x96xf32> to vector<16x24xf32>
    %383 = arith.negf %382 : vector<16x24xf32>
    %384 = math.exp %383 : vector<16x24xf32>
    %cst_98 = arith.constant 1.000000e+00 : f32
    %385 = vector.broadcast %cst_98 : f32 to vector<16x24xf32>
    %386 = arith.addf %385, %384 : vector<16x24xf32>
    %387 = arith.divf %385, %386 : vector<16x24xf32>
    %388 = vector.extract_strided_slice %381 {offsets = [0, 24], sizes = [16, 24], strides = [1, 1]} : vector<16x96xf32> to vector<16x24xf32>
    %389 = arith.negf %388 : vector<16x24xf32>
    %390 = math.exp %389 : vector<16x24xf32>
    %cst_99 = arith.constant 1.000000e+00 : f32
    %391 = vector.broadcast %cst_99 : f32 to vector<16x24xf32>
    %392 = arith.addf %391, %390 : vector<16x24xf32>
    %393 = arith.divf %391, %392 : vector<16x24xf32>
    %394 = vector.extract_strided_slice %381 {offsets = [0, 48], sizes = [16, 24], strides = [1, 1]} : vector<16x96xf32> to vector<16x24xf32>
    %395 = math.tanh %394 : vector<16x24xf32>
    %396 = vector.extract_strided_slice %381 {offsets = [0, 72], sizes = [16, 24], strides = [1, 1]} : vector<16x96xf32> to vector<16x24xf32>
    %397 = arith.negf %396 : vector<16x24xf32>
    %398 = math.exp %397 : vector<16x24xf32>
    %cst_100 = arith.constant 1.000000e+00 : f32
    %399 = vector.broadcast %cst_100 : f32 to vector<16x24xf32>
    %400 = arith.addf %399, %398 : vector<16x24xf32>
    %401 = arith.divf %399, %400 : vector<16x24xf32>
    %402 = arith.mulf %387, %395 : vector<16x24xf32>
    %403 = arith.mulf %401, %368 : vector<16x24xf32>
    %404 = arith.addf %402, %403 : vector<16x24xf32>
    %405 = math.tanh %404 : vector<16x24xf32>
    %406 = arith.mulf %393, %405 : vector<16x24xf32>
    %407 = vector.extract_strided_slice %406 {offsets = [0, 0], sizes = [8, 24], strides = [1, 1]} : vector<16x24xf32> to vector<8x24xf32>
    %408 = vector.extract_strided_slice %406 {offsets = [8, 0], sizes = [8, 24], strides = [1, 1]} : vector<16x24xf32> to vector<8x24xf32>
    %c0_101 = arith.constant 0 : index
    %c0_102 = arith.constant 0 : index
    %409 = vector.load %arg2[%c0_101, %c0_102] : memref<8x12xf32, #tpu.memory_space<vmem>>, vector<8x12xf32>
    %410 = tpu.concatenate %208, %407, %408, %409 in 1 : vector<8x24xf32>, vector<8x24xf32>, vector<8x24xf32>, vector<8x12xf32> -> vector<8x84xf32>
    %c0_103 = arith.constant 0 : index
    %c0_104 = arith.constant 0 : index
    %411 = vector.load %arg11[%c0_103, %c0_104] : memref<84x32xf32, #tpu.memory_space<vmem>>, vector<84x32xf32>
    %cst_105 = arith.constant dense<0.000000e+00> : vector<8x32xf32>
    %412 = tpu.matmul %410, %411, %cst_105 {dimension_numbers = #tpu.dot_dimension_numbers<[1], [0], [0], [1], [0, 0, 1, 1], [], []>} : vector<8x84xf32>, vector<84x32xf32>, vector<8x32xf32> -> vector<8x32xf32>
    %c0_106 = arith.constant 0 : index
    %c0_107 = arith.constant 0 : index
    %413 = vector.load %arg12[%c0_106, %c0_107] : memref<1x32xf32, #tpu.memory_space<vmem>>, vector<1x32xf32>
    %414 = vector.broadcast %413 : vector<1x32xf32> to vector<8x32xf32>
    %415 = arith.addf %412, %414 : vector<8x32xf32>
    %c0_108 = arith.constant 0 : index
    %c0_109 = arith.constant 0 : index
    %416 = vector.load %arg3[%c0_108, %c0_109] : memref<8x8xf32, #tpu.memory_space<vmem>>, vector<8x8xf32>
    %c0_110 = arith.constant 0 : index
    %c0_111 = arith.constant 0 : index
    %c0_112 = arith.constant 0 : index
    %417 = vector.load %arg13[%c0_110, %c0_111, %c0_112] : memref<2x32x32xf32, #tpu.memory_space<vmem>>, vector<1x32x32xf32>
    %418 = vector.shape_cast %417 : vector<1x32x32xf32> to vector<32x32xf32>
    %cst_113 = arith.constant dense<0.000000e+00> : vector<8x32xf32>
    %419 = tpu.matmul %415, %418, %cst_113 {dimension_numbers = #tpu.dot_dimension_numbers<[1], [0], [0], [1], [0, 0, 1, 1], [], []>} : vector<8x32xf32>, vector<32x32xf32>, vector<8x32xf32> -> vector<8x32xf32>
    %cst_114 = arith.constant dense<0.000000e+00> : vector<8x32xf32>
    %420 = tpu.matmul %416, %419, %cst_114 {dimension_numbers = #tpu.dot_dimension_numbers<[1], [0], [0], [1], [0, 0, 1, 1], [], []>} : vector<8x8xf32>, vector<8x32xf32>, vector<8x32xf32> -> vector<8x32xf32>
    %c0_115 = arith.constant 0 : index
    %c0_116 = arith.constant 0 : index
    %c0_117 = arith.constant 0 : index
    %421 = vector.load %arg14[%c0_115, %c0_116, %c0_117] : memref<2x1x32xf32, #tpu.memory_space<vmem>>, vector<1x1x32xf32>
    %422 = vector.shape_cast %421 : vector<1x1x32xf32> to vector<1x32xf32>
    %423 = vector.broadcast %422 : vector<1x32xf32> to vector<8x32xf32>
    %424 = arith.addf %420, %423 : vector<8x32xf32>
    %cst_118 = arith.constant 0.000000e+00 : f32
    %425 = vector.broadcast %cst_118 : f32 to vector<8x32xf32>
    %426 = arith.maximumf %424, %425 : vector<8x32xf32>
    %c1_119 = arith.constant 1 : index
    %c0_120 = arith.constant 0 : index
    %c0_121 = arith.constant 0 : index
    %427 = vector.load %arg13[%c1_119, %c0_120, %c0_121] : memref<2x32x32xf32, #tpu.memory_space<vmem>>, vector<1x32x32xf32>
    %428 = vector.shape_cast %427 : vector<1x32x32xf32> to vector<32x32xf32>
    %cst_122 = arith.constant dense<0.000000e+00> : vector<8x32xf32>
    %429 = tpu.matmul %426, %428, %cst_122 {dimension_numbers = #tpu.dot_dimension_numbers<[1], [0], [0], [1], [0, 0, 1, 1], [], []>} : vector<8x32xf32>, vector<32x32xf32>, vector<8x32xf32> -> vector<8x32xf32>
    %cst_123 = arith.constant dense<0.000000e+00> : vector<8x32xf32>
    %430 = tpu.matmul %416, %429, %cst_123 {dimension_numbers = #tpu.dot_dimension_numbers<[1], [0], [0], [1], [0, 0, 1, 1], [], []>} : vector<8x8xf32>, vector<8x32xf32>, vector<8x32xf32> -> vector<8x32xf32>
    %c1_124 = arith.constant 1 : index
    %c0_125 = arith.constant 0 : index
    %c0_126 = arith.constant 0 : index
    %431 = vector.load %arg14[%c1_124, %c0_125, %c0_126] : memref<2x1x32xf32, #tpu.memory_space<vmem>>, vector<1x1x32xf32>
    %432 = vector.shape_cast %431 : vector<1x1x32xf32> to vector<1x32xf32>
    %433 = vector.broadcast %432 : vector<1x32xf32> to vector<8x32xf32>
    %434 = arith.addf %430, %433 : vector<8x32xf32>
    %c0_127 = arith.constant 0 : index
    %c0_128 = arith.constant 0 : index
    %435 = vector.load %arg15[%c0_127, %c0_128] : memref<32x2xf32, #tpu.memory_space<vmem>>, vector<32x2xf32>
    %cst_129 = arith.constant dense<0.000000e+00> : vector<8x2xf32>
    %436 = tpu.matmul %434, %435, %cst_129 {dimension_numbers = #tpu.dot_dimension_numbers<[1], [0], [0], [1], [0, 0, 1, 1], [], []>} : vector<8x32xf32>, vector<32x2xf32>, vector<8x2xf32> -> vector<8x2xf32>
    %c0_130 = arith.constant 0 : index
    %c0_131 = arith.constant 0 : index
    %437 = vector.load %arg16[%c0_130, %c0_131] : memref<1x2xf32, #tpu.memory_space<vmem>>, vector<1x2xf32>
    %438 = vector.broadcast %437 : vector<1x2xf32> to vector<8x2xf32>
    %439 = arith.addf %436, %438 : vector<8x2xf32>
    %cst_132 = arith.constant dense<0xFF800000> : vector<8xf32>
    %440 = vector.multi_reduction <maximumf>, %439, %cst_132 [1] : vector<8x2xf32> to vector<8xf32>
    %441 = vector.shape_cast %440 : vector<8xf32> to vector<8x1xf32>
    %442 = vector.broadcast %441 : vector<8x1xf32> to vector<8x2xf32>
    %443 = arith.subf %439, %442 : vector<8x2xf32>
    %444 = math.exp %443 : vector<8x2xf32>
    %cst_133 = arith.constant dense<0.000000e+00> : vector<8xf32>
    %445 = vector.multi_reduction <add>, %444, %cst_133 [1] : vector<8x2xf32> to vector<8xf32>
    %446 = vector.shape_cast %445 : vector<8xf32> to vector<8x1xf32>
    %447 = vector.broadcast %446 : vector<8x1xf32> to vector<8x2xf32>
    %448 = arith.divf %444, %447 : vector<8x2xf32>
    %c0_134 = arith.constant 0 : index
    %c0_135 = arith.constant 0 : index
    %449 = vector.load %arg17[%c0_134, %c0_135] : memref<8x2xf32, #tpu.memory_space<vmem>>, vector<8x2xf32>
    tpu.vector_store %arg17[%c0_134, %c0_135], %448 {strides = array<i32>} : memref<8x2xf32, #tpu.memory_space<vmem>>, vector<8x2xf32>,
    return
  }
}

</mosaic_0001>

<llo_original>
// kernel: fix_locator_forward.1
$region0: #{fix_locator_forward.1}
  #allocation0 [shape = 'u32[]', space=smem, size = 0x4, offset = 0x4, fixed_abs, tag = 'smem constant byte address 0x4 - core index']
  #allocation1 [shape = 'u32[144,128]{1,0:T(1,128)}', space=vmem, size = 0x12000, scoped, tag = 'internal scratch']
  %s0 = inlined_call_operand.vmem [shape: f32[6,8,16], index: 0, kind: input, shape index: {}]
  %s1 = inlined_call_operand.vmem [shape: f32[5,16,32], index: 1, kind: input, shape index: {}]
  %s2 = inlined_call_operand.vmem [shape: f32[8,12], index: 2, kind: input, shape index: {}]
  %s3 = inlined_call_operand.vmem [shape: f32[8,8], index: 3, kind: input, shape index: {}]
  %s4 = inlined_call_operand.vmem [shape: f32[16,72], index: 4, kind: input, shape index: {}]
  %s5 = inlined_call_operand.vmem [shape: f32[24,72], index: 5, kind: input, shape index: {}]
  %s6 = inlined_call_operand.vmem [shape: f32[1,72], index: 6, kind: input, shape index: {}]
  %s7 = inlined_call_operand.vmem [shape: f32[1,72], index: 7, kind: input, shape index: {}]
  %s8 = inlined_call_operand.vmem [shape: f32[32,96], index: 8, kind: input, shape index: {}]
  %s9 = inlined_call_operand.vmem [shape: f32[48,96], index: 9, kind: input, shape index: {}]
  %s10 = inlined_call_operand.vmem [shape: f32[2,96], index: 10, kind: input, shape index: {}]
  %s11 = inlined_call_operand.vmem [shape: f32[84,32], index: 11, kind: input, shape index: {}]
  %s12 = inlined_call_operand.vmem [shape: f32[1,32], index: 12, kind: input, shape index: {}]
  %s13 = inlined_call_operand.vmem [shape: f32[2,32,32], index: 13, kind: input, shape index: {}]
  %s14 = inlined_call_operand.vmem [shape: f32[2,1,32], index: 14, kind: input, shape index: {}]
  %s15 = inlined_call_operand.vmem [shape: f32[32,2], index: 15, kind: input, shape index: {}]
  %s16 = inlined_call_operand.vmem [shape: f32[1,2], index: 16, kind: input, shape index: {}]
  %s17 = inlined_call_operand.vmem [shape: f32[8,2], index: 17, kind: output, shape index: {}]
  %s18 = sld [smem:[#allocation0]]
  $region78: #{fix_locator_forward.1} parent=0
    _
  %s20 = ssub.s32 1, %s18
  %s21 = scalar_select 0, %s20, %s18
  // Predicated region
  $region2: #{fix_locator_forward.1} parent=0 // pred_check
    _
  $region3: #{fix_locator_forward.1} parent=0 // pred_check_branch
    %23 = sbr.rel (0) target = $region5
  $region4: #{fix_locator_forward.1} parent=0 // pred_region
    _
  $region5: #{fix_locator_forward.1} parent=0 // pred_fallthru
    _
  // Predicated region
  $region6: #{fix_locator_forward.1} parent=0 // pred_check
    _
  $region7: #{fix_locator_forward.1} parent=0 // pred_check_branch
    %25 = sbr.rel (0) target = $region9
  $region8: #{fix_locator_forward.1} parent=0 // pred_region
    _
  $region9: #{fix_locator_forward.1} parent=0 // pred_fallthru
    _
  // Predicated region
  $region10: #{fix_locator_forward.1} parent=0 // pred_check
    _
  $region11: #{fix_locator_forward.1} parent=0 // pred_check_branch
    %27 = sbr.rel (0) target = $region13
  $region12: #{fix_locator_forward.1} parent=0 // pred_region
    _
  $region13: #{fix_locator_forward.1} parent=0 // pred_fallthru
    _
  // Predicated region
  $region14: #{fix_locator_forward.1} parent=0 // pred_check
    _
  $region15: #{fix_locator_forward.1} parent=0 // pred_check_branch
    %29 = sbr.rel (0) target = $region17
  $region16: #{fix_locator_forward.1} parent=0 // pred_region
    _
  $region17: #{fix_locator_forward.1} parent=0 // pred_fallthru
    _
  // Predicated region
  $region18: #{fix_locator_forward.1} parent=0 // pred_check
    _
  $region19: #{fix_locator_forward.1} parent=0 // pred_check_branch
    %31 = sbr.rel (0) target = $region21
  $region20: #{fix_locator_forward.1} parent=0 // pred_region
    _
  $region21: #{fix_locator_forward.1} parent=0 // pred_fallthru
    _
  // Predicated region
  $region22: #{fix_locator_forward.1} parent=0 // pred_check
    _
  $region23: #{fix_locator_forward.1} parent=0 // pred_check_branch
    %33 = sbr.rel (0) target = $region25
  $region24: #{fix_locator_forward.1} parent=0 // pred_region
    _
  $region25: #{fix_locator_forward.1} parent=0 // pred_fallthru
    _
  // Predicated region
  $region26: #{fix_locator_forward.1} parent=0 // pred_check
    _
  $region27: #{fix_locator_forward.1} parent=0 // pred_check_branch
    %35 = sbr.rel (0) target = $region29
  $region28: #{fix_locator_forward.1} parent=0 // pred_region
    _
  $region29: #{fix_locator_forward.1} parent=0 // pred_fallthru
    _
  // Predicated region
  $region30: #{fix_locator_forward.1} parent=0 // pred_check
    _
  $region31: #{fix_locator_forward.1} parent=0 // pred_check_branch
    %37 = sbr.rel (0) target = $region33
  $region32: #{fix_locator_forward.1} parent=0 // pred_region
    _
  $region33: #{fix_locator_forward.1} parent=0 // pred_fallthru
    _
  // Predicated region
  $region34: #{fix_locator_forward.1} parent=0 // pred_check
    _
  $region35: #{fix_locator_forward.1} parent=0 // pred_check_branch
    %39 = sbr.rel (0) target = $region37
  $region36: #{fix_locator_forward.1} parent=0 // pred_region
    _
  $region37: #{fix_locator_forward.1} parent=0 // pred_fallthru
    _
  // Predicated region
  $region38: #{fix_locator_forward.1} parent=0 // pred_check
    _
  $region39: #{fix_locator_forward.1} parent=0 // pred_check_branch
    %41 = sbr.rel (0) target = $region41
  $region40: #{fix_locator_forward.1} parent=0 // pred_region
    _
  $region41: #{fix_locator_forward.1} parent=0 // pred_fallthru
    _
  // Predicated region
  $region42: #{fix_locator_forward.1} parent=0 // pred_check
    _
  $region43: #{fix_locator_forward.1} parent=0 // pred_check_branch
    %43 = sbr.rel (0) target = $region45
  $region44: #{fix_locator_forward.1} parent=0 // pred_region
    _
  $region45: #{fix_locator_forward.1} parent=0 // pred_fallthru
    _
  // Predicated region
  $region46: #{fix_locator_forward.1} parent=0 // pred_check
    _
  $region47: #{fix_locator_forward.1} parent=0 // pred_check_branch
    %45 = sbr.rel (0) target = $region49
  $region48: #{fix_locator_forward.1} parent=0 // pred_region
    _
  $region49: #{fix_locator_forward.1} parent=0 // pred_fallthru
    _
  // Predicated region
  $region50: #{fix_locator_forward.1} parent=0 // pred_check
    _
  $region51: #{fix_locator_forward.1} parent=0 // pred_check_branch
    %47 = sbr.rel (0) target = $region53
  $region52: #{fix_locator_forward.1} parent=0 // pred_region
    _
  $region53: #{fix_locator_forward.1} parent=0 // pred_fallthru
    _
  // Predicated region
  $region54: #{fix_locator_forward.1} parent=0 // pred_check
    _
  $region55: #{fix_locator_forward.1} parent=0 // pred_check_branch
    %49 = sbr.rel (0) target = $region57
  $region56: #{fix_locator_forward.1} parent=0 // pred_region
    _
  $region57: #{fix_locator_forward.1} parent=0 // pred_fallthru
    _
  // Predicated region
  $region58: #{fix_locator_forward.1} parent=0 // pred_check
    _
  $region59: #{fix_locator_forward.1} parent=0 // pred_check_branch
    %51 = sbr.rel (0) target = $region61
  $region60: #{fix_locator_forward.1} parent=0 // pred_region
    _
  $region61: #{fix_locator_forward.1} parent=0 // pred_fallthru
    _
  // Predicated region
  $region62: #{fix_locator_forward.1} parent=0 // pred_check
    _
  $region63: #{fix_locator_forward.1} parent=0 // pred_check_branch
    %53 = sbr.rel (0) target = $region65
  $region64: #{fix_locator_forward.1} parent=0 // pred_region
    _
  $region65: #{fix_locator_forward.1} parent=0 // pred_fallthru
    _
  // Predicated region
  $region66: #{fix_locator_forward.1} parent=0 // pred_check
    _
  $region67: #{fix_locator_forward.1} parent=0 // pred_check_branch
    %55 = sbr.rel (0) target = $region69
  $region68: #{fix_locator_forward.1} parent=0 // pred_region
    _
  $region69: #{fix_locator_forward.1} parent=0 // pred_fallthru
    _
  %v56 = vld [vmem:[%s4] sm:$0xff]
  %v57 = vld [vmem:[%s4 + $0x8] sm:$0xff]
  %v58 = vld [vmem:[%s5] sm:$0xff]
  %v59 = vld [vmem:[%s5 + $0x8] sm:$0xff]
  %v60 = vld [vmem:[%s5 + $0x10] sm:$0xff]
  %v61 = vld [vmem:[%s6] sm:$0x1]
  %v62 = vld [vmem:[%s7] sm:$0x1]
  %v63 = vld [vmem:[%s0] sm:$0xff]
  %v65 = vlaneseq
  %v66 = vshrl.u32 %v65, 7
  %v67 = vsub.s32 0, %v66
  %v68 = vrot.slane %v61, %v67
  %vm70 = vcmask 130048
  %v72 = vsel %vm70, %v63, 0
  %74 = vmatprep.subr.mxu0 0.0
  %75 = vmatpush1.msra.mxu0 %v56
  %76 = vmatprep.subr.mxu0 0.0
  %77 = vmatpush1.msra.mxu0 %v57
  %78 = vmatprep.subr.mxu0 0.0
  %79 = vmatpush1.msra.mxu0 0.0
  %80 = vmatprep.subr.mxu0 0.0
  %81 = vmatpush1.msra.mxu0 0.0
  %82 = vmatprep.subr.mxu0 0.0
  %83 = vmatpush1.msra.mxu0 0.0
  %84 = vmatprep.subr.mxu0 0.0
  %85 = vmatpush1.msra.mxu0 0.0
  %86 = vmatprep.subr.mxu0 0.0
  %87 = vmatpush1.msra.mxu0 0.0
  %88 = vmatprep.subr.mxu0 0.0
  %89 = vmatpush1.msra.mxu0 0.0
  %90 = vmatprep.subr.mxu0 0.0
  %91 = vmatpush1.msra.mxu0 0.0
  %92 = vmatprep.subr.mxu0 0.0
  %93 = vmatpush1.msra.mxu0 0.0
  %94 = vmatprep.subr.mxu0 0.0
  %95 = vmatpush1.msra.mxu0 0.0
  %96 = vmatprep.subr.mxu0 0.0
  %97 = vmatpush1.msra.mxu0 0.0
  %98 = vmatprep.subr.mxu0 0.0
  %99 = vmatpush1.msra.mxu0 0.0
  %100 = vmatprep.subr.mxu0 0.0
  %101 = vmatpush1.msra.mxu0 0.0
  %102 = vmatprep.subr.mxu0 0.0
  %103 = vmatpush1.msra.mxu0 0.0
  %104 = vmatprep.subr.mxu0 0.0
  %105 = vmatpush1.msra.mxu0 0.0
  %106 = vmatprep.subr.mxu0 0.0
  %107 = vmatpush1.msra.mxu0 0.0
  %108 = vmatprep.subr.mxu0 0.0
  %109 = vmatpush1.msra.mxu0 0.0
  %110 = vmatprep.subr.mxu0 0.0
  %111 = vmatpush1.msra.mxu0 0.0
  %112 = vmatprep.subr.mxu0 0.0
  %113 = vmatpush1.msra.mxu0 0.0
  %114 = vmatprep.subr.mxu0 0.0
  %115 = vmatpush1.msra.mxu0 0.0
  %116 = vmatprep.subr.mxu0 0.0
  %117 = vmatpush1.msra.mxu0 0.0
  %118 = vmatprep.subr.mxu0 0.0
  %119 = vmatpush1.msra.mxu0 0.0
  %120 = vmatprep.subr.mxu0 0.0
  %121 = vmatpush1.msra.mxu0 0.0
  %122 = vmatprep.subr.mxu0 0.0
  %123 = vmatpush1.msra.mxu0 0.0
  %124 = vmatprep.subr.mxu0 0.0
  %125 = vmatpush1.msra.mxu0 0.0
  %126 = vmatprep.subr.mxu0 0.0
  %127 = vmatpush1.msra.mxu0 0.0
  %128 = vmatprep.subr.mxu0 0.0
  %129 = vmatpush1.msra.mxu0 0.0
  %130 = vmatprep.subr.mxu0 0.0
  %131 = vmatpush1.msra.mxu0 0.0
  %132 = vmatprep.subr.mxu0 0.0
  %133 = vmatpush1.msra.mxu0 0.0
  %134 = vmatprep.subr.mxu0 0.0
  %135 = vmatpush1.msra.mxu0 0.0
  %136 = vmatprep.subr.mxu0 0.0
  %137 = vmatpush1.msra.mxu0 0.0
  %138 = vmatprep.mubr.f32.mxu0 0.0
  %139 = vmatmul.mubr.f32.gmra.mrb[0].mxu0 %v72
  %v140 = vpop.f32.mrb[0].mxu0
  %v141 = vadd.f32 %v68, %v140
  %v142 = vpop.f32.mrb[0].mxu0
  %143 = vdwg.mxu0
  %v145 = vlaneseq
  %v146 = vshrl.u32 %v145, 7
  %v147 = vsub.s32 0, %v146
  %v148 = vrot.slane %v62, %v147
  %vm150 = vcmask 195584
  %v152 = vsel %vm150, 0.0, 0
  %154 = vmatprep.subr.mxu0 0.0
  %155 = vmatpush1.msra.mxu0 %v58
  %156 = vmatprep.subr.mxu0 0.0
  %157 = vmatpush1.msra.mxu0 %v59
  %158 = vmatprep.subr.mxu0 0.0
  %159 = vmatpush1.msra.mxu0 %v60
  %160 = vmatprep.subr.mxu0 0.0
  %161 = vmatpush1.msra.mxu0 0.0
  %162 = vmatprep.subr.mxu0 0.0
  %163 = vmatpush1.msra.mxu0 0.0
  %164 = vmatprep.subr.mxu0 0.0
  %165 = vmatpush1.msra.mxu0 0.0
  %166 = vmatprep.subr.mxu0 0.0
  %167 = vmatpush1.msra.mxu0 0.0
  %168 = vmatprep.subr.mxu0 0.0
  %169 = vmatpush1.msra.mxu0 0.0
  %170 = vmatprep.subr.mxu0 0.0
  %171 = vmatpush1.msra.mxu0 0.0
  %172 = vmatprep.subr.mxu0 0.0
  %173 = vmatpush1.msra.mxu0 0.0
  %174 = vmatprep.subr.mxu0 0.0
  %175 = vmatpush1.msra.mxu0 0.0
  %176 = vmatprep.subr.mxu0 0.0
  %177 = vmatpush1.msra.mxu0 0.0
  %178 = vmatprep.subr.mxu0 0.0
  %179 = vmatpush1.msra.mxu0 0.0
  %180 = vmatprep.subr.mxu0 0.0
  %181 = vmatpush1.msra.mxu0 0.0
  %182 = vmatprep.subr.mxu0 0.0
  %183 = vmatpush1.msra.mxu0 0.0
  %184 = vmatprep.subr.mxu0 0.0
  %185 = vmatpush1.msra.mxu0 0.0
  %186 = vmatprep.subr.mxu0 0.0
  %187 = vmatpush1.msra.mxu0 0.0
  %188 = vmatprep.subr.mxu0 0.0
  %189 = vmatpush1.msra.mxu0 0.0
  %190 = vmatprep.subr.mxu0 0.0
  %191 = vmatpush1.msra.mxu0 0.0
  %192 = vmatprep.subr.mxu0 0.0
  %193 = vmatpush1.msra.mxu0 0.0
  %194 = vmatprep.subr.mxu0 0.0
  %195 = vmatpush1.msra.mxu0 0.0
  %196 = vmatprep.subr.mxu0 0.0
  %197 = vmatpush1.msra.mxu0 0.0
  %198 = vmatprep.subr.mxu0 0.0
  %199 = vmatpush1.msra.mxu0 0.0
  %200 = vmatprep.subr.mxu0 0.0
  %201 = vmatpush1.msra.mxu0 0.0
  %202 = vmatprep.subr.mxu0 0.0
  %203 = vmatpush1.msra.mxu0 0.0
  %204 = vmatprep.subr.mxu0 0.0
  %205 = vmatpush1.msra.mxu0 0.0
  %206 = vmatprep.subr.mxu0 0.0
  %207 = vmatpush1.msra.mxu0 0.0
  %208 = vmatprep.subr.mxu0 0.0
  %209 = vmatpush1.msra.mxu0 0.0
  %210 = vmatprep.subr.mxu0 0.0
  %211 = vmatpush1.msra.mxu0 0.0
  %212 = vmatprep.subr.mxu0 0.0
  %213 = vmatpush1.msra.mxu0 0.0
  %214 = vmatprep.subr.mxu0 0.0
  %215 = vmatpush1.msra.mxu0 0.0
  %216 = vmatprep.subr.mxu0 0.0
  %217 = vmatpush1.msra.mxu0 0.0
  %218 = vmatprep.mubr.f32.mxu0 0.0
  %219 = vmatmul.mubr.f32.gmra.mrb[0].mxu0 %v152
  %v220 = vpop.f32.mrb[0].mxu0
  %v221 = vadd.f32 %v148, %v220
  %v222 = vpop.f32.mrb[0].mxu0
  %223 = vdwg.mxu0
  %v224 = vadd.f32 %v141, %v221
  %v225 = vxor.u32 %v224, 2147483648
  %v226 = vmul.f32 %v225, 1.442695
  %v227 = vpow.pop %v226
  %v228 = vadd.f32 %v227, 1.0
  %v229 = vrcp.pop %v228
  %v230 = vmul.f32 1.0, %v229
  %232 = vrot.lane.b32.xlu0 %v221, 80
  %v233 = vpop.permute.xlu0 %232
  %v235 = vmul.f32 %v230, %v233
  %237 = vrot.lane.b32.xlu0 %v235, 48
  %v238 = vpop.permute.xlu0 %237
  %v240 = vadd.f32 %v141, %v238
  %v241 = vtanh.pop %v240
  %v242 = vsub.f32 1.0, %v230
  %244 = vrot.lane.b32.xlu0 %v241, 104
  %v245 = vpop.permute.xlu0 %244
  %v247 = vmul.f32 %v242, %v245
  %v248 = vmul.f32 %v230, 0.0
  %v249 = vadd.f32 %v247, %v248
  %s250 = scalar_lea.vmem %s0, 8
  %v251 = vld [vmem:[%s250] sm:$0xff]
  %v253 = vsel %vm70, %v251, 0
  %255 = vmatprep.subr.mxu0 0.0
  %256 = vmatpush1.msra.mxu0 %v56
  %257 = vmatprep.subr.mxu0 0.0
  %258 = vmatpush1.msra.mxu0 %v57
  %259 = vmatprep.subr.mxu0 0.0
  %260 = vmatpush1.msra.mxu0 0.0
  %261 = vmatprep.subr.mxu0 0.0
  %262 = vmatpush1.msra.mxu0 0.0
  %263 = vmatprep.subr.mxu0 0.0
  %264 = vmatpush1.msra.mxu0 0.0
  %265 = vmatprep.subr.mxu0 0.0
  %266 = vmatpush1.msra.mxu0 0.0
  %267 = vmatprep.subr.mxu0 0.0
  %268 = vmatpush1.msra.mxu0 0.0
  %269 = vmatprep.subr.mxu0 0.0
  %270 = vmatpush1.msra.mxu0 0.0
  %271 = vmatprep.subr.mxu0 0.0
  %272 = vmatpush1.msra.mxu0 0.0
  %273 = vmatprep.subr.mxu0 0.0
  %274 = vmatpush1.msra.mxu0 0.0
  %275 = vmatprep.subr.mxu0 0.0
  %276 = vmatpush1.msra.mxu0 0.0
  %277 = vmatprep.subr.mxu0 0.0
  %278 = vmatpush1.msra.mxu0 0.0
  %279 = vmatprep.subr.mxu0 0.0
  %280 = vmatpush1.msra.mxu0 0.0
  %281 = vmatprep.subr.mxu0 0.0
  %282 = vmatpush1.msra.mxu0 0.0
  %283 = vmatprep.subr.mxu0 0.0
  %284 = vmatpush1.msra.mxu0 0.0
  %285 = vmatprep.subr.mxu0 0.0
  %286 = vmatpush1.msra.mxu0 0.0
  %287 = vmatprep.subr.mxu0 0.0
  %288 = vmatpush1.msra.mxu0 0.0
  %289 = vmatprep.subr.mxu0 0.0
  %290 = vmatpush1.msra.mxu0 0.0
  %291 = vmatprep.subr.mxu0 0.0
  %292 = vmatpush1.msra.mxu0 0.0
  %293 = vmatprep.subr.mxu0 0.0
  %294 = vmatpush1.msra.mxu0 0.0
  %295 = vmatprep.subr.mxu0 0.0
  %296 = vmatpush1.msra.mxu0 0.0
  %297 = vmatprep.subr.mxu0 0.0
  %298 = vmatpush1.msra.mxu0 0.0
  %299 = vmatprep.subr.mxu0 0.0
  %300 = vmatpush1.msra.mxu0 0.0
  %301 = vmatprep.subr.mxu0 0.0
  %302 = vmatpush1.msra.mxu0 0.0
  %303 = vmatprep.subr.mxu0 0.0
  %304 = vmatpush1.msra.mxu0 0.0
  %305 = vmatprep.subr.mxu0 0.0
  %306 = vmatpush1.msra.mxu0 0.0
  %307 = vmatprep.subr.mxu0 0.0
  %308 = vmatpush1.msra.mxu0 0.0
  %309 = vmatprep.subr.mxu0 0.0
  %310 = vmatpush1.msra.mxu0 0.0
  %311 = vmatprep.subr.mxu0 0.0
  %312 = vmatpush1.msra.mxu0 0.0
  %313 = vmatprep.subr.mxu0 0.0
  %314 = vmatpush1.msra.mxu0 0.0
  %315 = vmatprep.subr.mxu0 0.0
  %316 = vmatpush1.msra.mxu0 0.0
  %317 = vmatprep.subr.mxu0 0.0
  %318 = vmatpush1.msra.mxu0 0.0
  %319 = vmatprep.mubr.f32.mxu0 0.0
  %320 = vmatmul.mubr.f32.gmra.mrb[0].mxu0 %v253
  %v321 = vpop.f32.mrb[0].mxu0
  %v322 = vadd.f32 %v68, %v321
  %v323 = vpop.f32.mrb[0].mxu0
  %324 = vdwg.mxu0
  %326 = vrot.lane.b32.xlu0 %v249, 104
  %v327 = vpop.permute.xlu0 %326
  %v328 = vsel %vm150, %v327, 0
  %330 = vmatprep.subr.mxu0 0.0
  %331 = vmatpush1.msra.mxu0 %v58
  %332 = vmatprep.subr.mxu0 0.0
  %333 = vmatpush1.msra.mxu0 %v59
  %334 = vmatprep.subr.mxu0 0.0
  %335 = vmatpush1.msra.mxu0 %v60
  %336 = vmatprep.subr.mxu0 0.0
  %337 = vmatpush1.msra.mxu0 0.0
  %338 = vmatprep.subr.mxu0 0.0
  %339 = vmatpush1.msra.mxu0 0.0
  %340 = vmatprep.subr.mxu0 0.0
  %341 = vmatpush1.msra.mxu0 0.0
  %342 = vmatprep.subr.mxu0 0.0
  %343 = vmatpush1.msra.mxu0 0.0
  %344 = vmatprep.subr.mxu0 0.0
  %345 = vmatpush1.msra.mxu0 0.0
  %346 = vmatprep.subr.mxu0 0.0
  %347 = vmatpush1.msra.mxu0 0.0
  %348 = vmatprep.subr.mxu0 0.0
  %349 = vmatpush1.msra.mxu0 0.0
  %350 = vmatprep.subr.mxu0 0.0
  %351 = vmatpush1.msra.mxu0 0.0
  %352 = vmatprep.subr.mxu0 0.0
  %353 = vmatpush1.msra.mxu0 0.0
  %354 = vmatprep.subr.mxu0 0.0
  %355 = vmatpush1.msra.mxu0 0.0
  %356 = vmatprep.subr.mxu0 0.0
  %357 = vmatpush1.msra.mxu0 0.0
  %358 = vmatprep.subr.mxu0 0.0
  %359 = vmatpush1.msra.mxu0 0.0
  %360 = vmatprep.subr.mxu0 0.0
  %361 = vmatpush1.msra.mxu0 0.0
  %362 = vmatprep.subr.mxu0 0.0
  %363 = vmatpush1.msra.mxu0 0.0
  %364 = vmatprep.subr.mxu0 0.0
  %365 = vmatpush1.msra.mxu0 0.0
  %366 = vmatprep.subr.mxu0 0.0
  %367 = vmatpush1.msra.mxu0 0.0
  %368 = vmatprep.subr.mxu0 0.0
  %369 = vmatpush1.msra.mxu0 0.0
  %370 = vmatprep.subr.mxu0 0.0
  %371 = vmatpush1.msra.mxu0 0.0
  %372 = vmatprep.subr.mxu0 0.0
  %373 = vmatpush1.msra.mxu0 0.0
  %374 = vmatprep.subr.mxu0 0.0
  %375 = vmatpush1.msra.mxu0 0.0
  %376 = vmatprep.subr.mxu0 0.0
  %377 = vmatpush1.msra.mxu0 0.0
  %378 = vmatprep.subr.mxu0 0.0
  %379 = vmatpush1.msra.mxu0 0.0
  %380 = vmatprep.subr.mxu0 0.0
  %381 = vmatpush1.msra.mxu0 0.0
  %382 = vmatprep.subr.mxu0 0.0
  %383 = vmatpush1.msra.mxu0 0.0
  %384 = vmatprep.subr.mxu0 0.0
  %385 = vmatpush1.msra.mxu0 0.0
  %386 = vmatprep.subr.mxu0 0.0
  %387 = vmatpush1.msra.mxu0 0.0
  %388 = vmatprep.subr.mxu0 0.0
  %389 = vmatpush1.msra.mxu0 0.0
  %390 = vmatprep.subr.mxu0 0.0
  %391 = vmatpush1.msra.mxu0 0.0
  %392 = vmatprep.subr.mxu0 0.0
  %393 = vmatpush1.msra.mxu0 0.0
  %394 = vmatprep.mubr.f32.mxu0 0.0
  %395 = vmatmul.mubr.f32.gmra.mrb[0].mxu0 %v328
  %v396 = vpop.f32.mrb[0].mxu0
  %v397 = vadd.f32 %v148, %v396
  %v398 = vpop.f32.mrb[0].mxu0
  %399 = vdwg.mxu0
  %v400 = vadd.f32 %v322, %v397
  %v401 = vxor.u32 %v400, 2147483648
  %v402 = vmul.f32 %v401, 1.442695
  %v403 = vpow.pop %v402
  %v404 = vadd.f32 %v403, 1.0
  %v405 = vrcp.pop %v404
  %v406 = vmul.f32 1.0, %v405
  %408 = vrot.lane.b32.xlu0 %v397, 80
  %v409 = vpop.permute.xlu0 %408
  %v411 = vmul.f32 %v406, %v409
  %413 = vrot.lane.b32.xlu0 %v411, 48
  %v414 = vpop.permute.xlu0 %413
  %v416 = vadd.f32 %v322, %v414
  %v417 = vtanh.pop %v416
  %v418 = vsub.f32 1.0, %v406
  %420 = vrot.lane.b32.xlu0 %v417, 104
  %v421 = vpop.permute.xlu0 %420
  %v423 = vmul.f32 %v418, %v421
  %v424 = vmul.f32 %v406, %v249
  %v425 = vadd.f32 %v423, %v424
  %s426 = scalar_lea.vmem %s0, 16
  %v427 = vld [vmem:[%s426] sm:$0xff]
  %v429 = vsel %vm70, %v427, 0
  %431 = vmatprep.subr.mxu0 0.0
  %432 = vmatpush1.msra.mxu0 %v56
  %433 = vmatprep.subr.mxu0 0.0
  %434 = vmatpush1.msra.mxu0 %v57
  %435 = vmatprep.subr.mxu0 0.0
  %436 = vmatpush1.msra.mxu0 0.0
  %437 = vmatprep.subr.mxu0 0.0
  %438 = vmatpush1.msra.mxu0 0.0
  %439 = vmatprep.subr.mxu0 0.0
  %440 = vmatpush1.msra.mxu0 0.0
  %441 = vmatprep.subr.mxu0 0.0
  %442 = vmatpush1.msra.mxu0 0.0
  %443 = vmatprep.subr.mxu0 0.0
  %444 = vmatpush1.msra.mxu0 0.0
  %445 = vmatprep.subr.mxu0 0.0
  %446 = vmatpush1.msra.mxu0 0.0
  %447 = vmatprep.subr.mxu0 0.0
  %448 = vmatpush1.msra.mxu0 0.0
  %449 = vmatprep.subr.mxu0 0.0
  %450 = vmatpush1.msra.mxu0 0.0
  %451 = vmatprep.subr.mxu0 0.0
  %452 = vmatpush1.msra.mxu0 0.0
  %453 = vmatprep.subr.mxu0 0.0
  %454 = vmatpush1.msra.mxu0 0.0
  %455 = vmatprep.subr.mxu0 0.0
  %456 = vmatpush1.msra.mxu0 0.0
  %457 = vmatprep.subr.mxu0 0.0
  %458 = vmatpush1.msra.mxu0 0.0
  %459 = vmatprep.subr.mxu0 0.0
  %460 = vmatpush1.msra.mxu0 0.0
  %461 = vmatprep.subr.mxu0 0.0
  %462 = vmatpush1.msra.mxu0 0.0
  %463 = vmatprep.subr.mxu0 0.0
  %464 = vmatpush1.msra.mxu0 0.0
  %465 = vmatprep.subr.mxu0 0.0
  %466 = vmatpush1.msra.mxu0 0.0
  %467 = vmatprep.subr.mxu0 0.0
  %468 = vmatpush1.msra.mxu0 0.0
  %469 = vmatprep.subr.mxu0 0.0
  %470 = vmatpush1.msra.mxu0 0.0
  %471 = vmatprep.subr.mxu0 0.0
  %472 = vmatpush1.msra.mxu0 0.0
  %473 = vmatprep.subr.mxu0 0.0
  %474 = vmatpush1.msra.mxu0 0.0
  %475 = vmatprep.subr.mxu0 0.0
  %476 = vmatpush1.msra.mxu0 0.0
  %477 = vmatprep.subr.mxu0 0.0
  %478 = vmatpush1.msra.mxu0 0.0
  %479 = vmatprep.subr.mxu0 0.0
  %480 = vmatpush1.msra.mxu0 0.0
  %481 = vmatprep.subr.mxu0 0.0
  %482 = vmatpush1.msra.mxu0 0.0
  %483 = vmatprep.subr.mxu0 0.0
  %484 = vmatpush1.msra.mxu0 0.0
  %485 = vmatprep.subr.mxu0 0.0
  %486 = vmatpush1.msra.mxu0 0.0
  %487 = vmatprep.subr.mxu0 0.0
  %488 = vmatpush1.msra.mxu0 0.0
  %489 = vmatprep.subr.mxu0 0.0
  %490 = vmatpush1.msra.mxu0 0.0
  %491 = vmatprep.subr.mxu0 0.0
  %492 = vmatpush1.msra.mxu0 0.0
  %493 = vmatprep.subr.mxu0 0.0
  %494 = vmatpush1.msra.mxu0 0.0
  %495 = vmatprep.mubr.f32.mxu0 0.0
  %496 = vmatmul.mubr.f32.gmra.mrb[0].mxu0 %v429
  %v497 = vpop.f32.mrb[0].mxu0
  %v498 = vadd.f32 %v68, %v497
  %v499 = vpop.f32.mrb[0].mxu0
  %500 = vdwg.mxu0
  %502 = vrot.lane.b32.xlu0 %v425, 104
  %v503 = vpop.permute.xlu0 %502
  %v504 = vsel %vm150, %v503, 0
  %506 = vmatprep.subr.mxu0 0.0
  %507 = vmatpush1.msra.mxu0 %v58
  %508 = vmatprep.subr.mxu0 0.0
  %509 = vmatpush1.msra.mxu0 %v59
  %510 = vmatprep.subr.mxu0 0.0
  %511 = vmatpush1.msra.mxu0 %v60
  %512 = vmatprep.subr.mxu0 0.0
  %513 = vmatpush1.msra.mxu0 0.0
  %514 = vmatprep.subr.mxu0 0.0
  %515 = vmatpush1.msra.mxu0 0.0
  %516 = vmatprep.subr.mxu0 0.0
  %517 = vmatpush1.msra.mxu0 0.0
  %518 = vmatprep.subr.mxu0 0.0
  %519 = vmatpush1.msra.mxu0 0.0
  %520 = vmatprep.subr.mxu0 0.0
  %521 = vmatpush1.msra.mxu0 0.0
  %522 = vmatprep.subr.mxu0 0.0
  %523 = vmatpush1.msra.mxu0 0.0
  %524 = vmatprep.subr.mxu0 0.0
  %525 = vmatpush1.msra.mxu0 0.0
  %526 = vmatprep.subr.mxu0 0.0
  %527 = vmatpush1.msra.mxu0 0.0
  %528 = vmatprep.subr.mxu0 0.0
  %529 = vmatpush1.msra.mxu0 0.0
  %530 = vmatprep.subr.mxu0 0.0
  %531 = vmatpush1.msra.mxu0 0.0
  %532 = vmatprep.subr.mxu0 0.0
  %533 = vmatpush1.msra.mxu0 0.0
  %534 = vmatprep.subr.mxu0 0.0
  %535 = vmatpush1.msra.mxu0 0.0
  %536 = vmatprep.subr.mxu0 0.0
  %537 = vmatpush1.msra.mxu0 0.0
  %538 = vmatprep.subr.mxu0 0.0
  %539 = vmatpush1.msra.mxu0 0.0
  %540 = vmatprep.subr.mxu0 0.0
  %541 = vmatpush1.msra.mxu0 0.0
  %542 = vmatprep.subr.mxu0 0.0
  %543 = vmatpush1.msra.mxu0 0.0
  %544 = vmatprep.subr.mxu0 0.0
  %545 = vmatpush1.msra.mxu0 0.0
  %546 = vmatprep.subr.mxu0 0.0
  %547 = vmatpush1.msra.mxu0 0.0
  %548 = vmatprep.subr.mxu0 0.0
  %549 = vmatpush1.msra.mxu0 0.0
  %550 = vmatprep.subr.mxu0 0.0
  %551 = vmatpush1.msra.mxu0 0.0
  %552 = vmatprep.subr.mxu0 0.0
  %553 = vmatpush1.msra.mxu0 0.0
  %554 = vmatprep.subr.mxu0 0.0
  %555 = vmatpush1.msra.mxu0 0.0
  %556 = vmatprep.subr.mxu0 0.0
  %557 = vmatpush1.msra.mxu0 0.0
  %558 = vmatprep.subr.mxu0 0.0
  %559 = vmatpush1.msra.mxu0 0.0
  %560 = vmatprep.subr.mxu0 0.0
  %561 = vmatpush1.msra.mxu0 0.0
  %562 = vmatprep.subr.mxu0 0.0
  %563 = vmatpush1.msra.mxu0 0.0
  %564 = vmatprep.subr.mxu0 0.0
  %565 = vmatpush1.msra.mxu0 0.0
  %566 = vmatprep.subr.mxu0 0.0
  %567 = vmatpush1.msra.mxu0 0.0
  %568 = vmatprep.subr.mxu0 0.0
  %569 = vmatpush1.msra.mxu0 0.0
  %570 = vmatprep.mubr.f32.mxu0 0.0
  %571 = vmatmul.mubr.f32.gmra.mrb[0].mxu0 %v504
  %v572 = vpop.f32.mrb[0].mxu0
  %v573 = vadd.f32 %v148, %v572
  %v574 = vpop.f32.mrb[0].mxu0
  %575 = vdwg.mxu0
  %v576 = vadd.f32 %v498, %v573
  %v577 = vxor.u32 %v576, 2147483648
  %v578 = vmul.f32 %v577, 1.442695
  %v579 = vpow.pop %v578
  %v580 = vadd.f32 %v579, 1.0
  %v581 = vrcp.pop %v580
  %v582 = vmul.f32 1.0, %v581
  %584 = vrot.lane.b32.xlu0 %v573, 80
  %v585 = vpop.permute.xlu0 %584
  %v587 = vmul.f32 %v582, %v585
  %589 = vrot.lane.b32.xlu0 %v587, 48
  %v590 = vpop.permute.xlu0 %589
  %v592 = vadd.f32 %v498, %v590
  %v593 = vtanh.pop %v592
  %v594 = vsub.f32 1.0, %v582
  %596 = vrot.lane.b32.xlu0 %v593, 104
  %v597 = vpop.permute.xlu0 %596
  %v599 = vmul.f32 %v594, %v597
  %v600 = vmul.f32 %v582, %v425
  %v601 = vadd.f32 %v599, %v600
  %s602 = scalar_lea.vmem %s0, 24
  %v603 = vld [vmem:[%s602] sm:$0xff]
  %v605 = vsel %vm70, %v603, 0
  %607 = vmatprep.subr.mxu0 0.0
  %608 = vmatpush1.msra.mxu0 %v56
  %609 = vmatprep.subr.mxu0 0.0
  %610 = vmatpush1.msra.mxu0 %v57
  %611 = vmatprep.subr.mxu0 0.0
  %612 = vmatpush1.msra.mxu0 0.0
  %613 = vmatprep.subr.mxu0 0.0
  %614 = vmatpush1.msra.mxu0 0.0
  %615 = vmatprep.subr.mxu0 0.0
  %616 = vmatpush1.msra.mxu0 0.0
  %617 = vmatprep.subr.mxu0 0.0
  %618 = vmatpush1.msra.mxu0 0.0
  %619 = vmatprep.subr.mxu0 0.0
  %620 = vmatpush1.msra.mxu0 0.0
  %621 = vmatprep.subr.mxu0 0.0
  %622 = vmatpush1.msra.mxu0 0.0
  %623 = vmatprep.subr.mxu0 0.0
  %624 = vmatpush1.msra.mxu0 0.0
  %625 = vmatprep.subr.mxu0 0.0
  %626 = vmatpush1.msra.mxu0 0.0
  %627 = vmatprep.subr.mxu0 0.0
  %628 = vmatpush1.msra.mxu0 0.0
  %629 = vmatprep.subr.mxu0 0.0
  %630 = vmatpush1.msra.mxu0 0.0
  %631 = vmatprep.subr.mxu0 0.0
  %632 = vmatpush1.msra.mxu0 0.0
  %633 = vmatprep.subr.mxu0 0.0
  %634 = vmatpush1.msra.mxu0 0.0
  %635 = vmatprep.subr.mxu0 0.0
  %636 = vmatpush1.msra.mxu0 0.0
  %637 = vmatprep.subr.mxu0 0.0
  %638 = vmatpush1.msra.mxu0 0.0
  %639 = vmatprep.subr.mxu0 0.0
  %640 = vmatpush1.msra.mxu0 0.0
  %641 = vmatprep.subr.mxu0 0.0
  %642 = vmatpush1.msra.mxu0 0.0
  %643 = vmatprep.subr.mxu0 0.0
  %644 = vmatpush1.msra.mxu0 0.0
  %645 = vmatprep.subr.mxu0 0.0
  %646 = vmatpush1.msra.mxu0 0.0
  %647 = vmatprep.subr.mxu0 0.0
  %648 = vmatpush1.msra.mxu0 0.0
  %649 = vmatprep.subr.mxu0 0.0
  %650 = vmatpush1.msra.mxu0 0.0
  %651 = vmatprep.subr.mxu0 0.0
  %652 = vmatpush1.msra.mxu0 0.0
  %653 = vmatprep.subr.mxu0 0.0
  %654 = vmatpush1.msra.mxu0 0.0
  %655 = vmatprep.subr.mxu0 0.0
  %656 = vmatpush1.msra.mxu0 0.0
  %657 = vmatprep.subr.mxu0 0.0
  %658 = vmatpush1.msra.mxu0 0.0
  %659 = vmatprep.subr.mxu0 0.0
  %660 = vmatpush1.msra.mxu0 0.0
  %661 = vmatprep.subr.mxu0 0.0
  %662 = vmatpush1.msra.mxu0 0.0
  %663 = vmatprep.subr.mxu0 0.0
  %664 = vmatpush1.msra.mxu0 0.0
  %665 = vmatprep.subr.mxu0 0.0
  %666 = vmatpush1.msra.mxu0 0.0
  %667 = vmatprep.subr.mxu0 0.0
  %668 = vmatpush1.msra.mxu0 0.0
  %669 = vmatprep.subr.mxu0 0.0
  %670 = vmatpush1.msra.mxu0 0.0
  %671 = vmatprep.mubr.f32.mxu0 0.0
  %672 = vmatmul.mubr.f32.gmra.mrb[0].mxu0 %v605
  %v673 = vpop.f32.mrb[0].mxu0
  %v674 = vadd.f32 %v68, %v673
  %v675 = vpop.f32.mrb[0].mxu0
  %676 = vdwg.mxu0
  %678 = vrot.lane.b32.xlu0 %v601, 104
  %v679 = vpop.permute.xlu0 %678
  %v680 = vsel %vm150, %v679, 0
  %682 = vmatprep.subr.mxu0 0.0
  %683 = vmatpush1.msra.mxu0 %v58
  %684 = vmatprep.subr.mxu0 0.0
  %685 = vmatpush1.msra.mxu0 %v59
  %686 = vmatprep.subr.mxu0 0.0
  %687 = vmatpush1.msra.mxu0 %v60
  %688 = vmatprep.subr.mxu0 0.0
  %689 = vmatpush1.msra.mxu0 0.0
  %690 = vmatprep.subr.mxu0 0.0
  %691 = vmatpush1.msra.mxu0 0.0
  %692 = vmatprep.subr.mxu0 0.0
  %693 = vmatpush1.msra.mxu0 0.0
  %694 = vmatprep.subr.mxu0 0.0
  %695 = vmatpush1.msra.mxu0 0.0
  %696 = vmatprep.subr.mxu0 0.0
  %697 = vmatpush1.msra.mxu0 0.0
  %698 = vmatprep.subr.mxu0 0.0
  %699 = vmatpush1.msra.mxu0 0.0
  %700 = vmatprep.subr.mxu0 0.0
  %701 = vmatpush1.msra.mxu0 0.0
  %702 = vmatprep.subr.mxu0 0.0
  %703 = vmatpush1.msra.mxu0 0.0
  %704 = vmatprep.subr.mxu0 0.0
  %705 = vmatpush1.msra.mxu0 0.0
  %706 = vmatprep.subr.mxu0 0.0
  %707 = vmatpush1.msra.mxu0 0.0
  %708 = vmatprep.subr.mxu0 0.0
  %709 = vmatpush1.msra.mxu0 0.0
  %710 = vmatprep.subr.mxu0 0.0
  %711 = vmatpush1.msra.mxu0 0.0
  %712 = vmatprep.subr.mxu0 0.0
  %713 = vmatpush1.msra.mxu0 0.0
  %714 = vmatprep.subr.mxu0 0.0
  %715 = vmatpush1.msra.mxu0 0.0
  %716 = vmatprep.subr.mxu0 0.0
  %717 = vmatpush1.msra.mxu0 0.0
  %718 = vmatprep.subr.mxu0 0.0
  %719 = vmatpush1.msra.mxu0 0.0
  %720 = vmatprep.subr.mxu0 0.0
  %721 = vmatpush1.msra.mxu0 0.0
  %722 = vmatprep.subr.mxu0 0.0
  %723 = vmatpush1.msra.mxu0 0.0
  %724 = vmatprep.subr.mxu0 0.0
  %725 = vmatpush1.msra.mxu0 0.0
  %726 = vmatprep.subr.mxu0 0.0
  %727 = vmatpush1.msra.mxu0 0.0
  %728 = vmatprep.subr.mxu0 0.0
  %729 = vmatpush1.msra.mxu0 0.0
  %730 = vmatprep.subr.mxu0 0.0
  %731 = vmatpush1.msra.mxu0 0.0
  %732 = vmatprep.subr.mxu0 0.0
  %733 = vmatpush1.msra.mxu0 0.0
  %734 = vmatprep.subr.mxu0 0.0
  %735 = vmatpush1.msra.mxu0 0.0
  %736 = vmatprep.subr.mxu0 0.0
  %737 = vmatpush1.msra.mxu0 0.0
  %738 = vmatprep.subr.mxu0 0.0
  %739 = vmatpush1.msra.mxu0 0.0
  %740 = vmatprep.subr.mxu0 0.0
  %741 = vmatpush1.msra.mxu0 0.0
  %742 = vmatprep.subr.mxu0 0.0
  %743 = vmatpush1.msra.mxu0 0.0
  %744 = vmatprep.subr.mxu0 0.0
  %745 = vmatpush1.msra.mxu0 0.0
  %746 = vmatprep.mubr.f32.mxu0 0.0
  %747 = vmatmul.mubr.f32.gmra.mrb[0].mxu0 %v680
  %v748 = vpop.f32.mrb[0].mxu0
  %v749 = vadd.f32 %v148, %v748
  %v750 = vpop.f32.mrb[0].mxu0
  %751 = vdwg.mxu0
  %v752 = vadd.f32 %v674, %v749
  %v753 = vxor.u32 %v752, 2147483648
  %v754 = vmul.f32 %v753, 1.442695
  %v755 = vpow.pop %v754
  %v756 = vadd.f32 %v755, 1.0
  %v757 = vrcp.pop %v756
  %v758 = vmul.f32 1.0, %v757
  %760 = vrot.lane.b32.xlu0 %v749, 80
  %v761 = vpop.permute.xlu0 %760
  %v763 = vmul.f32 %v758, %v761
  %765 = vrot.lane.b32.xlu0 %v763, 48
  %v766 = vpop.permute.xlu0 %765
  %v768 = vadd.f32 %v674, %v766
  %v769 = vtanh.pop %v768
  %v770 = vsub.f32 1.0, %v758
  %772 = vrot.lane.b32.xlu0 %v769, 104
  %v773 = vpop.permute.xlu0 %772
  %v775 = vmul.f32 %v770, %v773
  %v776 = vmul.f32 %v758, %v601
  %v777 = vadd.f32 %v775, %v776
  %s778 = scalar_lea.vmem %s0, 32
  %v779 = vld [vmem:[%s778] sm:$0xff]
  %v781 = vsel %vm70, %v779, 0
  %783 = vmatprep.subr.mxu0 0.0
  %784 = vmatpush1.msra.mxu0 %v56
  %785 = vmatprep.subr.mxu0 0.0
  %786 = vmatpush1.msra.mxu0 %v57
  %787 = vmatprep.subr.mxu0 0.0
  %788 = vmatpush1.msra.mxu0 0.0
  %789 = vmatprep.subr.mxu0 0.0
  %790 = vmatpush1.msra.mxu0 0.0
  %791 = vmatprep.subr.mxu0 0.0
  %792 = vmatpush1.msra.mxu0 0.0
  %793 = vmatprep.subr.mxu0 0.0
  %794 = vmatpush1.msra.mxu0 0.0
  %795 = vmatprep.subr.mxu0 0.0
  %796 = vmatpush1.msra.mxu0 0.0
  %797 = vmatprep.subr.mxu0 0.0
  %798 = vmatpush1.msra.mxu0 0.0
  %799 = vmatprep.subr.mxu0 0.0
  %800 = vmatpush1.msra.mxu0 0.0
  %801 = vmatprep.subr.mxu0 0.0
  %802 = vmatpush1.msra.mxu0 0.0
  %803 = vmatprep.subr.mxu0 0.0
  %804 = vmatpush1.msra.mxu0 0.0
  %805 = vmatprep.subr.mxu0 0.0
  %806 = vmatpush1.msra.mxu0 0.0
  %807 = vmatprep.subr.mxu0 0.0
  %808 = vmatpush1.msra.mxu0 0.0
  %809 = vmatprep.subr.mxu0 0.0
  %810 = vmatpush1.msra.mxu0 0.0
  %811 = vmatprep.subr.mxu0 0.0
  %812 = vmatpush1.msra.mxu0 0.0
  %813 = vmatprep.subr.mxu0 0.0
  %814 = vmatpush1.msra.mxu0 0.0
  %815 = vmatprep.subr.mxu0 0.0
  %816 = vmatpush1.msra.mxu0 0.0
  %817 = vmatprep.subr.mxu0 0.0
  %818 = vmatpush1.msra.mxu0 0.0
  %819 = vmatprep.subr.mxu0 0.0
  %820 = vmatpush1.msra.mxu0 0.0
  %821 = vmatprep.subr.mxu0 0.0
  %822 = vmatpush1.msra.mxu0 0.0
  %823 = vmatprep.subr.mxu0 0.0
  %824 = vmatpush1.msra.mxu0 0.0
  %825 = vmatprep.subr.mxu0 0.0
  %826 = vmatpush1.msra.mxu0 0.0
  %827 = vmatprep.subr.mxu0 0.0
  %828 = vmatpush1.msra.mxu0 0.0
  %829 = vmatprep.subr.mxu0 0.0
  %830 = vmatpush1.msra.mxu0 0.0
  %831 = vmatprep.subr.mxu0 0.0
  %832 = vmatpush1.msra.mxu0 0.0
  %833 = vmatprep.subr.mxu0 0.0
  %834 = vmatpush1.msra.mxu0 0.0
  %835 = vmatprep.subr.mxu0 0.0
  %836 = vmatpush1.msra.mxu0 0.0
  %837 = vmatprep.subr.mxu0 0.0
  %838 = vmatpush1.msra.mxu0 0.0
  %839 = vmatprep.subr.mxu0 0.0
  %840 = vmatpush1.msra.mxu0 0.0
  %841 = vmatprep.subr.mxu0 0.0
  %842 = vmatpush1.msra.mxu0 0.0
  %843 = vmatprep.subr.mxu0 0.0
  %844 = vmatpush1.msra.mxu0 0.0
  %845 = vmatprep.subr.mxu0 0.0
  %846 = vmatpush1.msra.mxu0 0.0
  %847 = vmatprep.mubr.f32.mxu0 0.0
  %848 = vmatmul.mubr.f32.gmra.mrb[0].mxu0 %v781
  %v849 = vpop.f32.mrb[0].mxu0
  %v850 = vadd.f32 %v68, %v849
  %v851 = vpop.f32.mrb[0].mxu0
  %852 = vdwg.mxu0
  %854 = vrot.lane.b32.xlu0 %v777, 104
  %v855 = vpop.permute.xlu0 %854
  %v856 = vsel %vm150, %v855, 0
  %858 = vmatprep.subr.mxu0 0.0
  %859 = vmatpush1.msra.mxu0 %v58
  %860 = vmatprep.subr.mxu0 0.0
  %861 = vmatpush1.msra.mxu0 %v59
  %862 = vmatprep.subr.mxu0 0.0
  %863 = vmatpush1.msra.mxu0 %v60
  %864 = vmatprep.subr.mxu0 0.0
  %865 = vmatpush1.msra.mxu0 0.0
  %866 = vmatprep.subr.mxu0 0.0
  %867 = vmatpush1.msra.mxu0 0.0
  %868 = vmatprep.subr.mxu0 0.0
  %869 = vmatpush1.msra.mxu0 0.0
  %870 = vmatprep.subr.mxu0 0.0
  %871 = vmatpush1.msra.mxu0 0.0
  %872 = vmatprep.subr.mxu0 0.0
  %873 = vmatpush1.msra.mxu0 0.0
  %874 = vmatprep.subr.mxu0 0.0
  %875 = vmatpush1.msra.mxu0 0.0
  %876 = vmatprep.subr.mxu0 0.0
  %877 = vmatpush1.msra.mxu0 0.0
  %878 = vmatprep.subr.mxu0 0.0
  %879 = vmatpush1.msra.mxu0 0.0
  %880 = vmatprep.subr.mxu0 0.0
  %881 = vmatpush1.msra.mxu0 0.0
  %882 = vmatprep.subr.mxu0 0.0
  %883 = vmatpush1.msra.mxu0 0.0
  %884 = vmatprep.subr.mxu0 0.0
  %885 = vmatpush1.msra.mxu0 0.0
  %886 = vmatprep.subr.mxu0 0.0
  %887 = vmatpush1.msra.mxu0 0.0
  %888 = vmatprep.subr.mxu0 0.0
  %889 = vmatpush1.msra.mxu0 0.0
  %890 = vmatprep.subr.mxu0 0.0
  %891 = vmatpush1.msra.mxu0 0.0
  %892 = vmatprep.subr.mxu0 0.0
  %893 = vmatpush1.msra.mxu0 0.0
  %894 = vmatprep.subr.mxu0 0.0
  %895 = vmatpush1.msra.mxu0 0.0
  %896 = vmatprep.subr.mxu0 0.0
  %897 = vmatpush1.msra.mxu0 0.0
  %898 = vmatprep.subr.mxu0 0.0
  %899 = vmatpush1.msra.mxu0 0.0
  %900 = vmatprep.subr.mxu0 0.0
  %901 = vmatpush1.msra.mxu0 0.0
  %902 = vmatprep.subr.mxu0 0.0
  %903 = vmatpush1.msra.mxu0 0.0
  %904 = vmatprep.subr.mxu0 0.0
  %905 = vmatpush1.msra.mxu0 0.0
  %906 = vmatprep.subr.mxu0 0.0
  %907 = vmatpush1.msra.mxu0 0.0
  %908 = vmatprep.subr.mxu0 0.0
  %909 = vmatpush1.msra.mxu0 0.0
  %910 = vmatprep.subr.mxu0 0.0
  %911 = vmatpush1.msra.mxu0 0.0
  %912 = vmatprep.subr.mxu0 0.0
  %913 = vmatpush1.msra.mxu0 0.0
  %914 = vmatprep.subr.mxu0 0.0
  %915 = vmatpush1.msra.mxu0 0.0
  %916 = vmatprep.subr.mxu0 0.0
  %917 = vmatpush1.msra.mxu0 0.0
  %918 = vmatprep.subr.mxu0 0.0
  %919 = vmatpush1.msra.mxu0 0.0
  %920 = vmatprep.subr.mxu0 0.0
  %921 = vmatpush1.msra.mxu0 0.0
  %922 = vmatprep.mubr.f32.mxu0 0.0
  %923 = vmatmul.mubr.f32.gmra.mrb[0].mxu0 %v856
  %v924 = vpop.f32.mrb[0].mxu0
  %v925 = vadd.f32 %v148, %v924
  %v926 = vpop.f32.mrb[0].mxu0
  %927 = vdwg.mxu0
  %v928 = vadd.f32 %v850, %v925
  %v929 = vxor.u32 %v928, 2147483648
  %v930 = vmul.f32 %v929, 1.442695
  %v931 = vpow.pop %v930
  %v932 = vadd.f32 %v931, 1.0
  %v933 = vrcp.pop %v932
  %v934 = vmul.f32 1.0, %v933
  %936 = vrot.lane.b32.xlu0 %v925, 80
  %v937 = vpop.permute.xlu0 %936
  %v939 = vmul.f32 %v934, %v937
  %941 = vrot.lane.b32.xlu0 %v939, 48
  %v942 = vpop.permute.xlu0 %941
  %v944 = vadd.f32 %v850, %v942
  %v945 = vtanh.pop %v944
  %v946 = vsub.f32 1.0, %v934
  %948 = vrot.lane.b32.xlu0 %v945, 104
  %v949 = vpop.permute.xlu0 %948
  %v951 = vmul.f32 %v946, %v949
  %v952 = vmul.f32 %v934, %v777
  %v953 = vadd.f32 %v951, %v952
  %s954 = scalar_lea.vmem %s0, 40
  %v955 = vld [vmem:[%s954] sm:$0xff]
  %v957 = vsel %vm70, %v955, 0
  %959 = vmatprep.subr.mxu0 0.0
  %960 = vmatpush1.msra.mxu0 %v56
  %961 = vmatprep.subr.mxu0 0.0
  %962 = vmatpush1.msra.mxu0 %v57
  %963 = vmatprep.subr.mxu0 0.0
  %964 = vmatpush1.msra.mxu0 0.0
  %965 = vmatprep.subr.mxu0 0.0
  %966 = vmatpush1.msra.mxu0 0.0
  %967 = vmatprep.subr.mxu0 0.0
  %968 = vmatpush1.msra.mxu0 0.0
  %969 = vmatprep.subr.mxu0 0.0
  %970 = vmatpush1.msra.mxu0 0.0
  %971 = vmatprep.subr.mxu0 0.0
  %972 = vmatpush1.msra.mxu0 0.0
  %973 = vmatprep.subr.mxu0 0.0
  %974 = vmatpush1.msra.mxu0 0.0
  %975 = vmatprep.subr.mxu0 0.0
  %976 = vmatpush1.msra.mxu0 0.0
  %977 = vmatprep.subr.mxu0 0.0
  %978 = vmatpush1.msra.mxu0 0.0
  %979 = vmatprep.subr.mxu0 0.0
  %980 = vmatpush1.msra.mxu0 0.0
  %981 = vmatprep.subr.mxu0 0.0
  %982 = vmatpush1.msra.mxu0 0.0
  %983 = vmatprep.subr.mxu0 0.0
  %984 = vmatpush1.msra.mxu0 0.0
  %985 = vmatprep.subr.mxu0 0.0
  %986 = vmatpush1.msra.mxu0 0.0
  %987 = vmatprep.subr.mxu0 0.0
  %988 = vmatpush1.msra.mxu0 0.0
  %989 = vmatprep.subr.mxu0 0.0
  %990 = vmatpush1.msra.mxu0 0.0
  %991 = vmatprep.subr.mxu0 0.0
  %992 = vmatpush1.msra.mxu0 0.0
  %993 = vmatprep.subr.mxu0 0.0
  %994 = vmatpush1.msra.mxu0 0.0
  %995 = vmatprep.subr.mxu0 0.0
  %996 = vmatpush1.msra.mxu0 0.0
  %997 = vmatprep.subr.mxu0 0.0
  %998 = vmatpush1.msra.mxu0 0.0
  %999 = vmatprep.subr.mxu0 0.0
  %1000 = vmatpush1.msra.mxu0 0.0
  %1001 = vmatprep.subr.mxu0 0.0
  %1002 = vmatpush1.msra.mxu0 0.0
  %1003 = vmatprep.subr.mxu0 0.0
  %1004 = vmatpush1.msra.mxu0 0.0
  %1005 = vmatprep.subr.mxu0 0.0
  %1006 = vmatpush1.msra.mxu0 0.0
  %1007 = vmatprep.subr.mxu0 0.0
  %1008 = vmatpush1.msra.mxu0 0.0
  %1009 = vmatprep.subr.mxu0 0.0
  %1010 = vmatpush1.msra.mxu0 0.0
  %1011 = vmatprep.subr.mxu0 0.0
  %1012 = vmatpush1.msra.mxu0 0.0
  %1013 = vmatprep.subr.mxu0 0.0
  %1014 = vmatpush1.msra.mxu0 0.0
  %1015 = vmatprep.subr.mxu0 0.0
  %1016 = vmatpush1.msra.mxu0 0.0
  %1017 = vmatprep.subr.mxu0 0.0
  %1018 = vmatpush1.msra.mxu0 0.0
  %1019 = vmatprep.subr.mxu0 0.0
  %1020 = vmatpush1.msra.mxu0 0.0
  %1021 = vmatprep.subr.mxu0 0.0
  %1022 = vmatpush1.msra.mxu0 0.0
  %1023 = vmatprep.mubr.f32.mxu0 0.0
  %1024 = vmatmul.mubr.f32.gmra.mrb[0].mxu0 %v957
  %v1025 = vpop.f32.mrb[0].mxu0
  %v1026 = vadd.f32 %v68, %v1025
  %v1027 = vpop.f32.mrb[0].mxu0
  %1028 = vdwg.mxu0
  %1030 = vrot.lane.b32.xlu0 %v953, 104
  %v1031 = vpop.permute.xlu0 %1030
  %v1032 = vsel %vm150, %v1031, 0
  %1034 = vmatprep.subr.mxu0 0.0
  %1035 = vmatpush1.msra.mxu0 %v58
  %1036 = vmatprep.subr.mxu0 0.0
  %1037 = vmatpush1.msra.mxu0 %v59
  %1038 = vmatprep.subr.mxu0 0.0
  %1039 = vmatpush1.msra.mxu0 %v60
  %1040 = vmatprep.subr.mxu0 0.0
  %1041 = vmatpush1.msra.mxu0 0.0
  %1042 = vmatprep.subr.mxu0 0.0
  %1043 = vmatpush1.msra.mxu0 0.0
  %1044 = vmatprep.subr.mxu0 0.0
  %1045 = vmatpush1.msra.mxu0 0.0
  %1046 = vmatprep.subr.mxu0 0.0
  %1047 = vmatpush1.msra.mxu0 0.0
  %1048 = vmatprep.subr.mxu0 0.0
  %1049 = vmatpush1.msra.mxu0 0.0
  %1050 = vmatprep.subr.mxu0 0.0
  %1051 = vmatpush1.msra.mxu0 0.0
  %1052 = vmatprep.subr.mxu0 0.0
  %1053 = vmatpush1.msra.mxu0 0.0
  %1054 = vmatprep.subr.mxu0 0.0
  %1055 = vmatpush1.msra.mxu0 0.0
  %1056 = vmatprep.subr.mxu0 0.0
  %1057 = vmatpush1.msra.mxu0 0.0
  %1058 = vmatprep.subr.mxu0 0.0
  %1059 = vmatpush1.msra.mxu0 0.0
  %1060 = vmatprep.subr.mxu0 0.0
  %1061 = vmatpush1.msra.mxu0 0.0
  %1062 = vmatprep.subr.mxu0 0.0
  %1063 = vmatpush1.msra.mxu0 0.0
  %1064 = vmatprep.subr.mxu0 0.0
  %1065 = vmatpush1.msra.mxu0 0.0
  %1066 = vmatprep.subr.mxu0 0.0
  %1067 = vmatpush1.msra.mxu0 0.0
  %1068 = vmatprep.subr.mxu0 0.0
  %1069 = vmatpush1.msra.mxu0 0.0
  %1070 = vmatprep.subr.mxu0 0.0
  %1071 = vmatpush1.msra.mxu0 0.0
  %1072 = vmatprep.subr.mxu0 0.0
  %1073 = vmatpush1.msra.mxu0 0.0
  %1074 = vmatprep.subr.mxu0 0.0
  %1075 = vmatpush1.msra.mxu0 0.0
  %1076 = vmatprep.subr.mxu0 0.0
  %1077 = vmatpush1.msra.mxu0 0.0
  %1078 = vmatprep.subr.mxu0 0.0
  %1079 = vmatpush1.msra.mxu0 0.0
  %1080 = vmatprep.subr.mxu0 0.0
  %1081 = vmatpush1.msra.mxu0 0.0
  %1082 = vmatprep.subr.mxu0 0.0
  %1083 = vmatpush1.msra.mxu0 0.0
  %1084 = vmatprep.subr.mxu0 0.0
  %1085 = vmatpush1.msra.mxu0 0.0
  %1086 = vmatprep.subr.mxu0 0.0
  %1087 = vmatpush1.msra.mxu0 0.0
  %1088 = vmatprep.subr.mxu0 0.0
  %1089 = vmatpush1.msra.mxu0 0.0
  %1090 = vmatprep.subr.mxu0 0.0
  %1091 = vmatpush1.msra.mxu0 0.0
  %1092 = vmatprep.subr.mxu0 0.0
  %1093 = vmatpush1.msra.mxu0 0.0
  %1094 = vmatprep.subr.mxu0 0.0
  %1095 = vmatpush1.msra.mxu0 0.0
  %1096 = vmatprep.subr.mxu0 0.0
  %1097 = vmatpush1.msra.mxu0 0.0
  %1098 = vmatprep.mubr.f32.mxu0 0.0
  %1099 = vmatmul.mubr.f32.gmra.mrb[0].mxu0 %v1032
  %v1100 = vpop.f32.mrb[0].mxu0
  %v1101 = vadd.f32 %v148, %v1100
  %v1102 = vpop.f32.mrb[0].mxu0
  %1103 = vdwg.mxu0
  %v1104 = vadd.f32 %v1026, %v1101
  %v1105 = vxor.u32 %v1104, 2147483648
  %v1106 = vmul.f32 %v1105, 1.442695
  %v1107 = vpow.pop %v1106
  %v1108 = vadd.f32 %v1107, 1.0
  %v1109 = vrcp.pop %v1108
  %v1110 = vmul.f32 1.0, %v1109
  %1112 = vrot.lane.b32.xlu0 %v1101, 80
  %v1113 = vpop.permute.xlu0 %1112
  %v1115 = vmul.f32 %v1110, %v1113
  %1117 = vrot.lane.b32.xlu0 %v1115, 48
  %v1118 = vpop.permute.xlu0 %1117
  %v1120 = vadd.f32 %v1026, %v1118
  %v1121 = vtanh.pop %v1120
  %v1122 = vsub.f32 1.0, %v1110
  %1124 = vrot.lane.b32.xlu0 %v1121, 104
  %v1125 = vpop.permute.xlu0 %1124
  %v1127 = vmul.f32 %v1122, %v1125
  %v1128 = vmul.f32 %v1110, %v953
  %v1129 = vadd.f32 %v1127, %v1128
  %v1130 = vld [vmem:[%s8] sm:$0xff]
  %v1131 = vld [vmem:[%s8 + $0x8] sm:$0xff]
  %v1132 = vld [vmem:[%s8 + $0x10] sm:$0xff]
  %v1133 = vld [vmem:[%s8 + $0x18] sm:$0xff]
  %v1134 = vld [vmem:[%s9] sm:$0xff]
  %v1135 = vld [vmem:[%s9 + $0x8] sm:$0xff]
  %v1136 = vld [vmem:[%s9 + $0x10] sm:$0xff]
  %v1137 = vld [vmem:[%s9 + $0x18] sm:$0xff]
  %v1138 = vld [vmem:[%s9 + $0x20] sm:$0xff]
  %v1139 = vld [vmem:[%s9 + $0x28] sm:$0xff]
  %v1140 = vld [vmem:[%s10] sm:$0x1]
  %v1141 = vlaneseq
  %v1142 = vshrl.u32 %v1141, 7
  %v1143 = vsub.s32 0, %v1142
  %v1144 = vrot.slane %v1140, %v1143
  %v1145 = vld [vmem:[%s10 + $0x1] sm:$0x1]
  %v1146 = vlaneseq
  %v1147 = vshrl.u32 %v1146, 7
  %v1148 = vsub.s32 0, %v1147
  %v1149 = vrot.slane %v1145, %v1148
  %v1150 = vlaneseq
  %v1151 = vshrl.u32 %v1150, 7
  %v1152 = vadd.s32 %v1151, 8
  %vm1153 = vcmp.lt.s32.totalorder %v1151, 8
  %vm1154 = vcmp.lt.s32.totalorder %v1152, 8
  %v1155 = vsel %vm1153, 1, 0
  %v1156 = vsel %vm1154, 1, 0
  %v1157 = vcvt.s32.f32 %v1155
  %v1158 = vcvt.s32.f32 %v1156
  %v1159 = vsub.f32 1.0, %v1157
  %v1160 = vsub.f32 1.0, %v1158
  %v1161 = vmul.f32 %v1157, 0.0
  %v1162 = vmul.f32 %v1158, 0.0
  %v1163 = vmul.f32 %v1159, 0.0
  %v1164 = vmul.f32 %v1160, 0.0
  %v1165 = vsel %vm150, %v1161, %v1163
  %v1166 = vsel %vm150, %v1162, %v1164
  %v1167 = vld [vmem:[%s1] sm:$0xff]
  %v1168 = vld [vmem:[%s1 + $0x8] sm:$0xff]
  %vm1169 = vcmask 392192
  %v1171 = vsel %vm1169, %v1165, 0
  %v1174 = vsel %vm1169, %v1166, 0
  %1176 = vmatprep.subr.mxu0 0.0
  %1177 = vmatpush1.msra.mxu0 %v1134
  %1178 = vmatprep.subr.mxu0 0.0
  %1179 = vmatpush1.msra.mxu0 %v1135
  %1180 = vmatprep.subr.mxu0 0.0
  %1181 = vmatpush1.msra.mxu0 %v1136
  %1182 = vmatprep.subr.mxu0 0.0
  %1183 = vmatpush1.msra.mxu0 %v1137
  %1184 = vmatprep.subr.mxu0 0.0
  %1185 = vmatpush1.msra.mxu0 %v1138
  %1186 = vmatprep.subr.mxu0 0.0
  %1187 = vmatpush1.msra.mxu0 %v1139
  %1188 = vmatprep.subr.mxu0 0.0
  %1189 = vmatpush1.msra.mxu0 0.0
  %1190 = vmatprep.subr.mxu0 0.0
  %1191 = vmatpush1.msra.mxu0 0.0
  %1192 = vmatprep.subr.mxu0 0.0
  %1193 = vmatpush1.msra.mxu0 0.0
  %1194 = vmatprep.subr.mxu0 0.0
  %1195 = vmatpush1.msra.mxu0 0.0
  %1196 = vmatprep.subr.mxu0 0.0
  %1197 = vmatpush1.msra.mxu0 0.0
  %1198 = vmatprep.subr.mxu0 0.0
  %1199 = vmatpush1.msra.mxu0 0.0
  %1200 = vmatprep.subr.mxu0 0.0
  %1201 = vmatpush1.msra.mxu0 0.0
  %1202 = vmatprep.subr.mxu0 0.0
  %1203 = vmatpush1.msra.mxu0 0.0
  %1204 = vmatprep.subr.mxu0 0.0
  %1205 = vmatpush1.msra.mxu0 0.0
  %1206 = vmatprep.subr.mxu0 0.0
  %1207 = vmatpush1.msra.mxu0 0.0
  %1208 = vmatprep.subr.mxu0 0.0
  %1209 = vmatpush1.msra.mxu0 0.0
  %1210 = vmatprep.subr.mxu0 0.0
  %1211 = vmatpush1.msra.mxu0 0.0
  %1212 = vmatprep.subr.mxu0 0.0
  %1213 = vmatpush1.msra.mxu0 0.0
  %1214 = vmatprep.subr.mxu0 0.0
  %1215 = vmatpush1.msra.mxu0 0.0
  %1216 = vmatprep.subr.mxu0 0.0
  %1217 = vmatpush1.msra.mxu0 0.0
  %1218 = vmatprep.subr.mxu0 0.0
  %1219 = vmatpush1.msra.mxu0 0.0
  %1220 = vmatprep.subr.mxu0 0.0
  %1221 = vmatpush1.msra.mxu0 0.0
  %1222 = vmatprep.subr.mxu0 0.0
  %1223 = vmatpush1.msra.mxu0 0.0
  %1224 = vmatprep.subr.mxu0 0.0
  %1225 = vmatpush1.msra.mxu0 0.0
  %1226 = vmatprep.subr.mxu0 0.0
  %1227 = vmatpush1.msra.mxu0 0.0
  %1228 = vmatprep.subr.mxu0 0.0
  %1229 = vmatpush1.msra.mxu0 0.0
  %1230 = vmatprep.subr.mxu0 0.0
  %1231 = vmatpush1.msra.mxu0 0.0
  %1232 = vmatprep.subr.mxu0 0.0
  %1233 = vmatpush1.msra.mxu0 0.0
  %1234 = vmatprep.subr.mxu0 0.0
  %1235 = vmatpush1.msra.mxu0 0.0
  %1236 = vmatprep.subr.mxu0 0.0
  %1237 = vmatpush1.msra.mxu0 0.0
  %1238 = vmatprep.subr.mxu0 0.0
  %1239 = vmatpush1.msra.mxu0 0.0
  %1240 = vmatprep.mubr.f32.mxu0 0.0
  %1241 = vmatmul.mubr.f32.gmra.mrb[0].mxu0 %v1171
  %v1242 = vpop.f32.mrb[0].mxu0
  %v1243 = vadd.f32 0.0, %v1242
  %v1244 = vpop.f32.mrb[0].mxu0
  %1245 = vmatprep.mubr.f32.mxu0 0.0
  %1246 = vmatmul.mubr.f32.gmra.mrb[0].mxu0 %v1174
  %v1247 = vpop.f32.mrb[0].mxu0
  %v1248 = vadd.f32 0.0, %v1247
  %v1249 = vpop.f32.mrb[0].mxu0
  %1250 = vdwg.mxu0
  %vm1251 = vcmask 261120
  %v1253 = vsel %vm1251, %v1167, 0
  %v1256 = vsel %vm1251, %v1168, 0
  %1258 = vmatprep.subr.mxu0 0.0
  %1259 = vmatpush1.msra.mxu0 %v1130
  %1260 = vmatprep.subr.mxu0 0.0
  %1261 = vmatpush1.msra.mxu0 %v1131
  %1262 = vmatprep.subr.mxu0 0.0
  %1263 = vmatpush1.msra.mxu0 %v1132
  %1264 = vmatprep.subr.mxu0 0.0
  %1265 = vmatpush1.msra.mxu0 %v1133
  %1266 = vmatprep.subr.mxu0 0.0
  %1267 = vmatpush1.msra.mxu0 0.0
  %1268 = vmatprep.subr.mxu0 0.0
  %1269 = vmatpush1.msra.mxu0 0.0
  %1270 = vmatprep.subr.mxu0 0.0
  %1271 = vmatpush1.msra.mxu0 0.0
  %1272 = vmatprep.subr.mxu0 0.0
  %1273 = vmatpush1.msra.mxu0 0.0
  %1274 = vmatprep.subr.mxu0 0.0
  %1275 = vmatpush1.msra.mxu0 0.0
  %1276 = vmatprep.subr.mxu0 0.0
  %1277 = vmatpush1.msra.mxu0 0.0
  %1278 = vmatprep.subr.mxu0 0.0
  %1279 = vmatpush1.msra.mxu0 0.0
  %1280 = vmatprep.subr.mxu0 0.0
  %1281 = vmatpush1.msra.mxu0 0.0
  %1282 = vmatprep.subr.mxu0 0.0
  %1283 = vmatpush1.msra.mxu0 0.0
  %1284 = vmatprep.subr.mxu0 0.0
  %1285 = vmatpush1.msra.mxu0 0.0
  %1286 = vmatprep.subr.mxu0 0.0
  %1287 = vmatpush1.msra.mxu0 0.0
  %1288 = vmatprep.subr.mxu0 0.0
  %1289 = vmatpush1.msra.mxu0 0.0
  %1290 = vmatprep.subr.mxu0 0.0
  %1291 = vmatpush1.msra.mxu0 0.0
  %1292 = vmatprep.subr.mxu0 0.0
  %1293 = vmatpush1.msra.mxu0 0.0
  %1294 = vmatprep.subr.mxu0 0.0
  %1295 = vmatpush1.msra.mxu0 0.0
  %1296 = vmatprep.subr.mxu0 0.0
  %1297 = vmatpush1.msra.mxu0 0.0
  %1298 = vmatprep.subr.mxu0 0.0
  %1299 = vmatpush1.msra.mxu0 0.0
  %1300 = vmatprep.subr.mxu0 0.0
  %1301 = vmatpush1.msra.mxu0 0.0
  %1302 = vmatprep.subr.mxu0 0.0
  %1303 = vmatpush1.msra.mxu0 0.0
  %1304 = vmatprep.subr.mxu0 0.0
  %1305 = vmatpush1.msra.mxu0 0.0
  %1306 = vmatprep.subr.mxu0 0.0
  %1307 = vmatpush1.msra.mxu0 0.0
  %1308 = vmatprep.subr.mxu0 0.0
  %1309 = vmatpush1.msra.mxu0 0.0
  %1310 = vmatprep.subr.mxu0 0.0
  %1311 = vmatpush1.msra.mxu0 0.0
  %1312 = vmatprep.subr.mxu0 0.0
  %1313 = vmatpush1.msra.mxu0 0.0
  %1314 = vmatprep.subr.mxu0 0.0
  %1315 = vmatpush1.msra.mxu0 0.0
  %1316 = vmatprep.subr.mxu0 0.0
  %1317 = vmatpush1.msra.mxu0 0.0
  %1318 = vmatprep.subr.mxu0 0.0
  %1319 = vmatpush1.msra.mxu0 0.0
  %1320 = vmatprep.subr.mxu0 0.0
  %1321 = vmatpush1.msra.mxu0 0.0
  %1322 = vmatprep.mubr.f32.mxu0 0.0
  %1323 = vmatmul.mubr.f32.gmra.mrb[0].mxu0 %v1253
  %v1324 = vpop.f32.mrb[0].mxu0
  %v1325 = vadd.f32 %v1243, %v1324
  %v1326 = vpop.f32.mrb[0].mxu0
  %1327 = vmatprep.mubr.f32.mxu0 0.0
  %1328 = vmatmul.mubr.f32.gmra.mrb[0].mxu0 %v1256
  %v1329 = vpop.f32.mrb[0].mxu0
  %v1330 = vadd.f32 %v1248, %v1329
  %v1331 = vpop.f32.mrb[0].mxu0
  %1332 = vdwg.mxu0
  %v1333 = vadd.f32 %v1325, %v1144
  %v1334 = vadd.f32 %v1330, %v1149
  %v1335 = vxor.u32 %v1333, 2147483648
  %v1336 = vxor.u32 %v1334, 2147483648
  %v1337 = vmul.f32 %v1335, 1.442695
  %v1338 = vpow.pop %v1337
  %v1339 = vmul.f32 %v1336, 1.442695
  %v1340 = vpow.pop %v1339
  %v1341 = vadd.f32 %v1338, 1.0
  %v1342 = vadd.f32 %v1340, 1.0
  %v1343 = vrcp.pop %v1341
  %v1344 = vmul.f32 1.0, %v1343
  %v1345 = vrcp.pop %v1342
  %v1346 = vmul.f32 1.0, %v1345
  %v1347 = vtanh.pop %v1333
  %v1348 = vtanh.pop %v1334
  %1351 = vrot.lane.b32.xlu0 %v1347, 80
  %v1352 = vpop.permute.xlu0 %1351
  %1353 = vrot.lane.b32.xlu0 %v1348, 80
  %v1354 = vpop.permute.xlu0 %1353
  %v1357 = vmul.f32 %v1344, %v1352
  %v1358 = vmul.f32 %v1346, %v1354
  %v1359 = vmul.f32 %v1344, 0.0
  %v1360 = vmul.f32 %v1346, 0.0
  %1363 = vrot.lane.b32.xlu0 %v1359, 56
  %v1364 = vpop.permute.xlu0 %1363
  %1365 = vrot.lane.b32.xlu0 %v1360, 56
  %v1366 = vpop.permute.xlu0 %1365
  %v1369 = vadd.f32 %v1357, %v1364
  %v1370 = vadd.f32 %v1358, %v1366
  %v1371 = vtanh.pop %v1369
  %v1372 = vtanh.pop %v1370
  %1375 = vrot.lane.b32.xlu0 %v1371, 24
  %v1376 = vpop.permute.xlu0 %1375
  %1377 = vrot.lane.b32.xlu0 %v1372, 24
  %v1378 = vpop.permute.xlu0 %1377
  %v1381 = vmul.f32 %v1344, %v1376
  %v1382 = vmul.f32 %v1346, %v1378
  %v1383 = vmul.f32 %v1381, %v1157
  %v1384 = vmul.f32 %v1382, %v1158
  %v1385 = vmul.f32 %v1381, %v1159
  %v1386 = vmul.f32 %v1382, %v1160
  %1389 = vrot.lane.b32.xlu0 %v1383, 104
  %v1390 = vpop.permute.xlu0 %1389
  %1391 = vrot.lane.b32.xlu0 %v1384, 104
  %v1392 = vpop.permute.xlu0 %1391
  %v1395 = vsel %vm150, %v1390, %v1385
  %v1396 = vsel %vm150, %v1392, %v1386
  %s1397 = scalar_lea.vmem %s1, 16
  %v1398 = vld [vmem:[%s1397] sm:$0xff]
  %v1399 = vld [vmem:[%s1397 + $0x8] sm:$0xff]
  %v1401 = vsel %vm1169, %v1395, 0
  %v1404 = vsel %vm1169, %v1396, 0
  %1406 = vmatprep.subr.mxu0 0.0
  %1407 = vmatpush1.msra.mxu0 %v1134
  %1408 = vmatprep.subr.mxu0 0.0
  %1409 = vmatpush1.msra.mxu0 %v1135
  %1410 = vmatprep.subr.mxu0 0.0
  %1411 = vmatpush1.msra.mxu0 %v1136
  %1412 = vmatprep.subr.mxu0 0.0
  %1413 = vmatpush1.msra.mxu0 %v1137
  %1414 = vmatprep.subr.mxu0 0.0
  %1415 = vmatpush1.msra.mxu0 %v1138
  %1416 = vmatprep.subr.mxu0 0.0
  %1417 = vmatpush1.msra.mxu0 %v1139
  %1418 = vmatprep.subr.mxu0 0.0
  %1419 = vmatpush1.msra.mxu0 0.0
  %1420 = vmatprep.subr.mxu0 0.0
  %1421 = vmatpush1.msra.mxu0 0.0
  %1422 = vmatprep.subr.mxu0 0.0
  %1423 = vmatpush1.msra.mxu0 0.0
  %1424 = vmatprep.subr.mxu0 0.0
  %1425 = vmatpush1.msra.mxu0 0.0
  %1426 = vmatprep.subr.mxu0 0.0
  %1427 = vmatpush1.msra.mxu0 0.0
  %1428 = vmatprep.subr.mxu0 0.0
  %1429 = vmatpush1.msra.mxu0 0.0
  %1430 = vmatprep.subr.mxu0 0.0
  %1431 = vmatpush1.msra.mxu0 0.0
  %1432 = vmatprep.subr.mxu0 0.0
  %1433 = vmatpush1.msra.mxu0 0.0
  %1434 = vmatprep.subr.mxu0 0.0
  %1435 = vmatpush1.msra.mxu0 0.0
  %1436 = vmatprep.subr.mxu0 0.0
  %1437 = vmatpush1.msra.mxu0 0.0
  %1438 = vmatprep.subr.mxu0 0.0
  %1439 = vmatpush1.msra.mxu0 0.0
  %1440 = vmatprep.subr.mxu0 0.0
  %1441 = vmatpush1.msra.mxu0 0.0
  %1442 = vmatprep.subr.mxu0 0.0
  %1443 = vmatpush1.msra.mxu0 0.0
  %1444 = vmatprep.subr.mxu0 0.0
  %1445 = vmatpush1.msra.mxu0 0.0
  %1446 = vmatprep.subr.mxu0 0.0
  %1447 = vmatpush1.msra.mxu0 0.0
  %1448 = vmatprep.subr.mxu0 0.0
  %1449 = vmatpush1.msra.mxu0 0.0
  %1450 = vmatprep.subr.mxu0 0.0
  %1451 = vmatpush1.msra.mxu0 0.0
  %1452 = vmatprep.subr.mxu0 0.0
  %1453 = vmatpush1.msra.mxu0 0.0
  %1454 = vmatprep.subr.mxu0 0.0
  %1455 = vmatpush1.msra.mxu0 0.0
  %1456 = vmatprep.subr.mxu0 0.0
  %1457 = vmatpush1.msra.mxu0 0.0
  %1458 = vmatprep.subr.mxu0 0.0
  %1459 = vmatpush1.msra.mxu0 0.0
  %1460 = vmatprep.subr.mxu0 0.0
  %1461 = vmatpush1.msra.mxu0 0.0
  %1462 = vmatprep.subr.mxu0 0.0
  %1463 = vmatpush1.msra.mxu0 0.0
  %1464 = vmatprep.subr.mxu0 0.0
  %1465 = vmatpush1.msra.mxu0 0.0
  %1466 = vmatprep.subr.mxu0 0.0
  %1467 = vmatpush1.msra.mxu0 0.0
  %1468 = vmatprep.subr.mxu0 0.0
  %1469 = vmatpush1.msra.mxu0 0.0
  %1470 = vmatprep.mubr.f32.mxu0 0.0
  %1471 = vmatmul.mubr.f32.gmra.mrb[0].mxu0 %v1401
  %v1472 = vpop.f32.mrb[0].mxu0
  %v1473 = vadd.f32 0.0, %v1472
  %v1474 = vpop.f32.mrb[0].mxu0
  %1475 = vmatprep.mubr.f32.mxu0 0.0
  %1476 = vmatmul.mubr.f32.gmra.mrb[0].mxu0 %v1404
  %v1477 = vpop.f32.mrb[0].mxu0
  %v1478 = vadd.f32 0.0, %v1477
  %v1479 = vpop.f32.mrb[0].mxu0
  %1480 = vdwg.mxu0
  %v1482 = vsel %vm1251, %v1398, 0
  %v1485 = vsel %vm1251, %v1399, 0
  %1487 = vmatprep.subr.mxu0 0.0
  %1488 = vmatpush1.msra.mxu0 %v1130
  %1489 = vmatprep.subr.mxu0 0.0
  %1490 = vmatpush1.msra.mxu0 %v1131
  %1491 = vmatprep.subr.mxu0 0.0
  %1492 = vmatpush1.msra.mxu0 %v1132
  %1493 = vmatprep.subr.mxu0 0.0
  %1494 = vmatpush1.msra.mxu0 %v1133
  %1495 = vmatprep.subr.mxu0 0.0
  %1496 = vmatpush1.msra.mxu0 0.0
  %1497 = vmatprep.subr.mxu0 0.0
  %1498 = vmatpush1.msra.mxu0 0.0
  %1499 = vmatprep.subr.mxu0 0.0
  %1500 = vmatpush1.msra.mxu0 0.0
  %1501 = vmatprep.subr.mxu0 0.0
  %1502 = vmatpush1.msra.mxu0 0.0
  %1503 = vmatprep.subr.mxu0 0.0
  %1504 = vmatpush1.msra.mxu0 0.0
  %1505 = vmatprep.subr.mxu0 0.0
  %1506 = vmatpush1.msra.mxu0 0.0
  %1507 = vmatprep.subr.mxu0 0.0
  %1508 = vmatpush1.msra.mxu0 0.0
  %1509 = vmatprep.subr.mxu0 0.0
  %1510 = vmatpush1.msra.mxu0 0.0
  %1511 = vmatprep.subr.mxu0 0.0
  %1512 = vmatpush1.msra.mxu0 0.0
  %1513 = vmatprep.subr.mxu0 0.0
  %1514 = vmatpush1.msra.mxu0 0.0
  %1515 = vmatprep.subr.mxu0 0.0
  %1516 = vmatpush1.msra.mxu0 0.0
  %1517 = vmatprep.subr.mxu0 0.0
  %1518 = vmatpush1.msra.mxu0 0.0
  %1519 = vmatprep.subr.mxu0 0.0
  %1520 = vmatpush1.msra.mxu0 0.0
  %1521 = vmatprep.subr.mxu0 0.0
  %1522 = vmatpush1.msra.mxu0 0.0
  %1523 = vmatprep.subr.mxu0 0.0
  %1524 = vmatpush1.msra.mxu0 0.0
  %1525 = vmatprep.subr.mxu0 0.0
  %1526 = vmatpush1.msra.mxu0 0.0
  %1527 = vmatprep.subr.mxu0 0.0
  %1528 = vmatpush1.msra.mxu0 0.0
  %1529 = vmatprep.subr.mxu0 0.0
  %1530 = vmatpush1.msra.mxu0 0.0
  %1531 = vmatprep.subr.mxu0 0.0
  %1532 = vmatpush1.msra.mxu0 0.0
  %1533 = vmatprep.subr.mxu0 0.0
  %1534 = vmatpush1.msra.mxu0 0.0
  %1535 = vmatprep.subr.mxu0 0.0
  %1536 = vmatpush1.msra.mxu0 0.0
  %1537 = vmatprep.subr.mxu0 0.0
  %1538 = vmatpush1.msra.mxu0 0.0
  %1539 = vmatprep.subr.mxu0 0.0
  %1540 = vmatpush1.msra.mxu0 0.0
  %1541 = vmatprep.subr.mxu0 0.0
  %1542 = vmatpush1.msra.mxu0 0.0
  %1543 = vmatprep.subr.mxu0 0.0
  %1544 = vmatpush1.msra.mxu0 0.0
  %1545 = vmatprep.subr.mxu0 0.0
  %1546 = vmatpush1.msra.mxu0 0.0
  %1547 = vmatprep.subr.mxu0 0.0
  %1548 = vmatpush1.msra.mxu0 0.0
  %1549 = vmatprep.subr.mxu0 0.0
  %1550 = vmatpush1.msra.mxu0 0.0
  %1551 = vmatprep.mubr.f32.mxu0 0.0
  %1552 = vmatmul.mubr.f32.gmra.mrb[0].mxu0 %v1482
  %v1553 = vpop.f32.mrb[0].mxu0
  %v1554 = vadd.f32 %v1473, %v1553
  %v1555 = vpop.f32.mrb[0].mxu0
  %1556 = vmatprep.mubr.f32.mxu0 0.0
  %1557 = vmatmul.mubr.f32.gmra.mrb[0].mxu0 %v1485
  %v1558 = vpop.f32.mrb[0].mxu0
  %v1559 = vadd.f32 %v1478, %v1558
  %v1560 = vpop.f32.mrb[0].mxu0
  %1561 = vdwg.mxu0
  %v1562 = vadd.f32 %v1554, %v1144
  %v1563 = vadd.f32 %v1559, %v1149
  %v1564 = vxor.u32 %v1562, 2147483648
  %v1565 = vxor.u32 %v1563, 2147483648
  %v1566 = vmul.f32 %v1564, 1.442695
  %v1567 = vpow.pop %v1566
  %v1568 = vmul.f32 %v1565, 1.442695
  %v1569 = vpow.pop %v1568
  %v1570 = vadd.f32 %v1567, 1.0
  %v1571 = vadd.f32 %v1569, 1.0
  %v1572 = vrcp.pop %v1570
  %v1573 = vmul.f32 1.0, %v1572
  %v1574 = vrcp.pop %v1571
  %v1575 = vmul.f32 1.0, %v1574
  %v1576 = vtanh.pop %v1562
  %v1577 = vtanh.pop %v1563
  %1580 = vrot.lane.b32.xlu0 %v1576, 80
  %v1581 = vpop.permute.xlu0 %1580
  %1582 = vrot.lane.b32.xlu0 %v1577, 80
  %v1583 = vpop.permute.xlu0 %1582
  %v1586 = vmul.f32 %v1573, %v1581
  %v1587 = vmul.f32 %v1575, %v1583
  %1590 = vrot.lane.b32.xlu0 %v1369, 72
  %v1591 = vpop.permute.xlu0 %1590
  %1592 = vrot.lane.b32.xlu0 %v1370, 72
  %v1593 = vpop.permute.xlu0 %1592
  %v1596 = vmul.f32 %v1573, %v1591
  %v1597 = vmul.f32 %v1575, %v1593
  %1600 = vrot.lane.b32.xlu0 %v1596, 56
  %v1601 = vpop.permute.xlu0 %1600
  %1602 = vrot.lane.b32.xlu0 %v1597, 56
  %v1603 = vpop.permute.xlu0 %1602
  %v1606 = vadd.f32 %v1586, %v1601
  %v1607 = vadd.f32 %v1587, %v1603
  %v1608 = vtanh.pop %v1606
  %v1609 = vtanh.pop %v1607
  %1612 = vrot.lane.b32.xlu0 %v1608, 24
  %v1613 = vpop.permute.xlu0 %1612
  %1614 = vrot.lane.b32.xlu0 %v1609, 24
  %v1615 = vpop.permute.xlu0 %1614
  %v1618 = vmul.f32 %v1573, %v1613
  %v1619 = vmul.f32 %v1575, %v1615
  %v1620 = vmul.f32 %v1618, %v1157
  %v1621 = vmul.f32 %v1619, %v1158
  %v1622 = vmul.f32 %v1618, %v1159
  %v1623 = vmul.f32 %v1619, %v1160
  %1626 = vrot.lane.b32.xlu0 %v1620, 104
  %v1627 = vpop.permute.xlu0 %1626
  %1628 = vrot.lane.b32.xlu0 %v1621, 104
  %v1629 = vpop.permute.xlu0 %1628
  %v1632 = vsel %vm150, %v1627, %v1622
  %v1633 = vsel %vm150, %v1629, %v1623
  %s1634 = scalar_lea.vmem %s1, 32
  %v1635 = vld [vmem:[%s1634] sm:$0xff]
  %v1636 = vld [vmem:[%s1634 + $0x8] sm:$0xff]
  %v1638 = vsel %vm1169, %v1632, 0
  %v1641 = vsel %vm1169, %v1633, 0
  %1643 = vmatprep.subr.mxu0 0.0
  %1644 = vmatpush1.msra.mxu0 %v1134
  %1645 = vmatprep.subr.mxu0 0.0
  %1646 = vmatpush1.msra.mxu0 %v1135
  %1647 = vmatprep.subr.mxu0 0.0
  %1648 = vmatpush1.msra.mxu0 %v1136
  %1649 = vmatprep.subr.mxu0 0.0
  %1650 = vmatpush1.msra.mxu0 %v1137
  %1651 = vmatprep.subr.mxu0 0.0
  %1652 = vmatpush1.msra.mxu0 %v1138
  %1653 = vmatprep.subr.mxu0 0.0
  %1654 = vmatpush1.msra.mxu0 %v1139
  %1655 = vmatprep.subr.mxu0 0.0
  %1656 = vmatpush1.msra.mxu0 0.0
  %1657 = vmatprep.subr.mxu0 0.0
  %1658 = vmatpush1.msra.mxu0 0.0
  %1659 = vmatprep.subr.mxu0 0.0
  %1660 = vmatpush1.msra.mxu0 0.0
  %1661 = vmatprep.subr.mxu0 0.0
  %1662 = vmatpush1.msra.mxu0 0.0
  %1663 = vmatprep.subr.mxu0 0.0
  %1664 = vmatpush1.msra.mxu0 0.0
  %1665 = vmatprep.subr.mxu0 0.0
  %1666 = vmatpush1.msra.mxu0 0.0
  %1667 = vmatprep.subr.mxu0 0.0
  %1668 = vmatpush1.msra.mxu0 0.0
  %1669 = vmatprep.subr.mxu0 0.0
  %1670 = vmatpush1.msra.mxu0 0.0
  %1671 = vmatprep.subr.mxu0 0.0
  %1672 = vmatpush1.msra.mxu0 0.0
  %1673 = vmatprep.subr.mxu0 0.0
  %1674 = vmatpush1.msra.mxu0 0.0
  %1675 = vmatprep.subr.mxu0 0.0
  %1676 = vmatpush1.msra.mxu0 0.0
  %1677 = vmatprep.subr.mxu0 0.0
  %1678 = vmatpush1.msra.mxu0 0.0
  %1679 = vmatprep.subr.mxu0 0.0
  %1680 = vmatpush1.msra.mxu0 0.0
  %1681 = vmatprep.subr.mxu0 0.0
  %1682 = vmatpush1.msra.mxu0 0.0
  %1683 = vmatprep.subr.mxu0 0.0
  %1684 = vmatpush1.msra.mxu0 0.0
  %1685 = vmatprep.subr.mxu0 0.0
  %1686 = vmatpush1.msra.mxu0 0.0
  %1687 = vmatprep.subr.mxu0 0.0
  %1688 = vmatpush1.msra.mxu0 0.0
  %1689 = vmatprep.subr.mxu0 0.0
  %1690 = vmatpush1.msra.mxu0 0.0
  %1691 = vmatprep.subr.mxu0 0.0
  %1692 = vmatpush1.msra.mxu0 0.0
  %1693 = vmatprep.subr.mxu0 0.0
  %1694 = vmatpush1.msra.mxu0 0.0
  %1695 = vmatprep.subr.mxu0 0.0
  %1696 = vmatpush1.msra.mxu0 0.0
  %1697 = vmatprep.subr.mxu0 0.0
  %1698 = vmatpush1.msra.mxu0 0.0
  %1699 = vmatprep.subr.mxu0 0.0
  %1700 = vmatpush1.msra.mxu0 0.0
  %1701 = vmatprep.subr.mxu0 0.0
  %1702 = vmatpush1.msra.mxu0 0.0
  %1703 = vmatprep.subr.mxu0 0.0
  %1704 = vmatpush1.msra.mxu0 0.0
  %1705 = vmatprep.subr.mxu0 0.0
  %1706 = vmatpush1.msra.mxu0 0.0
  %1707 = vmatprep.mubr.f32.mxu0 0.0
  %1708 = vmatmul.mubr.f32.gmra.mrb[0].mxu0 %v1638
  %v1709 = vpop.f32.mrb[0].mxu0
  %v1710 = vadd.f32 0.0, %v1709
  %v1711 = vpop.f32.mrb[0].mxu0
  %1712 = vmatprep.mubr.f32.mxu0 0.0
  %1713 = vmatmul.mubr.f32.gmra.mrb[0].mxu0 %v1641
  %v1714 = vpop.f32.mrb[0].mxu0
  %v1715 = vadd.f32 0.0, %v1714
  %v1716 = vpop.f32.mrb[0].mxu0
  %1717 = vdwg.mxu0
  %v1719 = vsel %vm1251, %v1635, 0
  %v1722 = vsel %vm1251, %v1636, 0
  %1724 = vmatprep.subr.mxu0 0.0
  %1725 = vmatpush1.msra.mxu0 %v1130
  %1726 = vmatprep.subr.mxu0 0.0
  %1727 = vmatpush1.msra.mxu0 %v1131
  %1728 = vmatprep.subr.mxu0 0.0
  %1729 = vmatpush1.msra.mxu0 %v1132
  %1730 = vmatprep.subr.mxu0 0.0
  %1731 = vmatpush1.msra.mxu0 %v1133
  %1732 = vmatprep.subr.mxu0 0.0
  %1733 = vmatpush1.msra.mxu0 0.0
  %1734 = vmatprep.subr.mxu0 0.0
  %1735 = vmatpush1.msra.mxu0 0.0
  %1736 = vmatprep.subr.mxu0 0.0
  %1737 = vmatpush1.msra.mxu0 0.0
  %1738 = vmatprep.subr.mxu0 0.0
  %1739 = vmatpush1.msra.mxu0 0.0
  %1740 = vmatprep.subr.mxu0 0.0
  %1741 = vmatpush1.msra.mxu0 0.0
  %1742 = vmatprep.subr.mxu0 0.0
  %1743 = vmatpush1.msra.mxu0 0.0
  %1744 = vmatprep.subr.mxu0 0.0
  %1745 = vmatpush1.msra.mxu0 0.0
  %1746 = vmatprep.subr.mxu0 0.0
  %1747 = vmatpush1.msra.mxu0 0.0
  %1748 = vmatprep.subr.mxu0 0.0
  %1749 = vmatpush1.msra.mxu0 0.0
  %1750 = vmatprep.subr.mxu0 0.0
  %1751 = vmatpush1.msra.mxu0 0.0
  %1752 = vmatprep.subr.mxu0 0.0
  %1753 = vmatpush1.msra.mxu0 0.0
  %1754 = vmatprep.subr.mxu0 0.0
  %1755 = vmatpush1.msra.mxu0 0.0
  %1756 = vmatprep.subr.mxu0 0.0
  %1757 = vmatpush1.msra.mxu0 0.0
  %1758 = vmatprep.subr.mxu0 0.0
  %1759 = vmatpush1.msra.mxu0 0.0
  %1760 = vmatprep.subr.mxu0 0.0
  %1761 = vmatpush1.msra.mxu0 0.0
  %1762 = vmatprep.subr.mxu0 0.0
  %1763 = vmatpush1.msra.mxu0 0.0
  %1764 = vmatprep.subr.mxu0 0.0
  %1765 = vmatpush1.msra.mxu0 0.0
  %1766 = vmatprep.subr.mxu0 0.0
  %1767 = vmatpush1.msra.mxu0 0.0
  %1768 = vmatprep.subr.mxu0 0.0
  %1769 = vmatpush1.msra.mxu0 0.0
  %1770 = vmatprep.subr.mxu0 0.0
  %1771 = vmatpush1.msra.mxu0 0.0
  %1772 = vmatprep.subr.mxu0 0.0
  %1773 = vmatpush1.msra.mxu0 0.0
  %1774 = vmatprep.subr.mxu0 0.0
  %1775 = vmatpush1.msra.mxu0 0.0
  %1776 = vmatprep.subr.mxu0 0.0
  %1777 = vmatpush1.msra.mxu0 0.0
  %1778 = vmatprep.subr.mxu0 0.0
  %1779 = vmatpush1.msra.mxu0 0.0
  %1780 = vmatprep.subr.mxu0 0.0
  %1781 = vmatpush1.msra.mxu0 0.0
  %1782 = vmatprep.subr.mxu0 0.0
  %1783 = vmatpush1.msra.mxu0 0.0
  %1784 = vmatprep.subr.mxu0 0.0
  %1785 = vmatpush1.msra.mxu0 0.0
  %1786 = vmatprep.subr.mxu0 0.0
  %1787 = vmatpush1.msra.mxu0 0.0
  %1788 = vmatprep.mubr.f32.mxu0 0.0
  %1789 = vmatmul.mubr.f32.gmra.mrb[0].mxu0 %v1719
  %v1790 = vpop.f32.mrb[0].mxu0
  %v1791 = vadd.f32 %v1710, %v1790
  %v1792 = vpop.f32.mrb[0].mxu0
  %1793 = vmatprep.mubr.f32.mxu0 0.0
  %1794 = vmatmul.mubr.f32.gmra.mrb[0].mxu0 %v1722
  %v1795 = vpop.f32.mrb[0].mxu0
  %v1796 = vadd.f32 %v1715, %v1795
  %v1797 = vpop.f32.mrb[0].mxu0
  %1798 = vdwg.mxu0
  %v1799 = vadd.f32 %v1791, %v1144
  %v1800 = vadd.f32 %v1796, %v1149
  %v1801 = vxor.u32 %v1799, 2147483648
  %v1802 = vxor.u32 %v1800, 2147483648
  %v1803 = vmul.f32 %v1801, 1.442695
  %v1804 = vpow.pop %v1803
  %v1805 = vmul.f32 %v1802, 1.442695
  %v1806 = vpow.pop %v1805
  %v1807 = vadd.f32 %v1804, 1.0
  %v1808 = vadd.f32 %v1806, 1.0
  %v1809 = vrcp.pop %v1807
  %v1810 = vmul.f32 1.0, %v1809
  %v1811 = vrcp.pop %v1808
  %v1812 = vmul.f32 1.0, %v1811
  %v1813 = vtanh.pop %v1799
  %v1814 = vtanh.pop %v1800
  %1817 = vrot.lane.b32.xlu0 %v1813, 80
  %v1818 = vpop.permute.xlu0 %1817
  %1819 = vrot.lane.b32.xlu0 %v1814, 80
  %v1820 = vpop.permute.xlu0 %1819
  %v1823 = vmul.f32 %v1810, %v1818
  %v1824 = vmul.f32 %v1812, %v1820
  %1827 = vrot.lane.b32.xlu0 %v1606, 72
  %v1828 = vpop.permute.xlu0 %1827
  %1829 = vrot.lane.b32.xlu0 %v1607, 72
  %v1830 = vpop.permute.xlu0 %1829
  %v1833 = vmul.f32 %v1810, %v1828
  %v1834 = vmul.f32 %v1812, %v1830
  %1837 = vrot.lane.b32.xlu0 %v1833, 56
  %v1838 = vpop.permute.xlu0 %1837
  %1839 = vrot.lane.b32.xlu0 %v1834, 56
  %v1840 = vpop.permute.xlu0 %1839
  %v1843 = vadd.f32 %v1823, %v1838
  %v1844 = vadd.f32 %v1824, %v1840
  %v1845 = vtanh.pop %v1843
  %v1846 = vtanh.pop %v1844
  %1849 = vrot.lane.b32.xlu0 %v1845, 24
  %v1850 = vpop.permute.xlu0 %1849
  %1851 = vrot.lane.b32.xlu0 %v1846, 24
  %v1852 = vpop.permute.xlu0 %1851
  %v1855 = vmul.f32 %v1810, %v1850
  %v1856 = vmul.f32 %v1812, %v1852
  %v1857 = vmul.f32 %v1855, %v1157
  %v1858 = vmul.f32 %v1856, %v1158
  %v1859 = vmul.f32 %v1855, %v1159
  %v1860 = vmul.f32 %v1856, %v1160
  %1863 = vrot.lane.b32.xlu0 %v1857, 104
  %v1864 = vpop.permute.xlu0 %1863
  %1865 = vrot.lane.b32.xlu0 %v1858, 104
  %v1866 = vpop.permute.xlu0 %1865
  %v1869 = vsel %vm150, %v1864, %v1859
  %v1870 = vsel %vm150, %v1866, %v1860
  %s1871 = scalar_lea.vmem %s1, 48
  %v1872 = vld [vmem:[%s1871] sm:$0xff]
  %v1873 = vld [vmem:[%s1871 + $0x8] sm:$0xff]
  %v1875 = vsel %vm1169, %v1869, 0
  %v1878 = vsel %vm1169, %v1870, 0
  %1880 = vmatprep.subr.mxu0 0.0
  %1881 = vmatpush1.msra.mxu0 %v1134
  %1882 = vmatprep.subr.mxu0 0.0
  %1883 = vmatpush1.msra.mxu0 %v1135
  %1884 = vmatprep.subr.mxu0 0.0
  %1885 = vmatpush1.msra.mxu0 %v1136
  %1886 = vmatprep.subr.mxu0 0.0
  %1887 = vmatpush1.msra.mxu0 %v1137
  %1888 = vmatprep.subr.mxu0 0.0
  %1889 = vmatpush1.msra.mxu0 %v1138
  %1890 = vmatprep.subr.mxu0 0.0
  %1891 = vmatpush1.msra.mxu0 %v1139
  %1892 = vmatprep.subr.mxu0 0.0
  %1893 = vmatpush1.msra.mxu0 0.0
  %1894 = vmatprep.subr.mxu0 0.0
  %1895 = vmatpush1.msra.mxu0 0.0
  %1896 = vmatprep.subr.mxu0 0.0
  %1897 = vmatpush1.msra.mxu0 0.0
  %1898 = vmatprep.subr.mxu0 0.0
  %1899 = vmatpush1.msra.mxu0 0.0
  %1900 = vmatprep.subr.mxu0 0.0
  %1901 = vmatpush1.msra.mxu0 0.0
  %1902 = vmatprep.subr.mxu0 0.0
  %1903 = vmatpush1.msra.mxu0 0.0
  %1904 = vmatprep.subr.mxu0 0.0
  %1905 = vmatpush1.msra.mxu0 0.0
  %1906 = vmatprep.subr.mxu0 0.0
  %1907 = vmatpush1.msra.mxu0 0.0
  %1908 = vmatprep.subr.mxu0 0.0
  %1909 = vmatpush1.msra.mxu0 0.0
  %1910 = vmatprep.subr.mxu0 0.0
  %1911 = vmatpush1.msra.mxu0 0.0
  %1912 = vmatprep.subr.mxu0 0.0
  %1913 = vmatpush1.msra.mxu0 0.0
  %1914 = vmatprep.subr.mxu0 0.0
  %1915 = vmatpush1.msra.mxu0 0.0
  %1916 = vmatprep.subr.mxu0 0.0
  %1917 = vmatpush1.msra.mxu0 0.0
  %1918 = vmatprep.subr.mxu0 0.0
  %1919 = vmatpush1.msra.mxu0 0.0
  %1920 = vmatprep.subr.mxu0 0.0
  %1921 = vmatpush1.msra.mxu0 0.0
  %1922 = vmatprep.subr.mxu0 0.0
  %1923 = vmatpush1.msra.mxu0 0.0
  %1924 = vmatprep.subr.mxu0 0.0
  %1925 = vmatpush1.msra.mxu0 0.0
  %1926 = vmatprep.subr.mxu0 0.0
  %1927 = vmatpush1.msra.mxu0 0.0
  %1928 = vmatprep.subr.mxu0 0.0
  %1929 = vmatpush1.msra.mxu0 0.0
  %1930 = vmatprep.subr.mxu0 0.0
  %1931 = vmatpush1.msra.mxu0 0.0
  %1932 = vmatprep.subr.mxu0 0.0
  %1933 = vmatpush1.msra.mxu0 0.0
  %1934 = vmatprep.subr.mxu0 0.0
  %1935 = vmatpush1.msra.mxu0 0.0
  %1936 = vmatprep.subr.mxu0 0.0
  %1937 = vmatpush1.msra.mxu0 0.0
  %1938 = vmatprep.subr.mxu0 0.0
  %1939 = vmatpush1.msra.mxu0 0.0
  %1940 = vmatprep.subr.mxu0 0.0
  %1941 = vmatpush1.msra.mxu0 0.0
  %1942 = vmatprep.subr.mxu0 0.0
  %1943 = vmatpush1.msra.mxu0 0.0
  %1944 = vmatprep.mubr.f32.mxu0 0.0
  %1945 = vmatmul.mubr.f32.gmra.mrb[0].mxu0 %v1875
  %v1946 = vpop.f32.mrb[0].mxu0
  %v1947 = vadd.f32 0.0, %v1946
  %v1948 = vpop.f32.mrb[0].mxu0
  %1949 = vmatprep.mubr.f32.mxu0 0.0
  %1950 = vmatmul.mubr.f32.gmra.mrb[0].mxu0 %v1878
  %v1951 = vpop.f32.mrb[0].mxu0
  %v1952 = vadd.f32 0.0, %v1951
  %v1953 = vpop.f32.mrb[0].mxu0
  %1954 = vdwg.mxu0
  %v1956 = vsel %vm1251, %v1872, 0
  %v1959 = vsel %vm1251, %v1873, 0
  %1961 = vmatprep.subr.mxu0 0.0
  %1962 = vmatpush1.msra.mxu0 %v1130
  %1963 = vmatprep.subr.mxu0 0.0
  %1964 = vmatpush1.msra.mxu0 %v1131
  %1965 = vmatprep.subr.mxu0 0.0
  %1966 = vmatpush1.msra.mxu0 %v1132
  %1967 = vmatprep.subr.mxu0 0.0
  %1968 = vmatpush1.msra.mxu0 %v1133
  %1969 = vmatprep.subr.mxu0 0.0
  %1970 = vmatpush1.msra.mxu0 0.0
  %1971 = vmatprep.subr.mxu0 0.0
  %1972 = vmatpush1.msra.mxu0 0.0
  %1973 = vmatprep.subr.mxu0 0.0
  %1974 = vmatpush1.msra.mxu0 0.0
  %1975 = vmatprep.subr.mxu0 0.0
  %1976 = vmatpush1.msra.mxu0 0.0
  %1977 = vmatprep.subr.mxu0 0.0
  %1978 = vmatpush1.msra.mxu0 0.0
  %1979 = vmatprep.subr.mxu0 0.0
  %1980 = vmatpush1.msra.mxu0 0.0
  %1981 = vmatprep.subr.mxu0 0.0
  %1982 = vmatpush1.msra.mxu0 0.0
  %1983 = vmatprep.subr.mxu0 0.0
  %1984 = vmatpush1.msra.mxu0 0.0
  %1985 = vmatprep.subr.mxu0 0.0
  %1986 = vmatpush1.msra.mxu0 0.0
  %1987 = vmatprep.subr.mxu0 0.0
  %1988 = vmatpush1.msra.mxu0 0.0
  %1989 = vmatprep.subr.mxu0 0.0
  %1990 = vmatpush1.msra.mxu0 0.0
  %1991 = vmatprep.subr.mxu0 0.0
  %1992 = vmatpush1.msra.mxu0 0.0
  %1993 = vmatprep.subr.mxu0 0.0
  %1994 = vmatpush1.msra.mxu0 0.0
  %1995 = vmatprep.subr.mxu0 0.0
  %1996 = vmatpush1.msra.mxu0 0.0
  %1997 = vmatprep.subr.mxu0 0.0
  %1998 = vmatpush1.msra.mxu0 0.0
  %1999 = vmatprep.subr.mxu0 0.0
  %2000 = vmatpush1.msra.mxu0 0.0
  %2001 = vmatprep.subr.mxu0 0.0
  %2002 = vmatpush1.msra.mxu0 0.0
  %2003 = vmatprep.subr.mxu0 0.0
  %2004 = vmatpush1.msra.mxu0 0.0
  %2005 = vmatprep.subr.mxu0 0.0
  %2006 = vmatpush1.msra.mxu0 0.0
  %2007 = vmatprep.subr.mxu0 0.0
  %2008 = vmatpush1.msra.mxu0 0.0
  %2009 = vmatprep.subr.mxu0 0.0
  %2010 = vmatpush1.msra.mxu0 0.0
  %2011 = vmatprep.subr.mxu0 0.0
  %2012 = vmatpush1.msra.mxu0 0.0
  %2013 = vmatprep.subr.mxu0 0.0
  %2014 = vmatpush1.msra.mxu0 0.0
  %2015 = vmatprep.subr.mxu0 0.0
  %2016 = vmatpush1.msra.mxu0 0.0
  %2017 = vmatprep.subr.mxu0 0.0
  %2018 = vmatpush1.msra.mxu0 0.0
  %2019 = vmatprep.subr.mxu0 0.0
  %2020 = vmatpush1.msra.mxu0 0.0
  %2021 = vmatprep.subr.mxu0 0.0
  %2022 = vmatpush1.msra.mxu0 0.0
  %2023 = vmatprep.subr.mxu0 0.0
  %2024 = vmatpush1.msra.mxu0 0.0
  %2025 = vmatprep.mubr.f32.mxu0 0.0
  %2026 = vmatmul.mubr.f32.gmra.mrb[0].mxu0 %v1956
  %v2027 = vpop.f32.mrb[0].mxu0
  %v2028 = vadd.f32 %v1947, %v2027
  %v2029 = vpop.f32.mrb[0].mxu0
  %2030 = vmatprep.mubr.f32.mxu0 0.0
  %2031 = vmatmul.mubr.f32.gmra.mrb[0].mxu0 %v1959
  %v2032 = vpop.f32.mrb[0].mxu0
  %v2033 = vadd.f32 %v1952, %v2032
  %v2034 = vpop.f32.mrb[0].mxu0
  %2035 = vdwg.mxu0
  %v2036 = vadd.f32 %v2028, %v1144
  %v2037 = vadd.f32 %v2033, %v1149
  %v2038 = vxor.u32 %v2036, 2147483648
  %v2039 = vxor.u32 %v2037, 2147483648
  %v2040 = vmul.f32 %v2038, 1.442695
  %v2041 = vpow.pop %v2040
  %v2042 = vmul.f32 %v2039, 1.442695
  %v2043 = vpow.pop %v2042
  %v2044 = vadd.f32 %v2041, 1.0
  %v2045 = vadd.f32 %v2043, 1.0
  %v2046 = vrcp.pop %v2044
  %v2047 = vmul.f32 1.0, %v2046
  %v2048 = vrcp.pop %v2045
  %v2049 = vmul.f32 1.0, %v2048
  %v2050 = vtanh.pop %v2036
  %v2051 = vtanh.pop %v2037
  %2054 = vrot.lane.b32.xlu0 %v2050, 80
  %v2055 = vpop.permute.xlu0 %2054
  %2056 = vrot.lane.b32.xlu0 %v2051, 80
  %v2057 = vpop.permute.xlu0 %2056
  %v2060 = vmul.f32 %v2047, %v2055
  %v2061 = vmul.f32 %v2049, %v2057
  %2064 = vrot.lane.b32.xlu0 %v1843, 72
  %v2065 = vpop.permute.xlu0 %2064
  %2066 = vrot.lane.b32.xlu0 %v1844, 72
  %v2067 = vpop.permute.xlu0 %2066
  %v2070 = vmul.f32 %v2047, %v2065
  %v2071 = vmul.f32 %v2049, %v2067
  %2074 = vrot.lane.b32.xlu0 %v2070, 56
  %v2075 = vpop.permute.xlu0 %2074
  %2076 = vrot.lane.b32.xlu0 %v2071, 56
  %v2077 = vpop.permute.xlu0 %2076
  %v2080 = vadd.f32 %v2060, %v2075
  %v2081 = vadd.f32 %v2061, %v2077
  %v2082 = vtanh.pop %v2080
  %v2083 = vtanh.pop %v2081
  %2086 = vrot.lane.b32.xlu0 %v2082, 24
  %v2087 = vpop.permute.xlu0 %2086
  %2088 = vrot.lane.b32.xlu0 %v2083, 24
  %v2089 = vpop.permute.xlu0 %2088
  %v2092 = vmul.f32 %v2047, %v2087
  %v2093 = vmul.f32 %v2049, %v2089
  %v2094 = vmul.f32 %v2092, %v1157
  %v2095 = vmul.f32 %v2093, %v1158
  %v2096 = vmul.f32 %v2092, %v1159
  %v2097 = vmul.f32 %v2093, %v1160
  %2100 = vrot.lane.b32.xlu0 %v2094, 104
  %v2101 = vpop.permute.xlu0 %2100
  %2102 = vrot.lane.b32.xlu0 %v2095, 104
  %v2103 = vpop.permute.xlu0 %2102
  %v2106 = vsel %vm150, %v2101, %v2096
  %v2107 = vsel %vm150, %v2103, %v2097
  %s2108 = scalar_lea.vmem %s1, 64
  %v2109 = vld [vmem:[%s2108] sm:$0xff]
  %v2110 = vld [vmem:[%s2108 + $0x8] sm:$0xff]
  %v2112 = vsel %vm1169, %v2106, 0
  %v2115 = vsel %vm1169, %v2107, 0
  %2117 = vmatprep.subr.mxu0 0.0
  %2118 = vmatpush1.msra.mxu0 %v1134
  %2119 = vmatprep.subr.mxu0 0.0
  %2120 = vmatpush1.msra.mxu0 %v1135
  %2121 = vmatprep.subr.mxu0 0.0
  %2122 = vmatpush1.msra.mxu0 %v1136
  %2123 = vmatprep.subr.mxu0 0.0
  %2124 = vmatpush1.msra.mxu0 %v1137
  %2125 = vmatprep.subr.mxu0 0.0
  %2126 = vmatpush1.msra.mxu0 %v1138
  %2127 = vmatprep.subr.mxu0 0.0
  %2128 = vmatpush1.msra.mxu0 %v1139
  %2129 = vmatprep.subr.mxu0 0.0
  %2130 = vmatpush1.msra.mxu0 0.0
  %2131 = vmatprep.subr.mxu0 0.0
  %2132 = vmatpush1.msra.mxu0 0.0
  %2133 = vmatprep.subr.mxu0 0.0
  %2134 = vmatpush1.msra.mxu0 0.0
  %2135 = vmatprep.subr.mxu0 0.0
  %2136 = vmatpush1.msra.mxu0 0.0
  %2137 = vmatprep.subr.mxu0 0.0
  %2138 = vmatpush1.msra.mxu0 0.0
  %2139 = vmatprep.subr.mxu0 0.0
  %2140 = vmatpush1.msra.mxu0 0.0
  %2141 = vmatprep.subr.mxu0 0.0
  %2142 = vmatpush1.msra.mxu0 0.0
  %2143 = vmatprep.subr.mxu0 0.0
  %2144 = vmatpush1.msra.mxu0 0.0
  %2145 = vmatprep.subr.mxu0 0.0
  %2146 = vmatpush1.msra.mxu0 0.0
  %2147 = vmatprep.subr.mxu0 0.0
  %2148 = vmatpush1.msra.mxu0 0.0
  %2149 = vmatprep.subr.mxu0 0.0
  %2150 = vmatpush1.msra.mxu0 0.0
  %2151 = vmatprep.subr.mxu0 0.0
  %2152 = vmatpush1.msra.mxu0 0.0
  %2153 = vmatprep.subr.mxu0 0.0
  %2154 = vmatpush1.msra.mxu0 0.0
  %2155 = vmatprep.subr.mxu0 0.0
  %2156 = vmatpush1.msra.mxu0 0.0
  %2157 = vmatprep.subr.mxu0 0.0
  %2158 = vmatpush1.msra.mxu0 0.0
  %2159 = vmatprep.subr.mxu0 0.0
  %2160 = vmatpush1.msra.mxu0 0.0
  %2161 = vmatprep.subr.mxu0 0.0
  %2162 = vmatpush1.msra.mxu0 0.0
  %2163 = vmatprep.subr.mxu0 0.0
  %2164 = vmatpush1.msra.mxu0 0.0
  %2165 = vmatprep.subr.mxu0 0.0
  %2166 = vmatpush1.msra.mxu0 0.0
  %2167 = vmatprep.subr.mxu0 0.0
  %2168 = vmatpush1.msra.mxu0 0.0
  %2169 = vmatprep.subr.mxu0 0.0
  %2170 = vmatpush1.msra.mxu0 0.0
  %2171 = vmatprep.subr.mxu0 0.0
  %2172 = vmatpush1.msra.mxu0 0.0
  %2173 = vmatprep.subr.mxu0 0.0
  %2174 = vmatpush1.msra.mxu0 0.0
  %2175 = vmatprep.subr.mxu0 0.0
  %2176 = vmatpush1.msra.mxu0 0.0
  %2177 = vmatprep.subr.mxu0 0.0
  %2178 = vmatpush1.msra.mxu0 0.0
  %2179 = vmatprep.subr.mxu0 0.0
  %2180 = vmatpush1.msra.mxu0 0.0
  %2181 = vmatprep.mubr.f32.mxu0 0.0
  %2182 = vmatmul.mubr.f32.gmra.mrb[0].mxu0 %v2112
  %v2183 = vpop.f32.mrb[0].mxu0
  %v2184 = vadd.f32 0.0, %v2183
  %v2185 = vpop.f32.mrb[0].mxu0
  %2186 = vmatprep.mubr.f32.mxu0 0.0
  %2187 = vmatmul.mubr.f32.gmra.mrb[0].mxu0 %v2115
  %v2188 = vpop.f32.mrb[0].mxu0
  %v2189 = vadd.f32 0.0, %v2188
  %v2190 = vpop.f32.mrb[0].mxu0
  %2191 = vdwg.mxu0
  %v2193 = vsel %vm1251, %v2109, 0
  %v2196 = vsel %vm1251, %v2110, 0
  %2198 = vmatprep.subr.mxu0 0.0
  %2199 = vmatpush1.msra.mxu0 %v1130
  %2200 = vmatprep.subr.mxu0 0.0
  %2201 = vmatpush1.msra.mxu0 %v1131
  %2202 = vmatprep.subr.mxu0 0.0
  %2203 = vmatpush1.msra.mxu0 %v1132
  %2204 = vmatprep.subr.mxu0 0.0
  %2205 = vmatpush1.msra.mxu0 %v1133
  %2206 = vmatprep.subr.mxu0 0.0
  %2207 = vmatpush1.msra.mxu0 0.0
  %2208 = vmatprep.subr.mxu0 0.0
  %2209 = vmatpush1.msra.mxu0 0.0
  %2210 = vmatprep.subr.mxu0 0.0
  %2211 = vmatpush1.msra.mxu0 0.0
  %2212 = vmatprep.subr.mxu0 0.0
  %2213 = vmatpush1.msra.mxu0 0.0
  %2214 = vmatprep.subr.mxu0 0.0
  %2215 = vmatpush1.msra.mxu0 0.0
  %2216 = vmatprep.subr.mxu0 0.0
  %2217 = vmatpush1.msra.mxu0 0.0
  %2218 = vmatprep.subr.mxu0 0.0
  %2219 = vmatpush1.msra.mxu0 0.0
  %2220 = vmatprep.subr.mxu0 0.0
  %2221 = vmatpush1.msra.mxu0 0.0
  %2222 = vmatprep.subr.mxu0 0.0
  %2223 = vmatpush1.msra.mxu0 0.0
  %2224 = vmatprep.subr.mxu0 0.0
  %2225 = vmatpush1.msra.mxu0 0.0
  %2226 = vmatprep.subr.mxu0 0.0
  %2227 = vmatpush1.msra.mxu0 0.0
  %2228 = vmatprep.subr.mxu0 0.0
  %2229 = vmatpush1.msra.mxu0 0.0
  %2230 = vmatprep.subr.mxu0 0.0
  %2231 = vmatpush1.msra.mxu0 0.0
  %2232 = vmatprep.subr.mxu0 0.0
  %2233 = vmatpush1.msra.mxu0 0.0
  %2234 = vmatprep.subr.mxu0 0.0
  %2235 = vmatpush1.msra.mxu0 0.0
  %2236 = vmatprep.subr.mxu0 0.0
  %2237 = vmatpush1.msra.mxu0 0.0
  %2238 = vmatprep.subr.mxu0 0.0
  %2239 = vmatpush1.msra.mxu0 0.0
  %2240 = vmatprep.subr.mxu0 0.0
  %2241 = vmatpush1.msra.mxu0 0.0
  %2242 = vmatprep.subr.mxu0 0.0
  %2243 = vmatpush1.msra.mxu0 0.0
  %2244 = vmatprep.subr.mxu0 0.0
  %2245 = vmatpush1.msra.mxu0 0.0
  %2246 = vmatprep.subr.mxu0 0.0
  %2247 = vmatpush1.msra.mxu0 0.0
  %2248 = vmatprep.subr.mxu0 0.0
  %2249 = vmatpush1.msra.mxu0 0.0
  %2250 = vmatprep.subr.mxu0 0.0
  %2251 = vmatpush1.msra.mxu0 0.0
  %2252 = vmatprep.subr.mxu0 0.0
  %2253 = vmatpush1.msra.mxu0 0.0
  %2254 = vmatprep.subr.mxu0 0.0
  %2255 = vmatpush1.msra.mxu0 0.0
  %2256 = vmatprep.subr.mxu0 0.0
  %2257 = vmatpush1.msra.mxu0 0.0
  %2258 = vmatprep.subr.mxu0 0.0
  %2259 = vmatpush1.msra.mxu0 0.0
  %2260 = vmatprep.subr.mxu0 0.0
  %2261 = vmatpush1.msra.mxu0 0.0
  %2262 = vmatprep.mubr.f32.mxu0 0.0
  %2263 = vmatmul.mubr.f32.gmra.mrb[0].mxu0 %v2193
  %v2264 = vpop.f32.mrb[0].mxu0
  %v2265 = vadd.f32 %v2184, %v2264
  %v2266 = vpop.f32.mrb[0].mxu0
  %2267 = vmatprep.mubr.f32.mxu0 0.0
  %2268 = vmatmul.mubr.f32.gmra.mrb[0].mxu0 %v2196
  %v2269 = vpop.f32.mrb[0].mxu0
  %v2270 = vadd.f32 %v2189, %v2269
  %v2271 = vpop.f32.mrb[0].mxu0
  %2272 = vdwg.mxu0
  %v2273 = vadd.f32 %v2265, %v1144
  %v2274 = vadd.f32 %v2270, %v1149
  %v2275 = vxor.u32 %v2273, 2147483648
  %v2276 = vxor.u32 %v2274, 2147483648
  %v2277 = vmul.f32 %v2275, 1.442695
  %v2278 = vpow.pop %v2277
  %v2279 = vmul.f32 %v2276, 1.442695
  %v2280 = vpow.pop %v2279
  %v2281 = vadd.f32 %v2278, 1.0
  %v2282 = vadd.f32 %v2280, 1.0
  %v2283 = vrcp.pop %v2281
  %v2284 = vmul.f32 1.0, %v2283
  %v2285 = vrcp.pop %v2282
  %v2286 = vmul.f32 1.0, %v2285
  %v2287 = vtanh.pop %v2273
  %v2288 = vtanh.pop %v2274
  %2291 = vrot.lane.b32.xlu0 %v2287, 80
  %v2292 = vpop.permute.xlu0 %2291
  %2293 = vrot.lane.b32.xlu0 %v2288, 80
  %v2294 = vpop.permute.xlu0 %2293
  %v2297 = vmul.f32 %v2284, %v2292
  %v2298 = vmul.f32 %v2286, %v2294
  %2301 = vrot.lane.b32.xlu0 %v2080, 72
  %v2302 = vpop.permute.xlu0 %2301
  %2303 = vrot.lane.b32.xlu0 %v2081, 72
  %v2304 = vpop.permute.xlu0 %2303
  %v2307 = vmul.f32 %v2284, %v2302
  %v2308 = vmul.f32 %v2286, %v2304
  %2311 = vrot.lane.b32.xlu0 %v2307, 56
  %v2312 = vpop.permute.xlu0 %2311
  %2313 = vrot.lane.b32.xlu0 %v2308, 56
  %v2314 = vpop.permute.xlu0 %2313
  %v2317 = vadd.f32 %v2297, %v2312
  %v2318 = vadd.f32 %v2298, %v2314
  %v2319 = vtanh.pop %v2317
  %v2320 = vtanh.pop %v2318
  %2323 = vrot.lane.b32.xlu0 %v2319, 24
  %v2324 = vpop.permute.xlu0 %2323
  %2325 = vrot.lane.b32.xlu0 %v2320, 24
  %v2326 = vpop.permute.xlu0 %2325
  %v2329 = vmul.f32 %v2284, %v2324
  %v2330 = vmul.f32 %v2286, %v2326
  %v2331 = vld [vmem:[%s2] sm:$0xff]
  %2333 = vrot.lane.b32.xlu0 %v1129, 104
  %v2334 = vpop.permute.xlu0 %2333
  %2337 = vrot.lane.b32.xlu0 %v2330, 24
  %v2338 = vpop.permute.xlu0 %2337
  %2341 = vrot.lane.b32.xlu0 %v2331, 72
  %v2342 = vpop.permute.xlu0 %2341
  %v2344 = vsel %vm150, %v2334, %v2329
  %v2345 = vsel %vm1169, %v2344, %v2338
  %vm2346 = vcmask 588800
  %v2347 = vsel %vm2346, %v2345, %v2342
  %v2348 = vld [vmem:[%s11] sm:$0xff]
  %v2349 = vld [vmem:[%s11 + $0x8] sm:$0xff]
  %v2350 = vld [vmem:[%s11 + $0x10] sm:$0xff]
  %v2351 = vld [vmem:[%s11 + $0x18] sm:$0xff]
  %v2352 = vld [vmem:[%s11 + $0x20] sm:$0xff]
  %v2353 = vld [vmem:[%s11 + $0x28] sm:$0xff]
  %v2354 = vld [vmem:[%s11 + $0x30] sm:$0xff]
  %v2355 = vld [vmem:[%s11 + $0x38] sm:$0xff]
  %v2356 = vld [vmem:[%s11 + $0x40] sm:$0xff]
  %v2357 = vld [vmem:[%s11 + $0x48] sm:$0xff]
  %v2358 = vld [vmem:[%s11 + $0x50] sm:$0xf]
  %v2359 = vld [vmem:[%s12] sm:$0x1]
  %v2361 = vlaneseq
  %v2362 = vshrl.u32 %v2361, 7
  %v2363 = vsub.s32 0, %v2362
  %v2364 = vrot.slane %v2359, %v2363
  %vm2366 = vcmask 687104
  %v2368 = vsel %vm2366, %v2347, 0
  %vm2370 = vcmask 1043456
  %v2372 = vsel %vm2370, %v2358, 0
  %2374 = vmatprep.subr.mxu0 0.0
  %2375 = vmatpush1.msra.mxu0 %v2348
  %2376 = vmatprep.subr.mxu0 0.0
  %2377 = vmatpush1.msra.mxu0 %v2349
  %2378 = vmatprep.subr.mxu0 0.0
  %2379 = vmatpush1.msra.mxu0 %v2350
  %2380 = vmatprep.subr.mxu0 0.0
  %2381 = vmatpush1.msra.mxu0 %v2351
  %2382 = vmatprep.subr.mxu0 0.0
  %2383 = vmatpush1.msra.mxu0 %v2352
  %2384 = vmatprep.subr.mxu0 0.0
  %2385 = vmatpush1.msra.mxu0 %v2353
  %2386 = vmatprep.subr.mxu0 0.0
  %2387 = vmatpush1.msra.mxu0 %v2354
  %2388 = vmatprep.subr.mxu0 0.0
  %2389 = vmatpush1.msra.mxu0 %v2355
  %2390 = vmatprep.subr.mxu0 0.0
  %2391 = vmatpush1.msra.mxu0 %v2356
  %2392 = vmatprep.subr.mxu0 0.0
  %2393 = vmatpush1.msra.mxu0 %v2357
  %2394 = vmatprep.subr.mxu0 0.0
  %2395 = vmatpush1.msra.mxu0 %v2372
  %2396 = vmatprep.subr.mxu0 0.0
  %2397 = vmatpush1.msra.mxu0 0.0
  %2398 = vmatprep.subr.mxu0 0.0
  %2399 = vmatpush1.msra.mxu0 0.0
  %2400 = vmatprep.subr.mxu0 0.0
  %2401 = vmatpush1.msra.mxu0 0.0
  %2402 = vmatprep.subr.mxu0 0.0
  %2403 = vmatpush1.msra.mxu0 0.0
  %2404 = vmatprep.subr.mxu0 0.0
  %2405 = vmatpush1.msra.mxu0 0.0
  %2406 = vmatprep.subr.mxu0 0.0
  %2407 = vmatpush1.msra.mxu0 0.0
  %2408 = vmatprep.subr.mxu0 0.0
  %2409 = vmatpush1.msra.mxu0 0.0
  %2410 = vmatprep.subr.mxu0 0.0
  %2411 = vmatpush1.msra.mxu0 0.0
  %2412 = vmatprep.subr.mxu0 0.0
  %2413 = vmatpush1.msra.mxu0 0.0
  %2414 = vmatprep.subr.mxu0 0.0
  %2415 = vmatpush1.msra.mxu0 0.0
  %2416 = vmatprep.subr.mxu0 0.0
  %2417 = vmatpush1.msra.mxu0 0.0
  %2418 = vmatprep.subr.mxu0 0.0
  %2419 = vmatpush1.msra.mxu0 0.0
  %2420 = vmatprep.subr.mxu0 0.0
  %2421 = vmatpush1.msra.mxu0 0.0
  %2422 = vmatprep.subr.mxu0 0.0
  %2423 = vmatpush1.msra.mxu0 0.0
  %2424 = vmatprep.subr.mxu0 0.0
  %2425 = vmatpush1.msra.mxu0 0.0
  %2426 = vmatprep.subr.mxu0 0.0
  %2427 = vmatpush1.msra.mxu0 0.0
  %2428 = vmatprep.subr.mxu0 0.0
  %2429 = vmatpush1.msra.mxu0 0.0
  %2430 = vmatprep.subr.mxu0 0.0
  %2431 = vmatpush1.msra.mxu0 0.0
  %2432 = vmatprep.subr.mxu0 0.0
  %2433 = vmatpush1.msra.mxu0 0.0
  %2434 = vmatprep.subr.mxu0 0.0
  %2435 = vmatpush1.msra.mxu0 0.0
  %2436 = vmatprep.subr.mxu0 0.0
  %2437 = vmatpush1.msra.mxu0 0.0
  %2438 = vmatprep.mubr.f32.mxu0 0.0
  %2439 = vmatmul.mubr.f32.gmra.mrb[0].mxu0 %v2368
  %v2440 = vpop.f32.mrb[0].mxu0
  %v2441 = vadd.f32 %v2364, %v2440
  %v2442 = vpop.f32.mrb[0].mxu0
  %2443 = vdwg.mxu0
  %v2444 = vld [vmem:[%s3] sm:$0xff]
  %v2445 = vld [vmem:[%s13] sm:$0xff]
  %v2446 = vld [vmem:[%s13 + $0x8] sm:$0xff]
  %v2447 = vld [vmem:[%s13 + $0x10] sm:$0xff]
  %v2448 = vld [vmem:[%s13 + $0x18] sm:$0xff]
  %v2450 = vsel %vm1251, %v2441, 0
  %2452 = vmatprep.subr.mxu0 0.0
  %2453 = vmatpush1.msra.mxu0 %v2445
  %2454 = vmatprep.subr.mxu0 0.0
  %2455 = vmatpush1.msra.mxu0 %v2446
  %2456 = vmatprep.subr.mxu0 0.0
  %2457 = vmatpush1.msra.mxu0 %v2447
  %2458 = vmatprep.subr.mxu0 0.0
  %2459 = vmatpush1.msra.mxu0 %v2448
  %2460 = vmatprep.subr.mxu0 0.0
  %2461 = vmatpush1.msra.mxu0 0.0
  %2462 = vmatprep.subr.mxu0 0.0
  %2463 = vmatpush1.msra.mxu0 0.0
  %2464 = vmatprep.subr.mxu0 0.0
  %2465 = vmatpush1.msra.mxu0 0.0
  %2466 = vmatprep.subr.mxu0 0.0
  %2467 = vmatpush1.msra.mxu0 0.0
  %2468 = vmatprep.subr.mxu0 0.0
  %2469 = vmatpush1.msra.mxu0 0.0
  %2470 = vmatprep.subr.mxu0 0.0
  %2471 = vmatpush1.msra.mxu0 0.0
  %2472 = vmatprep.subr.mxu0 0.0
  %2473 = vmatpush1.msra.mxu0 0.0
  %2474 = vmatprep.subr.mxu0 0.0
  %2475 = vmatpush1.msra.mxu0 0.0
  %2476 = vmatprep.subr.mxu0 0.0
  %2477 = vmatpush1.msra.mxu0 0.0
  %2478 = vmatprep.subr.mxu0 0.0
  %2479 = vmatpush1.msra.mxu0 0.0
  %2480 = vmatprep.subr.mxu0 0.0
  %2481 = vmatpush1.msra.mxu0 0.0
  %2482 = vmatprep.subr.mxu0 0.0
  %2483 = vmatpush1.msra.mxu0 0.0
  %2484 = vmatprep.subr.mxu0 0.0
  %2485 = vmatpush1.msra.mxu0 0.0
  %2486 = vmatprep.subr.mxu0 0.0
  %2487 = vmatpush1.msra.mxu0 0.0
  %2488 = vmatprep.subr.mxu0 0.0
  %2489 = vmatpush1.msra.mxu0 0.0
  %2490 = vmatprep.subr.mxu0 0.0
  %2491 = vmatpush1.msra.mxu0 0.0
  %2492 = vmatprep.subr.mxu0 0.0
  %2493 = vmatpush1.msra.mxu0 0.0
  %2494 = vmatprep.subr.mxu0 0.0
  %2495 = vmatpush1.msra.mxu0 0.0
  %2496 = vmatprep.subr.mxu0 0.0
  %2497 = vmatpush1.msra.mxu0 0.0
  %2498 = vmatprep.subr.mxu0 0.0
  %2499 = vmatpush1.msra.mxu0 0.0
  %2500 = vmatprep.subr.mxu0 0.0
  %2501 = vmatpush1.msra.mxu0 0.0
  %2502 = vmatprep.subr.mxu0 0.0
  %2503 = vmatpush1.msra.mxu0 0.0
  %2504 = vmatprep.subr.mxu0 0.0
  %2505 = vmatpush1.msra.mxu0 0.0
  %2506 = vmatprep.subr.mxu0 0.0
  %2507 = vmatpush1.msra.mxu0 0.0
  %2508 = vmatprep.subr.mxu0 0.0
  %2509 = vmatpush1.msra.mxu0 0.0
  %2510 = vmatprep.subr.mxu0 0.0
  %2511 = vmatpush1.msra.mxu0 0.0
  %2512 = vmatprep.subr.mxu0 0.0
  %2513 = vmatpush1.msra.mxu0 0.0
  %2514 = vmatprep.subr.mxu0 0.0
  %2515 = vmatpush1.msra.mxu0 0.0
  %2516 = vmatprep.mubr.f32.mxu0 0.0
  %2517 = vmatmul.mubr.f32.gmra.mrb[0].mxu0 %v2450
  %v2518 = vpop.f32.mrb[0].mxu0
  %v2519 = vadd.f32 0.0, %v2518
  %v2520 = vpop.f32.mrb[0].mxu0
  %2521 = vdwg.mxu0
  %v2522 = vld [vmem:[%s14] sm:$0x1]
  %v2524 = vlaneseq
  %v2525 = vshrl.u32 %v2524, 7
  %v2526 = vsub.s32 0, %v2525
  %v2527 = vrot.slane %v2522, %v2526
  %vm2529 = vcmask 64512
  %v2531 = vsel %vm2529, %v2444, 0
  %2533 = vmatprep.subr.mxu0 0.0
  %2534 = vmatpush1.msra.mxu0 %v2519
  %2535 = vmatprep.subr.mxu0 0.0
  %2536 = vmatpush1.msra.mxu0 0.0
  %2537 = vmatprep.subr.mxu0 0.0
  %2538 = vmatpush1.msra.mxu0 0.0
  %2539 = vmatprep.subr.mxu0 0.0
  %2540 = vmatpush1.msra.mxu0 0.0
  %2541 = vmatprep.subr.mxu0 0.0
  %2542 = vmatpush1.msra.mxu0 0.0
  %2543 = vmatprep.subr.mxu0 0.0
  %2544 = vmatpush1.msra.mxu0 0.0
  %2545 = vmatprep.subr.mxu0 0.0
  %2546 = vmatpush1.msra.mxu0 0.0
  %2547 = vmatprep.subr.mxu0 0.0
  %2548 = vmatpush1.msra.mxu0 0.0
  %2549 = vmatprep.subr.mxu0 0.0
  %2550 = vmatpush1.msra.mxu0 0.0
  %2551 = vmatprep.subr.mxu0 0.0
  %2552 = vmatpush1.msra.mxu0 0.0
  %2553 = vmatprep.subr.mxu0 0.0
  %2554 = vmatpush1.msra.mxu0 0.0
  %2555 = vmatprep.subr.mxu0 0.0
  %2556 = vmatpush1.msra.mxu0 0.0
  %2557 = vmatprep.subr.mxu0 0.0
  %2558 = vmatpush1.msra.mxu0 0.0
  %2559 = vmatprep.subr.mxu0 0.0
  %2560 = vmatpush1.msra.mxu0 0.0
  %2561 = vmatprep.subr.mxu0 0.0
  %2562 = vmatpush1.msra.mxu0 0.0
  %2563 = vmatprep.subr.mxu0 0.0
  %2564 = vmatpush1.msra.mxu0 0.0
  %2565 = vmatprep.subr.mxu0 0.0
  %2566 = vmatpush1.msra.mxu0 0.0
  %2567 = vmatprep.subr.mxu0 0.0
  %2568 = vmatpush1.msra.mxu0 0.0
  %2569 = vmatprep.subr.mxu0 0.0
  %2570 = vmatpush1.msra.mxu0 0.0
  %2571 = vmatprep.subr.mxu0 0.0
  %2572 = vmatpush1.msra.mxu0 0.0
  %2573 = vmatprep.subr.mxu0 0.0
  %2574 = vmatpush1.msra.mxu0 0.0
  %2575 = vmatprep.subr.mxu0 0.0
  %2576 = vmatpush1.msra.mxu0 0.0
  %2577 = vmatprep.subr.mxu0 0.0
  %2578 = vmatpush1.msra.mxu0 0.0
  %2579 = vmatprep.subr.mxu0 0.0
  %2580 = vmatpush1.msra.mxu0 0.0
  %2581 = vmatprep.subr.mxu0 0.0
  %2582 = vmatpush1.msra.mxu0 0.0
  %2583 = vmatprep.subr.mxu0 0.0
  %2584 = vmatpush1.msra.mxu0 0.0
  %2585 = vmatprep.subr.mxu0 0.0
  %2586 = vmatpush1.msra.mxu0 0.0
  %2587 = vmatprep.subr.mxu0 0.0
  %2588 = vmatpush1.msra.mxu0 0.0
  %2589 = vmatprep.subr.mxu0 0.0
  %2590 = vmatpush1.msra.mxu0 0.0
  %2591 = vmatprep.subr.mxu0 0.0
  %2592 = vmatpush1.msra.mxu0 0.0
  %2593 = vmatprep.subr.mxu0 0.0
  %2594 = vmatpush1.msra.mxu0 0.0
  %2595 = vmatprep.subr.mxu0 0.0
  %2596 = vmatpush1.msra.mxu0 0.0
  %2597 = vmatprep.mubr.f32.mxu0 0.0
  %2598 = vmatmul.mubr.f32.gmra.mrb[0].mxu0 %v2531
  %v2599 = vpop.f32.mrb[0].mxu0
  %v2600 = vadd.f32 %v2527, %v2599
  %v2601 = vpop.f32.mrb[0].mxu0
  %2602 = vdwg.mxu0
  %v2603 = vmax.f32 %v2600, 0.0
  %s2604 = scalar_lea.vmem %s13, 32
  %v2605 = vld [vmem:[%s2604] sm:$0xff]
  %v2606 = vld [vmem:[%s2604 + $0x8] sm:$0xff]
  %v2607 = vld [vmem:[%s2604 + $0x10] sm:$0xff]
  %v2608 = vld [vmem:[%s2604 + $0x18] sm:$0xff]
  %v2610 = vsel %vm1251, %v2603, 0
  %2612 = vmatprep.subr.mxu0 0.0
  %2613 = vmatpush1.msra.mxu0 %v2605
  %2614 = vmatprep.subr.mxu0 0.0
  %2615 = vmatpush1.msra.mxu0 %v2606
  %2616 = vmatprep.subr.mxu0 0.0
  %2617 = vmatpush1.msra.mxu0 %v2607
  %2618 = vmatprep.subr.mxu0 0.0
  %2619 = vmatpush1.msra.mxu0 %v2608
  %2620 = vmatprep.subr.mxu0 0.0
  %2621 = vmatpush1.msra.mxu0 0.0
  %2622 = vmatprep.subr.mxu0 0.0
  %2623 = vmatpush1.msra.mxu0 0.0
  %2624 = vmatprep.subr.mxu0 0.0
  %2625 = vmatpush1.msra.mxu0 0.0
  %2626 = vmatprep.subr.mxu0 0.0
  %2627 = vmatpush1.msra.mxu0 0.0
  %2628 = vmatprep.subr.mxu0 0.0
  %2629 = vmatpush1.msra.mxu0 0.0
  %2630 = vmatprep.subr.mxu0 0.0
  %2631 = vmatpush1.msra.mxu0 0.0
  %2632 = vmatprep.subr.mxu0 0.0
  %2633 = vmatpush1.msra.mxu0 0.0
  %2634 = vmatprep.subr.mxu0 0.0
  %2635 = vmatpush1.msra.mxu0 0.0
  %2636 = vmatprep.subr.mxu0 0.0
  %2637 = vmatpush1.msra.mxu0 0.0
  %2638 = vmatprep.subr.mxu0 0.0
  %2639 = vmatpush1.msra.mxu0 0.0
  %2640 = vmatprep.subr.mxu0 0.0
  %2641 = vmatpush1.msra.mxu0 0.0
  %2642 = vmatprep.subr.mxu0 0.0
  %2643 = vmatpush1.msra.mxu0 0.0
  %2644 = vmatprep.subr.mxu0 0.0
  %2645 = vmatpush1.msra.mxu0 0.0
  %2646 = vmatprep.subr.mxu0 0.0
  %2647 = vmatpush1.msra.mxu0 0.0
  %2648 = vmatprep.subr.mxu0 0.0
  %2649 = vmatpush1.msra.mxu0 0.0
  %2650 = vmatprep.subr.mxu0 0.0
  %2651 = vmatpush1.msra.mxu0 0.0
  %2652 = vmatprep.subr.mxu0 0.0
  %2653 = vmatpush1.msra.mxu0 0.0
  %2654 = vmatprep.subr.mxu0 0.0
  %2655 = vmatpush1.msra.mxu0 0.0
  %2656 = vmatprep.subr.mxu0 0.0
  %2657 = vmatpush1.msra.mxu0 0.0
  %2658 = vmatprep.subr.mxu0 0.0
  %2659 = vmatpush1.msra.mxu0 0.0
  %2660 = vmatprep.subr.mxu0 0.0
  %2661 = vmatpush1.msra.mxu0 0.0
  %2662 = vmatprep.subr.mxu0 0.0
  %2663 = vmatpush1.msra.mxu0 0.0
  %2664 = vmatprep.subr.mxu0 0.0
  %2665 = vmatpush1.msra.mxu0 0.0
  %2666 = vmatprep.subr.mxu0 0.0
  %2667 = vmatpush1.msra.mxu0 0.0
  %2668 = vmatprep.subr.mxu0 0.0
  %2669 = vmatpush1.msra.mxu0 0.0
  %2670 = vmatprep.subr.mxu0 0.0
  %2671 = vmatpush1.msra.mxu0 0.0
  %2672 = vmatprep.subr.mxu0 0.0
  %2673 = vmatpush1.msra.mxu0 0.0
  %2674 = vmatprep.subr.mxu0 0.0
  %2675 = vmatpush1.msra.mxu0 0.0
  %2676 = vmatprep.mubr.f32.mxu0 0.0
  %2677 = vmatmul.mubr.f32.gmra.mrb[0].mxu0 %v2610
  %v2678 = vpop.f32.mrb[0].mxu0
  %v2679 = vadd.f32 0.0, %v2678
  %v2680 = vpop.f32.mrb[0].mxu0
  %2681 = vdwg.mxu0
  %s2682 = scalar_lea.vmem %s14, 1
  %v2683 = vld [vmem:[%s2682] sm:$0x1]
  %v2685 = vlaneseq
  %v2686 = vshrl.u32 %v2685, 7
  %v2687 = vsub.s32 0, %v2686
  %v2688 = vrot.slane %v2683, %v2687
  %2690 = vmatprep.subr.mxu0 0.0
  %2691 = vmatpush1.msra.mxu0 %v2679
  %2692 = vmatprep.subr.mxu0 0.0
  %2693 = vmatpush1.msra.mxu0 0.0
  %2694 = vmatprep.subr.mxu0 0.0
  %2695 = vmatpush1.msra.mxu0 0.0
  %2696 = vmatprep.subr.mxu0 0.0
  %2697 = vmatpush1.msra.mxu0 0.0
  %2698 = vmatprep.subr.mxu0 0.0
  %2699 = vmatpush1.msra.mxu0 0.0
  %2700 = vmatprep.subr.mxu0 0.0
  %2701 = vmatpush1.msra.mxu0 0.0
  %2702 = vmatprep.subr.mxu0 0.0
  %2703 = vmatpush1.msra.mxu0 0.0
  %2704 = vmatprep.subr.mxu0 0.0
  %2705 = vmatpush1.msra.mxu0 0.0
  %2706 = vmatprep.subr.mxu0 0.0
  %2707 = vmatpush1.msra.mxu0 0.0
  %2708 = vmatprep.subr.mxu0 0.0
  %2709 = vmatpush1.msra.mxu0 0.0
  %2710 = vmatprep.subr.mxu0 0.0
  %2711 = vmatpush1.msra.mxu0 0.0
  %2712 = vmatprep.subr.mxu0 0.0
  %2713 = vmatpush1.msra.mxu0 0.0
  %2714 = vmatprep.subr.mxu0 0.0
  %2715 = vmatpush1.msra.mxu0 0.0
  %2716 = vmatprep.subr.mxu0 0.0
  %2717 = vmatpush1.msra.mxu0 0.0
  %2718 = vmatprep.subr.mxu0 0.0
  %2719 = vmatpush1.msra.mxu0 0.0
  %2720 = vmatprep.subr.mxu0 0.0
  %2721 = vmatpush1.msra.mxu0 0.0
  %2722 = vmatprep.subr.mxu0 0.0
  %2723 = vmatpush1.msra.mxu0 0.0
  %2724 = vmatprep.subr.mxu0 0.0
  %2725 = vmatpush1.msra.mxu0 0.0
  %2726 = vmatprep.subr.mxu0 0.0
  %2727 = vmatpush1.msra.mxu0 0.0
  %2728 = vmatprep.subr.mxu0 0.0
  %2729 = vmatpush1.msra.mxu0 0.0
  %2730 = vmatprep.subr.mxu0 0.0
  %2731 = vmatpush1.msra.mxu0 0.0
  %2732 = vmatprep.subr.mxu0 0.0
  %2733 = vmatpush1.msra.mxu0 0.0
  %2734 = vmatprep.subr.mxu0 0.0
  %2735 = vmatpush1.msra.mxu0 0.0
  %2736 = vmatprep.subr.mxu0 0.0
  %2737 = vmatpush1.msra.mxu0 0.0
  %2738 = vmatprep.subr.mxu0 0.0
  %2739 = vmatpush1.msra.mxu0 0.0
  %2740 = vmatprep.subr.mxu0 0.0
  %2741 = vmatpush1.msra.mxu0 0.0
  %2742 = vmatprep.subr.mxu0 0.0
  %2743 = vmatpush1.msra.mxu0 0.0
  %2744 = vmatprep.subr.mxu0 0.0
  %2745 = vmatpush1.msra.mxu0 0.0
  %2746 = vmatprep.subr.mxu0 0.0
  %2747 = vmatpush1.msra.mxu0 0.0
  %2748 = vmatprep.subr.mxu0 0.0
  %2749 = vmatpush1.msra.mxu0 0.0
  %2750 = vmatprep.subr.mxu0 0.0
  %2751 = vmatpush1.msra.mxu0 0.0
  %2752 = vmatprep.subr.mxu0 0.0
  %2753 = vmatpush1.msra.mxu0 0.0
  %2754 = vmatprep.mubr.f32.mxu0 0.0
  %2755 = vmatmul.mubr.f32.gmra.mrb[0].mxu0 %v2531
  %v2756 = vpop.f32.mrb[0].mxu0
  %v2757 = vadd.f32 %v2688, %v2756
  %v2758 = vpop.f32.mrb[0].mxu0
  %2759 = vdwg.mxu0
  %v2760 = vld [vmem:[%s15] sm:$0xff]
  %v2761 = vld [vmem:[%s15 + $0x8] sm:$0xff]
  %v2762 = vld [vmem:[%s15 + $0x10] sm:$0xff]
  %v2763 = vld [vmem:[%s15 + $0x18] sm:$0xff]
  %v2764 = vld [vmem:[%s16] sm:$0x1]
  %v2766 = vlaneseq
  %v2767 = vshrl.u32 %v2766, 7
  %v2768 = vsub.s32 0, %v2767
  %v2769 = vrot.slane %v2764, %v2768
  %v2772 = vsel %vm1251, %v2757, 0
  %2774 = vmatprep.subr.mxu0 0.0
  %2775 = vmatpush1.msra.mxu0 %v2760
  %2776 = vmatprep.subr.mxu0 0.0
  %2777 = vmatpush1.msra.mxu0 %v2761
  %2778 = vmatprep.subr.mxu0 0.0
  %2779 = vmatpush1.msra.mxu0 %v2762
  %2780 = vmatprep.subr.mxu0 0.0
  %2781 = vmatpush1.msra.mxu0 %v2763
  %2782 = vmatprep.subr.mxu0 0.0
  %2783 = vmatpush1.msra.mxu0 0.0
  %2784 = vmatprep.subr.mxu0 0.0
  %2785 = vmatpush1.msra.mxu0 0.0
  %2786 = vmatprep.subr.mxu0 0.0
  %2787 = vmatpush1.msra.mxu0 0.0
  %2788 = vmatprep.subr.mxu0 0.0
  %2789 = vmatpush1.msra.mxu0 0.0
  %2790 = vmatprep.subr.mxu0 0.0
  %2791 = vmatpush1.msra.mxu0 0.0
  %2792 = vmatprep.subr.mxu0 0.0
  %2793 = vmatpush1.msra.mxu0 0.0
  %2794 = vmatprep.subr.mxu0 0.0
  %2795 = vmatpush1.msra.mxu0 0.0
  %2796 = vmatprep.subr.mxu0 0.0
  %2797 = vmatpush1.msra.mxu0 0.0
  %2798 = vmatprep.subr.mxu0 0.0
  %2799 = vmatpush1.msra.mxu0 0.0
  %2800 = vmatprep.subr.mxu0 0.0
  %2801 = vmatpush1.msra.mxu0 0.0
  %2802 = vmatprep.subr.mxu0 0.0
  %2803 = vmatpush1.msra.mxu0 0.0
  %2804 = vmatprep.subr.mxu0 0.0
  %2805 = vmatpush1.msra.mxu0 0.0
  %2806 = vmatprep.subr.mxu0 0.0
  %2807 = vmatpush1.msra.mxu0 0.0
  %2808 = vmatprep.subr.mxu0 0.0
  %2809 = vmatpush1.msra.mxu0 0.0
  %2810 = vmatprep.subr.mxu0 0.0
  %2811 = vmatpush1.msra.mxu0 0.0
  %2812 = vmatprep.subr.mxu0 0.0
  %2813 = vmatpush1.msra.mxu0 0.0
  %2814 = vmatprep.subr.mxu0 0.0
  %2815 = vmatpush1.msra.mxu0 0.0
  %2816 = vmatprep.subr.mxu0 0.0
  %2817 = vmatpush1.msra.mxu0 0.0
  %2818 = vmatprep.subr.mxu0 0.0
  %2819 = vmatpush1.msra.mxu0 0.0
  %2820 = vmatprep.subr.mxu0 0.0
  %2821 = vmatpush1.msra.mxu0 0.0
  %2822 = vmatprep.subr.mxu0 0.0
  %2823 = vmatpush1.msra.mxu0 0.0
  %2824 = vmatprep.subr.mxu0 0.0
  %2825 = vmatpush1.msra.mxu0 0.0
  %2826 = vmatprep.subr.mxu0 0.0
  %2827 = vmatpush1.msra.mxu0 0.0
  %2828 = vmatprep.subr.mxu0 0.0
  %2829 = vmatpush1.msra.mxu0 0.0
  %2830 = vmatprep.subr.mxu0 0.0
  %2831 = vmatpush1.msra.mxu0 0.0
  %2832 = vmatprep.subr.mxu0 0.0
  %2833 = vmatpush1.msra.mxu0 0.0
  %2834 = vmatprep.subr.mxu0 0.0
  %2835 = vmatpush1.msra.mxu0 0.0
  %2836 = vmatprep.subr.mxu0 0.0
  %2837 = vmatpush1.msra.mxu0 0.0
  %2838 = vmatprep.mubr.f32.mxu0 0.0
  %2839 = vmatmul.mubr.f32.gmra.mrb[0].mxu0 %v2772
  %v2840 = vpop.f32.mrb[0].mxu0
  %v2841 = vadd.f32 %v2769, %v2840
  %v2842 = vpop.f32.mrb[0].mxu0
  %2843 = vdwg.mxu0
  %vm2844 = vcmask 15360
  %v2845 = vsel %vm2844, %v2841, -inf
  %2846 = vmax.xlane.f32.xlu0 %v2845
  %v2847 = vpop.xlane.xlu0 %2846
  %v2848 = vsub.f32 %v2841, %v2847
  %v2849 = vmul.f32 %v2848, 1.442695
  %v2850 = vpow.pop %v2849
  %v2851 = vsel %vm2844, %v2850, 0.0
  %2852 = vadd.xlane.f32.xlu0 %v2851
  %v2853 = vpop.xlane.xlu0 %2852
  %v2854 = vrcp.pop %v2853
  %v2855 = vmul.f32 %v2850, %v2854
  %2856 = vst.msk [vmem:[%s17] sm:$0xff] %vm2844, %v2855
  // Predicated region
  $region70: #{fix_locator_forward.1} parent=0 // pred_check
    _
  $region71: #{fix_locator_forward.1} parent=0 // pred_check_branch
    %2858 = sbr.rel (0) target = $region73
  $region72: #{fix_locator_forward.1} parent=0 // pred_region
    _
  $region73: #{fix_locator_forward.1} parent=0 // pred_fallthru
    _
  // Predicated region
  $region74: #{fix_locator_forward.1} parent=0 // pred_check
    _
  $region75: #{fix_locator_forward.1} parent=0 // pred_check_branch
    %2860 = sbr.rel (0) target = $region77
  $region76: #{fix_locator_forward.1} parent=0 // pred_region
    _
  $region77: #{fix_locator_forward.1} parent=0 // pred_fallthru
    _

</llo_original>
